<compile_context>
chip_gen: v6e
topology: v6e:2x2x1
jax: 0.10.0
libtpu: 0.0.40
codegen_flags: <defaults>
</compile_context>

<pallas_src>
import functools
import math

import jax
import jax.numpy as jnp
from jax.experimental import pallas as pl
from jax.experimental.pallas import tpu as pltpu

LN_EPS = 1e-5
NEG_INF = -1e20


def _layernorm(x, gamma, beta):
    mu = jnp.mean(x, axis=-1, keepdims=True)
    var = jnp.mean((x - mu) ** 2, axis=-1, keepdims=True)  # biased, like nn.LayerNorm
    return (x - mu) * jax.lax.rsqrt(var + LN_EPS) * gamma + beta


def block_kernel(*refs, heads, tkv, causal):
    if causal:
        (q_ref, k_ref, v_ref,
         wq_ref, wk_ref, wv_ref, wo_ref, bo_ref,
         g1_ref, b1_ref, g2_ref, b2_ref,
         w1_ref, bf1_ref, w2_ref, bf2_ref,
         out_ref, kp_ref, vp_ref) = refs
        bias_ref = None
    else:
        (q_ref, k_ref, v_ref, bias_ref,
         wq_ref, wk_ref, wv_ref, wo_ref, bo_ref,
         g1_ref, b1_ref, g2_ref, b2_ref,
         w1_ref, bf1_ref, w2_ref, bf2_ref,
         out_ref, kp_ref, vp_ref) = refs

    q_f32 = q_ref[0]                           # (TQ, E) f32 — exact residual add
    TQ, E = q_f32.shape
    S = kp_ref.shape[0]
    hd = E // heads
    n_kv = S // tkv

    # --- K/V projections: once per batch element (query-tile axis is sequential) ---
    @pl.when(pl.program_id(1) == 0)
    def _():
        kp_ref[...] = jnp.dot(k_ref[0], wk_ref[...],
                              preferred_element_type=jnp.float32).astype(jnp.bfloat16)
        vp_ref[...] = jnp.dot(v_ref[0], wv_ref[...],
                              preferred_element_type=jnp.float32).astype(jnp.bfloat16)

    # --- Q projection (1/sqrt(hd) already folded into Wq in the wrapper) ---
    q = jnp.dot(q_f32.astype(jnp.bfloat16), wq_ref[...],
                preferred_element_type=jnp.float32)                   # (TQ, E)
    qh = q.reshape(TQ, heads, hd).astype(jnp.bfloat16)

    q_start = pl.program_id(1) * TQ

    # --- attention: KV-tile loop with online softmax (live scores = (H, TQ, tkv)) ---
    # TODO(synk): switch the unrolled Python loop to lax.fori_loop for very large
    #             n_kv to bound live ranges / compile time.
    m_run = jnp.full((heads, TQ, 1), -jnp.inf, jnp.float32)
    l_run = jnp.zeros((heads, TQ, 1), jnp.float32)
    acc = jnp.zeros((heads, TQ, hd), jnp.float32)
    for j in range(n_kv):
        kh = kp_ref[j * tkv:(j + 1) * tkv, :].reshape(tkv, heads, hd)   # bf16
        vh = vp_ref[j * tkv:(j + 1) * tkv, :].reshape(tkv, heads, hd)   # bf16

        s = jnp.einsum("qhd,khd->hqk", qh, kh,
                       preferred_element_type=jnp.float32)              # (H, TQ, tkv)

        if causal:
            rows = q_start + jax.lax.broadcasted_iota(jnp.int32, (TQ, tkv), 0)
            cols = j * tkv + jax.lax.broadcasted_iota(jnp.int32, (TQ, tkv), 1)
            bias = jnp.where(rows >= cols, jnp.float32(0.0), jnp.float32(NEG_INF))
        else:
            bias = bias_ref[0, :, j * tkv:(j + 1) * tkv].astype(jnp.float32)
        s = s + bias[None, :, :]

        m_new = jnp.maximum(m_run, jnp.max(s, axis=-1, keepdims=True))
        alpha = jnp.exp(m_run - m_new)
        p = jnp.exp(s - m_new)
        l_run = alpha * l_run + jnp.sum(p, axis=-1, keepdims=True)
        acc = alpha * acc + jnp.einsum("hqk,khd->hqd", p.astype(jnp.bfloat16), vh,
                                       preferred_element_type=jnp.float32)
        m_run = m_new

    ctx = acc * pl.reciprocal(l_run, approx=True)                        # (H, TQ, hd)
    ctx = jnp.transpose(ctx, (1, 0, 2)).reshape(TQ, E).astype(jnp.bfloat16)

    attn = jnp.dot(ctx, wo_ref[...], preferred_element_type=jnp.float32) + bo_ref[...]

    # --- residual + LayerNorm1 (dropout == identity in eval), f32 residual ---
    x = _layernorm(attn + q_f32, g1_ref[...], b1_ref[...])

    # --- feed-forward: Linear -> ReLU -> Linear (bf16 matmuls, f32 accumulation) ---
    xb = x.astype(jnp.bfloat16)
    h1 = jnp.dot(xb, w1_ref[...], preferred_element_type=jnp.float32) + bf1_ref[...]
    h1 = jnp.maximum(h1, 0.0).astype(jnp.bfloat16)
    ff = jnp.dot(h1, w2_ref[...], preferred_element_type=jnp.float32) + bf2_ref[...]

    # --- residual + LayerNorm2 ---
    out_ref[0] = _layernorm(ff + x, g2_ref[...], b2_ref[...]).astype(out_ref.dtype)


def _weight_spec(shape, mode):
    nd = len(shape)
    idx = lambda *_, _nd=nd: (0,) * _nd          # grid-invariant
    if mode is None:
        return pl.BlockSpec(shape, idx)
    return pl.BlockSpec(shape, idx, pipeline_mode=mode)


def transformer_block(q, k, v, mask, params, *, heads, causal=False,
                      tq=None, tkv=None, out_dtype=jnp.bfloat16):
    B, S, E = q.shape
    H = params["w1"].shape[1]                    # forward_expansion * E
    assert E % heads == 0
    hd = E // heads

    if tq is None:
        tq = min(S, 256)                         # use 128 on v5e / v7x if VMEM-tight
    if tkv is None:
        tkv = min(S, 512)
    assert S % tq == 0 and S % tkv == 0
    n_q = S // tq

    bf16 = jnp.bfloat16
    qf = q.astype(jnp.float32)                   # f32 so the residual add is exact
    kb, vb = k.astype(bf16), v.astype(bf16)

    scale = 1.0 / math.sqrt(hd)
    wq = (params["wq"] * scale).astype(bf16)     # attention scale folded into Wq
    wk = params["wk"].astype(bf16)
    wv = params["wv"].astype(bf16)
    wo = params["wo"].astype(bf16)
    w1 = params["w1"].astype(bf16)
    w2 = params["w2"].astype(bf16)

    act_q_spec = pl.BlockSpec((1, tq, E), lambda b, i: (b, i, 0))
    act_kv_spec = pl.BlockSpec((1, S, E), lambda b, i: (b, 0, 0))
    out_spec = pl.BlockSpec((1, tq, E), lambda b, i: (b, i, 0))

    weight_shapes = [(E, E), (E, E), (E, E), (E, E), (1, E),
                     (1, E), (1, E), (1, E), (1, E),
                     (E, H), (1, H), (H, E), (1, E)]
    weight_args = (wq, wk, wv, wo, params["bo"],
                   params["g1"], params["b1"], params["g2"], params["b2"],
                   w1, params["bf1"], w2, params["bf2"])

    if causal:
        # Mask generated in-kernel: no O(B*S*S) HBM stream.
        data_specs = [act_q_spec, act_kv_spec, act_kv_spec]
        data_args = (qf, kb, vb)
    else:
        assert mask is not None, "dense-mask path needs an explicit mask"
        bias = jnp.where(mask == 0, jnp.float32(NEG_INF), jnp.float32(0.0)).astype(bf16)
        data_specs = [act_q_spec, act_kv_spec, act_kv_spec,
                      pl.BlockSpec((1, tq, S), lambda b, i: (b, i, 0))]
        data_args = (qf, kb, vb, bias)

    out_nbytes = jnp.dtype(out_dtype).itemsize

    # VMEM live-set estimate (double-buffered blocks + weights + scratch +
    # score/FFN intermediates), 2x margin, clamped to [32 MiB, 128 MiB].
    est = ((4 * E * E + 2 * E * H) * 2 * 2                               # bf16 weights
           + 2 * (tq * E * 4 + 2 * S * E * 2 + tq * E * out_nbytes)      # act blocks
           + (0 if causal else 2 * tq * S * 2)                           # mask block
           + 2 * S * E * 2                                               # K/V scratch
           + 4 * heads * tq * tkv * 4                                    # scores/probs
           + 2 * tq * H * 4 + 8 * tq * E * 4)                            # FFN / misc
    vmem_limit = int(min(max(2 * est, 32 * 1024 * 1024), 128 * 1024 * 1024))

    # Advisory cost estimate (K/V projections counted once per batch element).
    flops = B * (8 * S * E * E + 4 * S * S * E + 4 * S * E * H)
    transcendentals = B * heads * S * S
    bytes_accessed = (B * S * E * (4 + 2 + 2 + out_nbytes)
                      + (0 if causal else B * S * S * 2)
                      + (4 * E * E + 2 * E * H) * 2
                      + (6 * E + H) * 4)

    kernel = functools.partial(block_kernel, heads=heads, tkv=tkv, causal=causal)

    def call(weight_mode):
        w_specs = [_weight_spec(s, weight_mode) for s in weight_shapes]
        return pl.pallas_call(
            kernel,
            out_shape=jax.ShapeDtypeStruct((B, S, E), out_dtype),
            grid=(B, n_q),
            in_specs=data_specs + w_specs,
            out_specs=out_spec,
            scratch_shapes=[pltpu.VMEM((S, E), bf16),    # projected K (per batch elem)
                            pltpu.VMEM((S, E), bf16)],   # projected V (per batch elem)
            compiler_params=pltpu.CompilerParams(
                # batch axis sharded across TensorCores; query axis sequential so
                # the per-batch K/V scratch carry is valid.
                dimension_semantics=("parallel", "arbitrary"),
                vmem_limit_bytes=vmem_limit),
            cost_estimate=pl.CostEstimate(flops=flops,
                                          transcendentals=transcendentals,
                                          bytes_accessed=bytes_accessed),
        )(*data_args, *weight_args)

    try:
        # Grid-invariant weights: single-buffer them to halve their VMEM footprint.
        return call(pl.Buffered(1))
    except Exception:
        # pipeline_mode not supported by this jax version -> default buffering.
        return call(None)


def init_params(key, embed_size, forward_expansion):
    E = embed_size
    H = forward_expansion * E
    ks = jax.random.split(key, 8)
    s = 0.05
    return {
        "wq": s * jax.random.normal(ks[0], (E, E), jnp.float32),
        "wk": s * jax.random.normal(ks[1], (E, E), jnp.float32),
        "wv": s * jax.random.normal(ks[2], (E, E), jnp.float32),
        "wo": s * jax.random.normal(ks[3], (E, E), jnp.float32),
        "bo": jnp.zeros((1, E), jnp.float32),
        "g1": jnp.ones((1, E), jnp.float32),
        "b1": jnp.zeros((1, E), jnp.float32),
        "g2": jnp.ones((1, E), jnp.float32),
        "b2": jnp.zeros((1, E), jnp.float32),
        "w1": s * jax.random.normal(ks[4], (E, H), jnp.float32),
        "bf1": s * jax.random.normal(ks[5], (1, H), jnp.float32),
        "w2": s * jax.random.normal(ks[6], (H, E), jnp.float32),
        "bf2": s * jax.random.normal(ks[7], (1, E), jnp.float32),
    }


def reference_block(q, k, v, mask, params, heads):
    # Pure-JAX f32 reference of the same forward pass (eval mode).
    B, S, E = q.shape
    hd = E // heads
    scale = 1.0 / math.sqrt(hd)
    qp = (q @ params["wq"]).reshape(B, S, heads, hd).transpose(0, 2, 1, 3)
    kp = (k @ params["wk"]).reshape(B, S, heads, hd).transpose(0, 2, 1, 3)
    vp = (v @ params["wv"]).reshape(B, S, heads, hd).transpose(0, 2, 1, 3)
    s = jnp.einsum("bhqd,bhkd->bhqk", qp, kp) * scale
    s = jnp.where(mask[:, None, :, :] == 0, NEG_INF, s)
    p = jax.nn.softmax(s, axis=-1)
    ctx = jnp.einsum("bhqk,bhkd->bhqd", p, vp).transpose(0, 2, 1, 3).reshape(B, S, E)
    attn = ctx @ params["wo"] + params["bo"]

    def ln(x, g, b):
        mu = x.mean(-1, keepdims=True)
        var = ((x - mu) ** 2).mean(-1, keepdims=True)
        return (x - mu) / jnp.sqrt(var + LN_EPS) * g + b

    x = ln(attn + q, params["g1"], params["b1"])
    h1 = jnp.maximum(x @ params["w1"] + params["bf1"], 0.0)
    ff = h1 @ params["w2"] + params["bf2"]
    return ln(ff + x, params["g2"], params["b2"])


if __name__ == "__main__":
    B, S, E, heads, expansion = 2, 16, 32, 4, 4

    key = jax.random.PRNGKey(0)
    kq, kk, kv, kp = jax.random.split(key, 4)
    q = jax.random.normal(kq, (B, S, E), jnp.float32)
    k = jax.random.normal(kk, (B, S, E), jnp.float32)
    v = jax.random.normal(kv, (B, S, E), jnp.float32)

    params = init_params(kp, E, expansion)

    # Causal mask generated in-kernel; tq/tkv chosen so the query-tile grid,
    # the per-batch K/V scratch carry and the online-softmax KV loop all execute.
    out = transformer_block(q, k, v, None, params, heads=heads,
                            causal=True, tq=8, tkv=8)
    out = jax.block_until_ready(out)

    mask = jnp.broadcast_to(jnp.tril(jnp.ones((S, S), jnp.float32)), (B, S, S))
    ref = reference_block(q, k, v, mask, params, heads)

    assert out.shape == (B, S, E)
    assert bool(jnp.all(jnp.isfinite(out)))
    assert float(jnp.max(jnp.abs(out.astype(jnp.float32) - ref))) < 0.15
    print("KERNEL_OK")
</pallas_src>

<mosaic_0001>
module attributes {stable_mosaic.version = 11 : i64} {
  func.func @block_kernel(%arg0: i32, %arg1: i32, %arg2: memref<1x8x32xf32, #tpu.memory_space<vmem>>, %arg3: memref<1x16x32xbf16, #tpu.memory_space<vmem>>, %arg4: memref<1x16x32xbf16, #tpu.memory_space<vmem>>, %arg5: memref<32x32xbf16, #tpu.memory_space<vmem>>, %arg6: memref<32x32xbf16, #tpu.memory_space<vmem>>, %arg7: memref<32x32xbf16, #tpu.memory_space<vmem>>, %arg8: memref<32x32xbf16, #tpu.memory_space<vmem>>, %arg9: memref<1x32xf32, #tpu.memory_space<vmem>>, %arg10: memref<1x32xf32, #tpu.memory_space<vmem>>, %arg11: memref<1x32xf32, #tpu.memory_space<vmem>>, %arg12: memref<1x32xf32, #tpu.memory_space<vmem>>, %arg13: memref<1x32xf32, #tpu.memory_space<vmem>>, %arg14: memref<32x128xbf16, #tpu.memory_space<vmem>>, %arg15: memref<1x128xf32, #tpu.memory_space<vmem>>, %arg16: memref<128x32xbf16, #tpu.memory_space<vmem>>, %arg17: memref<1x32xf32, #tpu.memory_space<vmem>>, %arg18: memref<1x8x32xbf16, #tpu.memory_space<vmem>>, %arg19: memref<16x32xbf16, #tpu.memory_space<vmem>>, %arg20: memref<16x32xbf16, #tpu.memory_space<vmem>>) attributes {dimension_semantics = [#tpu.dimension_semantics<parallel>, #tpu.dimension_semantics<arbitrary>], iteration_bounds = array<i64: 2, 2>, scalar_prefetch = 0 : i64, scratch_operands = 2 : i64, tpu.core_type = #tpu.core_type<tc>, window_params = [{transform_indices = @transform_0, window_bounds = array<i64: 1, 8, 32>}, {transform_indices = @transform_1, window_bounds = array<i64: 1, 16, 32>}, {transform_indices = @transform_2, window_bounds = array<i64: 1, 16, 32>}, {pipeline_mode = #tpu.pipeline_mode<synchronous>, transform_indices = @transform_3, window_bounds = array<i64: 32, 32>}, {pipeline_mode = #tpu.pipeline_mode<synchronous>, transform_indices = @transform_4, window_bounds = array<i64: 32, 32>}, {pipeline_mode = #tpu.pipeline_mode<synchronous>, transform_indices = @transform_5, window_bounds = array<i64: 32, 32>}, {pipeline_mode = #tpu.pipeline_mode<synchronous>, transform_indices = @transform_6, window_bounds = array<i64: 32, 32>}, {pipeline_mode = #tpu.pipeline_mode<synchronous>, transform_indices = @transform_7, window_bounds = array<i64: 1, 32>}, {pipeline_mode = #tpu.pipeline_mode<synchronous>, transform_indices = @transform_8, window_bounds = array<i64: 1, 32>}, {pipeline_mode = #tpu.pipeline_mode<synchronous>, transform_indices = @transform_9, window_bounds = array<i64: 1, 32>}, {pipeline_mode = #tpu.pipeline_mode<synchronous>, transform_indices = @transform_10, window_bounds = array<i64: 1, 32>}, {pipeline_mode = #tpu.pipeline_mode<synchronous>, transform_indices = @transform_11, window_bounds = array<i64: 1, 32>}, {pipeline_mode = #tpu.pipeline_mode<synchronous>, transform_indices = @transform_12, window_bounds = array<i64: 32, 128>}, {pipeline_mode = #tpu.pipeline_mode<synchronous>, transform_indices = @transform_13, window_bounds = array<i64: 1, 128>}, {pipeline_mode = #tpu.pipeline_mode<synchronous>, transform_indices = @transform_14, window_bounds = array<i64: 128, 32>}, {pipeline_mode = #tpu.pipeline_mode<synchronous>, transform_indices = @transform_15, window_bounds = array<i64: 1, 32>}, {transform_indices = @transform_16, window_bounds = array<i64: 1, 8, 32>}]} {
    %c0 = arith.constant 0 : index
    %c0_0 = arith.constant 0 : index
    %c0_1 = arith.constant 0 : index
    %0 = vector.load %arg2[%c0, %c0_0, %c0_1] : memref<1x8x32xf32, #tpu.memory_space<vmem>>, vector<1x8x32xf32>
    %1 = vector.shape_cast %0 : vector<1x8x32xf32> to vector<8x32xf32>
    %c0_i32 = arith.constant 0 : i32
    %2 = arith.cmpi eq, %arg1, %c0_i32 : i32
    %3 = arith.extui %2 : i1 to i32
    %c0_i32_2 = arith.constant 0 : i32
    %4 = arith.cmpi ne, %3, %c0_i32_2 : i32
    scf.if %4 {
      %c0_66 = arith.constant 0 : index
      %c0_67 = arith.constant 0 : index
      %c0_68 = arith.constant 0 : index
      %163 = vector.load %arg3[%c0_66, %c0_67, %c0_68] : memref<1x16x32xbf16, #tpu.memory_space<vmem>>, vector<1x16x32xbf16>
      %164 = vector.shape_cast %163 : vector<1x16x32xbf16> to vector<16x32xbf16>
      %c0_69 = arith.constant 0 : index
      %c0_70 = arith.constant 0 : index
      %165 = vector.load %arg6[%c0_69, %c0_70] : memref<32x32xbf16, #tpu.memory_space<vmem>>, vector<32x32xbf16>
      %cst_71 = arith.constant dense<0.000000e+00> : vector<16x32xf32>
      %166 = tpu.matmul %164, %165, %cst_71 {dimension_numbers = #tpu.dot_dimension_numbers<[1], [0], [0], [1], [0, 0, 1, 1], [], []>} : vector<16x32xbf16>, vector<32x32xbf16>, vector<16x32xf32> -> vector<16x32xf32>
      %167 = arith.truncf %166 : vector<16x32xf32> to vector<16x32xbf16>
      %c0_72 = arith.constant 0 : index
      %c0_73 = arith.constant 0 : index
      %168 = vector.load %arg19[%c0_72, %c0_73] : memref<16x32xbf16, #tpu.memory_space<vmem>>, vector<16x32xbf16>
      tpu.vector_store %arg19[%c0_72, %c0_73], %167 {strides = array<i32>} : memref<16x32xbf16, #tpu.memory_space<vmem>>, vector<16x32xbf16>,
      %c0_74 = arith.constant 0 : index
      %c0_75 = arith.constant 0 : index
      %c0_76 = arith.constant 0 : index
      %169 = vector.load %arg4[%c0_74, %c0_75, %c0_76] : memref<1x16x32xbf16, #tpu.memory_space<vmem>>, vector<1x16x32xbf16>
      %170 = vector.shape_cast %169 : vector<1x16x32xbf16> to vector<16x32xbf16>
      %c0_77 = arith.constant 0 : index
      %c0_78 = arith.constant 0 : index
      %171 = vector.load %arg7[%c0_77, %c0_78] : memref<32x32xbf16, #tpu.memory_space<vmem>>, vector<32x32xbf16>
      %cst_79 = arith.constant dense<0.000000e+00> : vector<16x32xf32>
      %172 = tpu.matmul %170, %171, %cst_79 {dimension_numbers = #tpu.dot_dimension_numbers<[1], [0], [0], [1], [0, 0, 1, 1], [], []>} : vector<16x32xbf16>, vector<32x32xbf16>, vector<16x32xf32> -> vector<16x32xf32>
      %173 = arith.truncf %172 : vector<16x32xf32> to vector<16x32xbf16>
      %c0_80 = arith.constant 0 : index
      %c0_81 = arith.constant 0 : index
      %174 = vector.load %arg20[%c0_80, %c0_81] : memref<16x32xbf16, #tpu.memory_space<vmem>>, vector<16x32xbf16>
      tpu.vector_store %arg20[%c0_80, %c0_81], %173 {strides = array<i32>} : memref<16x32xbf16, #tpu.memory_space<vmem>>, vector<16x32xbf16>,
    } else {
    }
    %5 = arith.truncf %1 : vector<8x32xf32> to vector<8x32xbf16>
    %c0_3 = arith.constant 0 : index
    %c0_4 = arith.constant 0 : index
    %6 = vector.load %arg5[%c0_3, %c0_4] : memref<32x32xbf16, #tpu.memory_space<vmem>>, vector<32x32xbf16>
    %cst = arith.constant dense<0.000000e+00> : vector<8x32xf32>
    %7 = tpu.matmul %5, %6, %cst {dimension_numbers = #tpu.dot_dimension_numbers<[1], [0], [0], [1], [0, 0, 1, 1], [], []>} : vector<8x32xbf16>, vector<32x32xbf16>, vector<8x32xf32> -> vector<8x32xf32>
    %8 = vector.shape_cast %7 : vector<8x32xf32> to vector<8x4x8xf32>
    %9 = arith.truncf %8 : vector<8x4x8xf32> to vector<8x4x8xbf16>
    %c8_i32 = arith.constant 8 : i32
    %10 = arith.muli %arg1, %c8_i32 : i32
    %cst_5 = arith.constant 0xFF800000 : f32
    %11 = vector.broadcast %cst_5 : f32 to vector<4x8x1xf32>
    %cst_6 = arith.constant 0.000000e+00 : f32
    %12 = vector.broadcast %cst_6 : f32 to vector<4x8x1xf32>
    %cst_7 = arith.constant 0.000000e+00 : f32
    %13 = vector.broadcast %cst_7 : f32 to vector<4x8x8xf32>
    %c0_8 = arith.constant 0 : index
    %c0_9 = arith.constant 0 : index
    %14 = vector.load %arg19[%c0_8, %c0_9] : memref<16x32xbf16, #tpu.memory_space<vmem>>, vector<8x32xbf16>
    %15 = vector.shape_cast %14 : vector<8x32xbf16> to vector<8x4x8xbf16>
    %c0_10 = arith.constant 0 : index
    %c0_11 = arith.constant 0 : index
    %16 = vector.load %arg20[%c0_10, %c0_11] : memref<16x32xbf16, #tpu.memory_space<vmem>>, vector<8x32xbf16>
    %17 = vector.shape_cast %16 : vector<8x32xbf16> to vector<8x4x8xbf16>
    "tpu.trace_start"() <{level = 10 : i32, message = "qhd,khd->hqk"}> : () -> ()
    %cst_12 = arith.constant dense<0.000000e+00> : vector<4x8x8xf32>
    %18 = tpu.matmul %9, %15, %cst_12 {dimension_numbers = #tpu.dot_dimension_numbers<[2], [2], [0], [0], [0, 1, 0, 0, 1, 0], [1], [1]>} : vector<8x4x8xbf16>, vector<8x4x8xbf16>, vector<4x8x8xf32> -> vector<4x8x8xf32>
    "tpu.trace_stop"() : () -> ()
    %19 = tpu.iota {dimensions = array<i32: 0>} : vector<8x8xi32>
    %20 = vector.broadcast %10 : i32 to vector<8x8xi32>
    %21 = arith.addi %20, %19 : vector<8x8xi32>
    %22 = tpu.iota {dimensions = array<i32: 1>} : vector<8x8xi32>
    %c0_i32_13 = arith.constant 0 : i32
    %23 = vector.broadcast %c0_i32_13 : i32 to vector<8x8xi32>
    %24 = arith.addi %23, %22 : vector<8x8xi32>
    %25 = arith.cmpi sge, %21, %24 : vector<8x8xi32>
    %cst_14 = arith.constant 0.000000e+00 : f32
    %cst_15 = arith.constant -1.000000e+20 : f32
    %26 = vector.broadcast %cst_14 : f32 to vector<8x8xf32>
    %27 = vector.broadcast %cst_15 : f32 to vector<8x8xf32>
    %28 = arith.select %25, %26, %27 : vector<8x8xi1>, vector<8x8xf32>
    %29 = vector.shape_cast %28 : vector<8x8xf32> to vector<1x8x8xf32>
    %30 = vector.broadcast %29 : vector<1x8x8xf32> to vector<4x8x8xf32>
    %31 = arith.addf %18, %30 : vector<4x8x8xf32>
    %cst_16 = arith.constant dense<0xFF800000> : vector<4x8xf32>
    %32 = vector.multi_reduction <maximumf>, %31, %cst_16 [2] : vector<4x8x8xf32> to vector<4x8xf32>
    %33 = vector.shape_cast %32 : vector<4x8xf32> to vector<4x8x1xf32>
    %34 = arith.maximumf %11, %33 : vector<4x8x1xf32>
    %35 = arith.subf %11, %34 : vector<4x8x1xf32>
    %36 = math.exp %35 : vector<4x8x1xf32>
    %37 = vector.broadcast %34 : vector<4x8x1xf32> to vector<4x8x8xf32>
    %38 = arith.subf %31, %37 : vector<4x8x8xf32>
    %39 = math.exp %38 : vector<4x8x8xf32>
    %40 = arith.mulf %36, %12 : vector<4x8x1xf32>
    %cst_17 = arith.constant dense<0.000000e+00> : vector<4x8xf32>
    %41 = vector.multi_reduction <add>, %39, %cst_17 [2] : vector<4x8x8xf32> to vector<4x8xf32>
    %42 = vector.shape_cast %41 : vector<4x8xf32> to vector<4x8x1xf32>
    %43 = arith.addf %40, %42 : vector<4x8x1xf32>
    %44 = vector.broadcast %36 : vector<4x8x1xf32> to vector<4x8x8xf32>
    %45 = arith.mulf %44, %13 : vector<4x8x8xf32>
    %46 = arith.truncf %39 : vector<4x8x8xf32> to vector<4x8x8xbf16>
    "tpu.trace_start"() <{level = 10 : i32, message = "hqk,khd->hqd"}> : () -> ()
    %cst_18 = arith.constant dense<0.000000e+00> : vector<4x8x8xf32>
    %47 = tpu.matmul %46, %17, %cst_18 {dimension_numbers = #tpu.dot_dimension_numbers<[2], [0], [1], [2], [0, 0, 0, 1, 1, 2], [0], [1]>} : vector<4x8x8xbf16>, vector<8x4x8xbf16>, vector<4x8x8xf32> -> vector<4x8x8xf32>
    "tpu.trace_stop"() : () -> ()
    %48 = arith.addf %45, %47 : vector<4x8x8xf32>
    %c8 = arith.constant 8 : index
    %c0_19 = arith.constant 0 : index
    %49 = vector.load %arg19[%c8, %c0_19] : memref<16x32xbf16, #tpu.memory_space<vmem>>, vector<8x32xbf16>
    %50 = vector.shape_cast %49 : vector<8x32xbf16> to vector<8x4x8xbf16>
    %c8_20 = arith.constant 8 : index
    %c0_21 = arith.constant 0 : index
    %51 = vector.load %arg20[%c8_20, %c0_21] : memref<16x32xbf16, #tpu.memory_space<vmem>>, vector<8x32xbf16>
    %52 = vector.shape_cast %51 : vector<8x32xbf16> to vector<8x4x8xbf16>
    "tpu.trace_start"() <{level = 10 : i32, message = "qhd,khd->hqk"}> : () -> ()
    %cst_22 = arith.constant dense<0.000000e+00> : vector<4x8x8xf32>
    %53 = tpu.matmul %9, %50, %cst_22 {dimension_numbers = #tpu.dot_dimension_numbers<[2], [2], [0], [0], [0, 1, 0, 0, 1, 0], [1], [1]>} : vector<8x4x8xbf16>, vector<8x4x8xbf16>, vector<4x8x8xf32> -> vector<4x8x8xf32>
    "tpu.trace_stop"() : () -> ()
    %54 = tpu.iota {dimensions = array<i32: 0>} : vector<8x8xi32>
    %55 = vector.broadcast %10 : i32 to vector<8x8xi32>
    %56 = arith.addi %55, %54 : vector<8x8xi32>
    %57 = tpu.iota {dimensions = array<i32: 1>} : vector<8x8xi32>
    %c8_i32_23 = arith.constant 8 : i32
    %58 = vector.broadcast %c8_i32_23 : i32 to vector<8x8xi32>
    %59 = arith.addi %58, %57 : vector<8x8xi32>
    %60 = arith.cmpi sge, %56, %59 : vector<8x8xi32>
    %cst_24 = arith.constant 0.000000e+00 : f32
    %cst_25 = arith.constant -1.000000e+20 : f32
    %61 = vector.broadcast %cst_24 : f32 to vector<8x8xf32>
    %62 = vector.broadcast %cst_25 : f32 to vector<8x8xf32>
    %63 = arith.select %60, %61, %62 : vector<8x8xi1>, vector<8x8xf32>
    %64 = vector.shape_cast %63 : vector<8x8xf32> to vector<1x8x8xf32>
    %65 = vector.broadcast %64 : vector<1x8x8xf32> to vector<4x8x8xf32>
    %66 = arith.addf %53, %65 : vector<4x8x8xf32>
    %cst_26 = arith.constant dense<0xFF800000> : vector<4x8xf32>
    %67 = vector.multi_reduction <maximumf>, %66, %cst_26 [2] : vector<4x8x8xf32> to vector<4x8xf32>
    %68 = vector.shape_cast %67 : vector<4x8xf32> to vector<4x8x1xf32>
    %69 = arith.maximumf %34, %68 : vector<4x8x1xf32>
    %70 = arith.subf %34, %69 : vector<4x8x1xf32>
    %71 = math.exp %70 : vector<4x8x1xf32>
    %72 = vector.broadcast %69 : vector<4x8x1xf32> to vector<4x8x8xf32>
    %73 = arith.subf %66, %72 : vector<4x8x8xf32>
    %74 = math.exp %73 : vector<4x8x8xf32>
    %75 = arith.mulf %71, %43 : vector<4x8x1xf32>
    %cst_27 = arith.constant dense<0.000000e+00> : vector<4x8xf32>
    %76 = vector.multi_reduction <add>, %74, %cst_27 [2] : vector<4x8x8xf32> to vector<4x8xf32>
    %77 = vector.shape_cast %76 : vector<4x8xf32> to vector<4x8x1xf32>
    %78 = arith.addf %75, %77 : vector<4x8x1xf32>
    %79 = vector.broadcast %71 : vector<4x8x1xf32> to vector<4x8x8xf32>
    %80 = arith.mulf %79, %48 : vector<4x8x8xf32>
    %81 = arith.truncf %74 : vector<4x8x8xf32> to vector<4x8x8xbf16>
    "tpu.trace_start"() <{level = 10 : i32, message = "hqk,khd->hqd"}> : () -> ()
    %cst_28 = arith.constant dense<0.000000e+00> : vector<4x8x8xf32>
    %82 = tpu.matmul %81, %52, %cst_28 {dimension_numbers = #tpu.dot_dimension_numbers<[2], [0], [1], [2], [0, 0, 0, 1, 1, 2], [0], [1]>} : vector<4x8x8xbf16>, vector<8x4x8xbf16>, vector<4x8x8xf32> -> vector<4x8x8xf32>
    "tpu.trace_stop"() : () -> ()
    %83 = arith.addf %80, %82 : vector<4x8x8xf32>
    %84 = tpu.reciprocal %78 {approx = true} : vector<4x8x1xf32> -> vector<4x8x1xf32>
    %85 = vector.broadcast %84 : vector<4x8x1xf32> to vector<4x8x8xf32>
    %86 = arith.mulf %83, %85 : vector<4x8x8xf32>
    %87 = tpu.transpose %86, [1, 0, 2] : vector<4x8x8xf32> -> vector<8x4x8xf32>
    %88 = vector.shape_cast %87 : vector<8x4x8xf32> to vector<8x32xf32>
    %89 = arith.truncf %88 : vector<8x32xf32> to vector<8x32xbf16>
    %c0_29 = arith.constant 0 : index
    %c0_30 = arith.constant 0 : index
    %90 = vector.load %arg8[%c0_29, %c0_30] : memref<32x32xbf16, #tpu.memory_space<vmem>>, vector<32x32xbf16>
    %cst_31 = arith.constant dense<0.000000e+00> : vector<8x32xf32>
    %91 = tpu.matmul %89, %90, %cst_31 {dimension_numbers = #tpu.dot_dimension_numbers<[1], [0], [0], [1], [0, 0, 1, 1], [], []>} : vector<8x32xbf16>, vector<32x32xbf16>, vector<8x32xf32> -> vector<8x32xf32>
    %c0_32 = arith.constant 0 : index
    %c0_33 = arith.constant 0 : index
    %92 = vector.load %arg9[%c0_32, %c0_33] : memref<1x32xf32, #tpu.memory_space<vmem>>, vector<1x32xf32>
    %93 = vector.broadcast %92 : vector<1x32xf32> to vector<8x32xf32>
    %94 = arith.addf %91, %93 : vector<8x32xf32>
    %95 = arith.addf %94, %1 : vector<8x32xf32>
    %c0_34 = arith.constant 0 : index
    %c0_35 = arith.constant 0 : index
    %96 = vector.load %arg10[%c0_34, %c0_35] : memref<1x32xf32, #tpu.memory_space<vmem>>, vector<1x32xf32>
    %c0_36 = arith.constant 0 : index
    %c0_37 = arith.constant 0 : index
    %97 = vector.load %arg11[%c0_36, %c0_37] : memref<1x32xf32, #tpu.memory_space<vmem>>, vector<1x32xf32>
    %cst_38 = arith.constant dense<0.000000e+00> : vector<8xf32>
    %98 = vector.multi_reduction <add>, %95, %cst_38 [1] : vector<8x32xf32> to vector<8xf32>
    %99 = vector.shape_cast %98 : vector<8xf32> to vector<8x1xf32>
    %cst_39 = arith.constant 3.200000e+01 : f32
    %100 = vector.broadcast %cst_39 : f32 to vector<8x1xf32>
    %101 = arith.divf %99, %100 : vector<8x1xf32>
    %102 = vector.broadcast %101 : vector<8x1xf32> to vector<8x32xf32>
    %103 = arith.subf %95, %102 : vector<8x32xf32>
    %104 = arith.mulf %103, %103 : vector<8x32xf32>
    %cst_40 = arith.constant dense<0.000000e+00> : vector<8xf32>
    %105 = vector.multi_reduction <add>, %104, %cst_40 [1] : vector<8x32xf32> to vector<8xf32>
    %106 = vector.shape_cast %105 : vector<8xf32> to vector<8x1xf32>
    %cst_41 = arith.constant 3.200000e+01 : f32
    %107 = vector.broadcast %cst_41 : f32 to vector<8x1xf32>
    %108 = arith.divf %106, %107 : vector<8x1xf32>
    %109 = vector.broadcast %101 : vector<8x1xf32> to vector<8x32xf32>
    %110 = arith.subf %95, %109 : vector<8x32xf32>
    %cst_42 = arith.constant 9.99999974E-6 : f32
    %111 = vector.broadcast %cst_42 : f32 to vector<8x1xf32>
    %112 = arith.addf %108, %111 : vector<8x1xf32>
    %113 = math.rsqrt %112 : vector<8x1xf32>
    %114 = vector.broadcast %113 : vector<8x1xf32> to vector<8x32xf32>
    %115 = arith.mulf %110, %114 : vector<8x32xf32>
    %116 = vector.broadcast %96 : vector<1x32xf32> to vector<8x32xf32>
    %117 = arith.mulf %115, %116 : vector<8x32xf32>
    %118 = vector.broadcast %97 : vector<1x32xf32> to vector<8x32xf32>
    %119 = arith.addf %117, %118 : vector<8x32xf32>
    %120 = arith.truncf %119 : vector<8x32xf32> to vector<8x32xbf16>
    %c0_43 = arith.constant 0 : index
    %c0_44 = arith.constant 0 : index
    %121 = vector.load %arg14[%c0_43, %c0_44] : memref<32x128xbf16, #tpu.memory_space<vmem>>, vector<32x128xbf16>
    %cst_45 = arith.constant dense<0.000000e+00> : vector<8x128xf32>
    %122 = tpu.matmul %120, %121, %cst_45 {dimension_numbers = #tpu.dot_dimension_numbers<[1], [0], [0], [1], [0, 0, 1, 1], [], []>} : vector<8x32xbf16>, vector<32x128xbf16>, vector<8x128xf32> -> vector<8x128xf32>
    %c0_46 = arith.constant 0 : index
    %c0_47 = arith.constant 0 : index
    %123 = vector.load %arg15[%c0_46, %c0_47] : memref<1x128xf32, #tpu.memory_space<vmem>>, vector<1x128xf32>
    %124 = vector.broadcast %123 : vector<1x128xf32> to vector<8x128xf32>
    %125 = arith.addf %122, %124 : vector<8x128xf32>
    %cst_48 = arith.constant 0.000000e+00 : f32
    %126 = vector.broadcast %cst_48 : f32 to vector<8x128xf32>
    %127 = arith.maximumf %125, %126 : vector<8x128xf32>
    %128 = arith.truncf %127 : vector<8x128xf32> to vector<8x128xbf16>
    %c0_49 = arith.constant 0 : index
    %c0_50 = arith.constant 0 : index
    %129 = vector.load %arg16[%c0_49, %c0_50] : memref<128x32xbf16, #tpu.memory_space<vmem>>, vector<128x32xbf16>
    %cst_51 = arith.constant dense<0.000000e+00> : vector<8x32xf32>
    %130 = tpu.matmul %128, %129, %cst_51 {dimension_numbers = #tpu.dot_dimension_numbers<[1], [0], [0], [1], [0, 0, 1, 1], [], []>} : vector<8x128xbf16>, vector<128x32xbf16>, vector<8x32xf32> -> vector<8x32xf32>
    %c0_52 = arith.constant 0 : index
    %c0_53 = arith.constant 0 : index
    %131 = vector.load %arg17[%c0_52, %c0_53] : memref<1x32xf32, #tpu.memory_space<vmem>>, vector<1x32xf32>
    %132 = vector.broadcast %131 : vector<1x32xf32> to vector<8x32xf32>
    %133 = arith.addf %130, %132 : vector<8x32xf32>
    %134 = arith.addf %133, %119 : vector<8x32xf32>
    %c0_54 = arith.constant 0 : index
    %c0_55 = arith.constant 0 : index
    %135 = vector.load %arg12[%c0_54, %c0_55] : memref<1x32xf32, #tpu.memory_space<vmem>>, vector<1x32xf32>
    %c0_56 = arith.constant 0 : index
    %c0_57 = arith.constant 0 : index
    %136 = vector.load %arg13[%c0_56, %c0_57] : memref<1x32xf32, #tpu.memory_space<vmem>>, vector<1x32xf32>
    %cst_58 = arith.constant dense<0.000000e+00> : vector<8xf32>
    %137 = vector.multi_reduction <add>, %134, %cst_58 [1] : vector<8x32xf32> to vector<8xf32>
    %138 = vector.shape_cast %137 : vector<8xf32> to vector<8x1xf32>
    %cst_59 = arith.constant 3.200000e+01 : f32
    %139 = vector.broadcast %cst_59 : f32 to vector<8x1xf32>
    %140 = arith.divf %138, %139 : vector<8x1xf32>
    %141 = vector.broadcast %140 : vector<8x1xf32> to vector<8x32xf32>
    %142 = arith.subf %134, %141 : vector<8x32xf32>
    %143 = arith.mulf %142, %142 : vector<8x32xf32>
    %cst_60 = arith.constant dense<0.000000e+00> : vector<8xf32>
    %144 = vector.multi_reduction <add>, %143, %cst_60 [1] : vector<8x32xf32> to vector<8xf32>
    %145 = vector.shape_cast %144 : vector<8xf32> to vector<8x1xf32>
    %cst_61 = arith.constant 3.200000e+01 : f32
    %146 = vector.broadcast %cst_61 : f32 to vector<8x1xf32>
    %147 = arith.divf %145, %146 : vector<8x1xf32>
    %148 = vector.broadcast %140 : vector<8x1xf32> to vector<8x32xf32>
    %149 = arith.subf %134, %148 : vector<8x32xf32>
    %cst_62 = arith.constant 9.99999974E-6 : f32
    %150 = vector.broadcast %cst_62 : f32 to vector<8x1xf32>
    %151 = arith.addf %147, %150 : vector<8x1xf32>
    %152 = math.rsqrt %151 : vector<8x1xf32>
    %153 = vector.broadcast %152 : vector<8x1xf32> to vector<8x32xf32>
    %154 = arith.mulf %149, %153 : vector<8x32xf32>
    %155 = vector.broadcast %135 : vector<1x32xf32> to vector<8x32xf32>
    %156 = arith.mulf %154, %155 : vector<8x32xf32>
    %157 = vector.broadcast %136 : vector<1x32xf32> to vector<8x32xf32>
    %158 = arith.addf %156, %157 : vector<8x32xf32>
    %159 = arith.truncf %158 : vector<8x32xf32> to vector<8x32xbf16>
    %c0_63 = arith.constant 0 : index
    %c0_64 = arith.constant 0 : index
    %c0_65 = arith.constant 0 : index
    %160 = vector.load %arg18[%c0_63, %c0_64, %c0_65] : memref<1x8x32xbf16, #tpu.memory_space<vmem>>, vector<1x8x32xbf16>
    %161 = vector.shape_cast %160 : vector<1x8x32xbf16> to vector<8x32xbf16>
    %162 = vector.shape_cast %159 : vector<8x32xbf16> to vector<1x8x32xbf16>
    tpu.vector_store %arg18[%c0_63, %c0_64, %c0_65], %162 {strides = array<i32>} : memref<1x8x32xbf16, #tpu.memory_space<vmem>>, vector<1x8x32xbf16>,
    return
  }
  func.func @transform_0(%arg0: i32, %arg1: i32) -> (i32, i32, i32) {
    %c0_i32 = arith.constant 0 : i32
    %c0_i32_0 = arith.constant 0 : i32
    return %arg0, %arg1, %c0_i32 : i32, i32, i32
  }
  func.func @transform_1(%arg0: i32, %arg1: i32) -> (i32, i32, i32) {
    %c0_i32 = arith.constant 0 : i32
    %c0_i32_0 = arith.constant 0 : i32
    %c0_i32_1 = arith.constant 0 : i32
    return %arg0, %c0_i32, %c0_i32_0 : i32, i32, i32
  }
  func.func @transform_2(%arg0: i32, %arg1: i32) -> (i32, i32, i32) {
    %c0_i32 = arith.constant 0 : i32
    %c0_i32_0 = arith.constant 0 : i32
    %c0_i32_1 = arith.constant 0 : i32
    return %arg0, %c0_i32, %c0_i32_0 : i32, i32, i32
  }
  func.func @transform_3(%arg0: i32, %arg1: i32) -> (i32, i32) {
    %c0_i32 = arith.constant 0 : i32
    %c0_i32_0 = arith.constant 0 : i32
    %c0_i32_1 = arith.constant 0 : i32
    return %c0_i32, %c0_i32_0 : i32, i32
  }
  func.func @transform_4(%arg0: i32, %arg1: i32) -> (i32, i32) {
    %c0_i32 = arith.constant 0 : i32
    %c0_i32_0 = arith.constant 0 : i32
    %c0_i32_1 = arith.constant 0 : i32
    return %c0_i32, %c0_i32_0 : i32, i32
  }
  func.func @transform_5(%arg0: i32, %arg1: i32) -> (i32, i32) {
    %c0_i32 = arith.constant 0 : i32
    %c0_i32_0 = arith.constant 0 : i32
    %c0_i32_1 = arith.constant 0 : i32
    return %c0_i32, %c0_i32_0 : i32, i32
  }
  func.func @transform_6(%arg0: i32, %arg1: i32) -> (i32, i32) {
    %c0_i32 = arith.constant 0 : i32
    %c0_i32_0 = arith.constant 0 : i32
    %c0_i32_1 = arith.constant 0 : i32
    return %c0_i32, %c0_i32_0 : i32, i32
  }
  func.func @transform_7(%arg0: i32, %arg1: i32) -> (i32, i32) {
    %c0_i32 = arith.constant 0 : i32
    %c0_i32_0 = arith.constant 0 : i32
    %c0_i32_1 = arith.constant 0 : i32
    return %c0_i32, %c0_i32_0 : i32, i32
  }
  func.func @transform_8(%arg0: i32, %arg1: i32) -> (i32, i32) {
    %c0_i32 = arith.constant 0 : i32
    %c0_i32_0 = arith.constant 0 : i32
    %c0_i32_1 = arith.constant 0 : i32
    return %c0_i32, %c0_i32_0 : i32, i32
  }
  func.func @transform_9(%arg0: i32, %arg1: i32) -> (i32, i32) {
    %c0_i32 = arith.constant 0 : i32
    %c0_i32_0 = arith.constant 0 : i32
    %c0_i32_1 = arith.constant 0 : i32
    return %c0_i32, %c0_i32_0 : i32, i32
  }
  func.func @transform_10(%arg0: i32, %arg1: i32) -> (i32, i32) {
    %c0_i32 = arith.constant 0 : i32
    %c0_i32_0 = arith.constant 0 : i32
    %c0_i32_1 = arith.constant 0 : i32
    return %c0_i32, %c0_i32_0 : i32, i32
  }
  func.func @transform_11(%arg0: i32, %arg1: i32) -> (i32, i32) {
    %c0_i32 = arith.constant 0 : i32
    %c0_i32_0 = arith.constant 0 : i32
    %c0_i32_1 = arith.constant 0 : i32
    return %c0_i32, %c0_i32_0 : i32, i32
  }
  func.func @transform_12(%arg0: i32, %arg1: i32) -> (i32, i32) {
    %c0_i32 = arith.constant 0 : i32
    %c0_i32_0 = arith.constant 0 : i32
    %c0_i32_1 = arith.constant 0 : i32
    return %c0_i32, %c0_i32_0 : i32, i32
  }
  func.func @transform_13(%arg0: i32, %arg1: i32) -> (i32, i32) {
    %c0_i32 = arith.constant 0 : i32
    %c0_i32_0 = arith.constant 0 : i32
    %c0_i32_1 = arith.constant 0 : i32
    return %c0_i32, %c0_i32_0 : i32, i32
  }
  func.func @transform_14(%arg0: i32, %arg1: i32) -> (i32, i32) {
    %c0_i32 = arith.constant 0 : i32
    %c0_i32_0 = arith.constant 0 : i32
    %c0_i32_1 = arith.constant 0 : i32
    return %c0_i32, %c0_i32_0 : i32, i32
  }
  func.func @transform_15(%arg0: i32, %arg1: i32) -> (i32, i32) {
    %c0_i32 = arith.constant 0 : i32
    %c0_i32_0 = arith.constant 0 : i32
    %c0_i32_1 = arith.constant 0 : i32
    return %c0_i32, %c0_i32_0 : i32, i32
  }
  func.func @transform_16(%arg0: i32, %arg1: i32) -> (i32, i32, i32) {
    %c0_i32 = arith.constant 0 : i32
    %c0_i32_0 = arith.constant 0 : i32
    return %arg0, %arg1, %c0_i32 : i32, i32, i32
  }
}

module attributes {stable_mosaic.version = 11 : i64} {
  func.func @block_kernel(%arg0: i32, %arg1: i32, %arg2: memref<1x8x32xf32, #tpu.memory_space<vmem>>, %arg3: memref<1x16x32xbf16, #tpu.memory_space<vmem>>, %arg4: memref<1x16x32xbf16, #tpu.memory_space<vmem>>, %arg5: memref<32x32xbf16, #tpu.memory_space<vmem>>, %arg6: memref<32x32xbf16, #tpu.memory_space<vmem>>, %arg7: memref<32x32xbf16, #tpu.memory_space<vmem>>, %arg8: memref<32x32xbf16, #tpu.memory_space<vmem>>, %arg9: memref<1x32xf32, #tpu.memory_space<vmem>>, %arg10: memref<1x32xf32, #tpu.memory_space<vmem>>, %arg11: memref<1x32xf32, #tpu.memory_space<vmem>>, %arg12: memref<1x32xf32, #tpu.memory_space<vmem>>, %arg13: memref<1x32xf32, #tpu.memory_space<vmem>>, %arg14: memref<32x128xbf16, #tpu.memory_space<vmem>>, %arg15: memref<1x128xf32, #tpu.memory_space<vmem>>, %arg16: memref<128x32xbf16, #tpu.memory_space<vmem>>, %arg17: memref<1x32xf32, #tpu.memory_space<vmem>>, %arg18: memref<1x8x32xbf16, #tpu.memory_space<vmem>>, %arg19: memref<16x32xbf16, #tpu.memory_space<vmem>>, %arg20: memref<16x32xbf16, #tpu.memory_space<vmem>>) attributes {dimension_semantics = [#tpu.dimension_semantics<parallel>, #tpu.dimension_semantics<arbitrary>], iteration_bounds = array<i64: 2, 2>, scalar_prefetch = 0 : i64, scratch_operands = 2 : i64, tpu.core_type = #tpu.core_type<tc>, window_params = [{transform_indices = @transform_0, window_bounds = array<i64: 1, 8, 32>}, {transform_indices = @transform_1, window_bounds = array<i64: 1, 16, 32>}, {transform_indices = @transform_2, window_bounds = array<i64: 1, 16, 32>}, {pipeline_mode = #tpu.pipeline_mode<synchronous>, transform_indices = @transform_3, window_bounds = array<i64: 32, 32>}, {pipeline_mode = #tpu.pipeline_mode<synchronous>, transform_indices = @transform_4, window_bounds = array<i64: 32, 32>}, {pipeline_mode = #tpu.pipeline_mode<synchronous>, transform_indices = @transform_5, window_bounds = array<i64: 32, 32>}, {pipeline_mode = #tpu.pipeline_mode<synchronous>, transform_indices = @transform_6, window_bounds = array<i64: 32, 32>}, {pipeline_mode = #tpu.pipeline_mode<synchronous>, transform_indices = @transform_7, window_bounds = array<i64: 1, 32>}, {pipeline_mode = #tpu.pipeline_mode<synchronous>, transform_indices = @transform_8, window_bounds = array<i64: 1, 32>}, {pipeline_mode = #tpu.pipeline_mode<synchronous>, transform_indices = @transform_9, window_bounds = array<i64: 1, 32>}, {pipeline_mode = #tpu.pipeline_mode<synchronous>, transform_indices = @transform_10, window_bounds = array<i64: 1, 32>}, {pipeline_mode = #tpu.pipeline_mode<synchronous>, transform_indices = @transform_11, window_bounds = array<i64: 1, 32>}, {pipeline_mode = #tpu.pipeline_mode<synchronous>, transform_indices = @transform_12, window_bounds = array<i64: 32, 128>}, {pipeline_mode = #tpu.pipeline_mode<synchronous>, transform_indices = @transform_13, window_bounds = array<i64: 1, 128>}, {pipeline_mode = #tpu.pipeline_mode<synchronous>, transform_indices = @transform_14, window_bounds = array<i64: 128, 32>}, {pipeline_mode = #tpu.pipeline_mode<synchronous>, transform_indices = @transform_15, window_bounds = array<i64: 1, 32>}, {transform_indices = @transform_16, window_bounds = array<i64: 1, 8, 32>}]} {
    %c0 = arith.constant 0 : index
    %c0_0 = arith.constant 0 : index
    %c0_1 = arith.constant 0 : index
    %0 = vector.load %arg2[%c0, %c0_0, %c0_1] : memref<1x8x32xf32, #tpu.memory_space<vmem>>, vector<1x8x32xf32>
    %1 = vector.shape_cast %0 : vector<1x8x32xf32> to vector<8x32xf32>
    %c0_i32 = arith.constant 0 : i32
    %2 = arith.cmpi eq, %arg1, %c0_i32 : i32
    %3 = arith.extui %2 : i1 to i32
    %c0_i32_2 = arith.constant 0 : i32
    %4 = arith.cmpi ne, %3, %c0_i32_2 : i32
    scf.if %4 {
      %c0_66 = arith.constant 0 : index
      %c0_67 = arith.constant 0 : index
      %c0_68 = arith.constant 0 : index
      %163 = vector.load %arg3[%c0_66, %c0_67, %c0_68] : memref<1x16x32xbf16, #tpu.memory_space<vmem>>, vector<1x16x32xbf16>
      %164 = vector.shape_cast %163 : vector<1x16x32xbf16> to vector<16x32xbf16>
      %c0_69 = arith.constant 0 : index
      %c0_70 = arith.constant 0 : index
      %165 = vector.load %arg6[%c0_69, %c0_70] : memref<32x32xbf16, #tpu.memory_space<vmem>>, vector<32x32xbf16>
      %cst_71 = arith.constant dense<0.000000e+00> : vector<16x32xf32>
      %166 = tpu.matmul %164, %165, %cst_71 {dimension_numbers = #tpu.dot_dimension_numbers<[1], [0], [0], [1], [0, 0, 1, 1], [], []>} : vector<16x32xbf16>, vector<32x32xbf16>, vector<16x32xf32> -> vector<16x32xf32>
      %167 = arith.truncf %166 : vector<16x32xf32> to vector<16x32xbf16>
      %c0_72 = arith.constant 0 : index
      %c0_73 = arith.constant 0 : index
      %168 = vector.load %arg19[%c0_72, %c0_73] : memref<16x32xbf16, #tpu.memory_space<vmem>>, vector<16x32xbf16>
      tpu.vector_store %arg19[%c0_72, %c0_73], %167 {strides = array<i32>} : memref<16x32xbf16, #tpu.memory_space<vmem>>, vector<16x32xbf16>,
      %c0_74 = arith.constant 0 : index
      %c0_75 = arith.constant 0 : index
      %c0_76 = arith.constant 0 : index
      %169 = vector.load %arg4[%c0_74, %c0_75, %c0_76] : memref<1x16x32xbf16, #tpu.memory_space<vmem>>, vector<1x16x32xbf16>
      %170 = vector.shape_cast %169 : vector<1x16x32xbf16> to vector<16x32xbf16>
      %c0_77 = arith.constant 0 : index
      %c0_78 = arith.constant 0 : index
      %171 = vector.load %arg7[%c0_77, %c0_78] : memref<32x32xbf16, #tpu.memory_space<vmem>>, vector<32x32xbf16>
      %cst_79 = arith.constant dense<0.000000e+00> : vector<16x32xf32>
      %172 = tpu.matmul %170, %171, %cst_79 {dimension_numbers = #tpu.dot_dimension_numbers<[1], [0], [0], [1], [0, 0, 1, 1], [], []>} : vector<16x32xbf16>, vector<32x32xbf16>, vector<16x32xf32> -> vector<16x32xf32>
      %173 = arith.truncf %172 : vector<16x32xf32> to vector<16x32xbf16>
      %c0_80 = arith.constant 0 : index
      %c0_81 = arith.constant 0 : index
      %174 = vector.load %arg20[%c0_80, %c0_81] : memref<16x32xbf16, #tpu.memory_space<vmem>>, vector<16x32xbf16>
      tpu.vector_store %arg20[%c0_80, %c0_81], %173 {strides = array<i32>} : memref<16x32xbf16, #tpu.memory_space<vmem>>, vector<16x32xbf16>,
    } else {
    }
    %5 = arith.truncf %1 : vector<8x32xf32> to vector<8x32xbf16>
    %c0_3 = arith.constant 0 : index
    %c0_4 = arith.constant 0 : index
    %6 = vector.load %arg5[%c0_3, %c0_4] : memref<32x32xbf16, #tpu.memory_space<vmem>>, vector<32x32xbf16>
    %cst = arith.constant dense<0.000000e+00> : vector<8x32xf32>
    %7 = tpu.matmul %5, %6, %cst {dimension_numbers = #tpu.dot_dimension_numbers<[1], [0], [0], [1], [0, 0, 1, 1], [], []>} : vector<8x32xbf16>, vector<32x32xbf16>, vector<8x32xf32> -> vector<8x32xf32>
    %8 = vector.shape_cast %7 : vector<8x32xf32> to vector<8x4x8xf32>
    %9 = arith.truncf %8 : vector<8x4x8xf32> to vector<8x4x8xbf16>
    %c8_i32 = arith.constant 8 : i32
    %10 = arith.muli %arg1, %c8_i32 : i32
    %cst_5 = arith.constant 0xFF800000 : f32
    %11 = vector.broadcast %cst_5 : f32 to vector<4x8x1xf32>
    %cst_6 = arith.constant 0.000000e+00 : f32
    %12 = vector.broadcast %cst_6 : f32 to vector<4x8x1xf32>
    %cst_7 = arith.constant 0.000000e+00 : f32
    %13 = vector.broadcast %cst_7 : f32 to vector<4x8x8xf32>
    %c0_8 = arith.constant 0 : index
    %c0_9 = arith.constant 0 : index
    %14 = vector.load %arg19[%c0_8, %c0_9] : memref<16x32xbf16, #tpu.memory_space<vmem>>, vector<8x32xbf16>
    %15 = vector.shape_cast %14 : vector<8x32xbf16> to vector<8x4x8xbf16>
    %c0_10 = arith.constant 0 : index
    %c0_11 = arith.constant 0 : index
    %16 = vector.load %arg20[%c0_10, %c0_11] : memref<16x32xbf16, #tpu.memory_space<vmem>>, vector<8x32xbf16>
    %17 = vector.shape_cast %16 : vector<8x32xbf16> to vector<8x4x8xbf16>
    "tpu.trace_start"() <{level = 10 : i32, message = "qhd,khd->hqk"}> : () -> ()
    %cst_12 = arith.constant dense<0.000000e+00> : vector<4x8x8xf32>
    %18 = tpu.matmul %9, %15, %cst_12 {dimension_numbers = #tpu.dot_dimension_numbers<[2], [2], [0], [0], [0, 1, 0, 0, 1, 0], [1], [1]>} : vector<8x4x8xbf16>, vector<8x4x8xbf16>, vector<4x8x8xf32> -> vector<4x8x8xf32>
    "tpu.trace_stop"() : () -> ()
    %19 = tpu.iota {dimensions = array<i32: 0>} : vector<8x8xi32>
    %20 = vector.broadcast %10 : i32 to vector<8x8xi32>
    %21 = arith.addi %20, %19 : vector<8x8xi32>
    %22 = tpu.iota {dimensions = array<i32: 1>} : vector<8x8xi32>
    %c0_i32_13 = arith.constant 0 : i32
    %23 = vector.broadcast %c0_i32_13 : i32 to vector<8x8xi32>
    %24 = arith.addi %23, %22 : vector<8x8xi32>
    %25 = arith.cmpi sge, %21, %24 : vector<8x8xi32>
    %cst_14 = arith.constant 0.000000e+00 : f32
    %cst_15 = arith.constant -1.000000e+20 : f32
    %26 = vector.broadcast %cst_14 : f32 to vector<8x8xf32>
    %27 = vector.broadcast %cst_15 : f32 to vector<8x8xf32>
    %28 = arith.select %25, %26, %27 : vector<8x8xi1>, vector<8x8xf32>
    %29 = vector.shape_cast %28 : vector<8x8xf32> to vector<1x8x8xf32>
    %30 = vector.broadcast %29 : vector<1x8x8xf32> to vector<4x8x8xf32>
    %31 = arith.addf %18, %30 : vector<4x8x8xf32>
    %cst_16 = arith.constant dense<0xFF800000> : vector<4x8xf32>
    %32 = vector.multi_reduction <maximumf>, %31, %cst_16 [2] : vector<4x8x8xf32> to vector<4x8xf32>
    %33 = vector.shape_cast %32 : vector<4x8xf32> to vector<4x8x1xf32>
    %34 = arith.maximumf %11, %33 : vector<4x8x1xf32>
    %35 = arith.subf %11, %34 : vector<4x8x1xf32>
    %36 = math.exp %35 : vector<4x8x1xf32>
    %37 = vector.broadcast %34 : vector<4x8x1xf32> to vector<4x8x8xf32>
    %38 = arith.subf %31, %37 : vector<4x8x8xf32>
    %39 = math.exp %38 : vector<4x8x8xf32>
    %40 = arith.mulf %36, %12 : vector<4x8x1xf32>
    %cst_17 = arith.constant dense<0.000000e+00> : vector<4x8xf32>
    %41 = vector.multi_reduction <add>, %39, %cst_17 [2] : vector<4x8x8xf32> to vector<4x8xf32>
    %42 = vector.shape_cast %41 : vector<4x8xf32> to vector<4x8x1xf32>
    %43 = arith.addf %40, %42 : vector<4x8x1xf32>
    %44 = vector.broadcast %36 : vector<4x8x1xf32> to vector<4x8x8xf32>
    %45 = arith.mulf %44, %13 : vector<4x8x8xf32>
    %46 = arith.truncf %39 : vector<4x8x8xf32> to vector<4x8x8xbf16>
    "tpu.trace_start"() <{level = 10 : i32, message = "hqk,khd->hqd"}> : () -> ()
    %cst_18 = arith.constant dense<0.000000e+00> : vector<4x8x8xf32>
    %47 = tpu.matmul %46, %17, %cst_18 {dimension_numbers = #tpu.dot_dimension_numbers<[2], [0], [1], [2], [0, 0, 0, 1, 1, 2], [0], [1]>} : vector<4x8x8xbf16>, vector<8x4x8xbf16>, vector<4x8x8xf32> -> vector<4x8x8xf32>
    "tpu.trace_stop"() : () -> ()
    %48 = arith.addf %45, %47 : vector<4x8x8xf32>
    %c8 = arith.constant 8 : index
    %c0_19 = arith.constant 0 : index
    %49 = vector.load %arg19[%c8, %c0_19] : memref<16x32xbf16, #tpu.memory_space<vmem>>, vector<8x32xbf16>
    %50 = vector.shape_cast %49 : vector<8x32xbf16> to vector<8x4x8xbf16>
    %c8_20 = arith.constant 8 : index
    %c0_21 = arith.constant 0 : index
    %51 = vector.load %arg20[%c8_20, %c0_21] : memref<16x32xbf16, #tpu.memory_space<vmem>>, vector<8x32xbf16>
    %52 = vector.shape_cast %51 : vector<8x32xbf16> to vector<8x4x8xbf16>
    "tpu.trace_start"() <{level = 10 : i32, message = "qhd,khd->hqk"}> : () -> ()
    %cst_22 = arith.constant dense<0.000000e+00> : vector<4x8x8xf32>
    %53 = tpu.matmul %9, %50, %cst_22 {dimension_numbers = #tpu.dot_dimension_numbers<[2], [2], [0], [0], [0, 1, 0, 0, 1, 0], [1], [1]>} : vector<8x4x8xbf16>, vector<8x4x8xbf16>, vector<4x8x8xf32> -> vector<4x8x8xf32>
    "tpu.trace_stop"() : () -> ()
    %54 = tpu.iota {dimensions = array<i32: 0>} : vector<8x8xi32>
    %55 = vector.broadcast %10 : i32 to vector<8x8xi32>
    %56 = arith.addi %55, %54 : vector<8x8xi32>
    %57 = tpu.iota {dimensions = array<i32: 1>} : vector<8x8xi32>
    %c8_i32_23 = arith.constant 8 : i32
    %58 = vector.broadcast %c8_i32_23 : i32 to vector<8x8xi32>
    %59 = arith.addi %58, %57 : vector<8x8xi32>
    %60 = arith.cmpi sge, %56, %59 : vector<8x8xi32>
    %cst_24 = arith.constant 0.000000e+00 : f32
    %cst_25 = arith.constant -1.000000e+20 : f32
    %61 = vector.broadcast %cst_24 : f32 to vector<8x8xf32>
    %62 = vector.broadcast %cst_25 : f32 to vector<8x8xf32>
    %63 = arith.select %60, %61, %62 : vector<8x8xi1>, vector<8x8xf32>
    %64 = vector.shape_cast %63 : vector<8x8xf32> to vector<1x8x8xf32>
    %65 = vector.broadcast %64 : vector<1x8x8xf32> to vector<4x8x8xf32>
    %66 = arith.addf %53, %65 : vector<4x8x8xf32>
    %cst_26 = arith.constant dense<0xFF800000> : vector<4x8xf32>
    %67 = vector.multi_reduction <maximumf>, %66, %cst_26 [2] : vector<4x8x8xf32> to vector<4x8xf32>
    %68 = vector.shape_cast %67 : vector<4x8xf32> to vector<4x8x1xf32>
    %69 = arith.maximumf %34, %68 : vector<4x8x1xf32>
    %70 = arith.subf %34, %69 : vector<4x8x1xf32>
    %71 = math.exp %70 : vector<4x8x1xf32>
    %72 = vector.broadcast %69 : vector<4x8x1xf32> to vector<4x8x8xf32>
    %73 = arith.subf %66, %72 : vector<4x8x8xf32>
    %74 = math.exp %73 : vector<4x8x8xf32>
    %75 = arith.mulf %71, %43 : vector<4x8x1xf32>
    %cst_27 = arith.constant dense<0.000000e+00> : vector<4x8xf32>
    %76 = vector.multi_reduction <add>, %74, %cst_27 [2] : vector<4x8x8xf32> to vector<4x8xf32>
    %77 = vector.shape_cast %76 : vector<4x8xf32> to vector<4x8x1xf32>
    %78 = arith.addf %75, %77 : vector<4x8x1xf32>
    %79 = vector.broadcast %71 : vector<4x8x1xf32> to vector<4x8x8xf32>
    %80 = arith.mulf %79, %48 : vector<4x8x8xf32>
    %81 = arith.truncf %74 : vector<4x8x8xf32> to vector<4x8x8xbf16>
    "tpu.trace_start"() <{level = 10 : i32, message = "hqk,khd->hqd"}> : () -> ()
    %cst_28 = arith.constant dense<0.000000e+00> : vector<4x8x8xf32>
    %82 = tpu.matmul %81, %52, %cst_28 {dimension_numbers = #tpu.dot_dimension_numbers<[2], [0], [1], [2], [0, 0, 0, 1, 1, 2], [0], [1]>} : vector<4x8x8xbf16>, vector<8x4x8xbf16>, vector<4x8x8xf32> -> vector<4x8x8xf32>
    "tpu.trace_stop"() : () -> ()
    %83 = arith.addf %80, %82 : vector<4x8x8xf32>
    %84 = tpu.reciprocal %78 {approx = true} : vector<4x8x1xf32> -> vector<4x8x1xf32>
    %85 = vector.broadcast %84 : vector<4x8x1xf32> to vector<4x8x8xf32>
    %86 = arith.mulf %83, %85 : vector<4x8x8xf32>
    %87 = tpu.transpose %86, [1, 0, 2] : vector<4x8x8xf32> -> vector<8x4x8xf32>
    %88 = vector.shape_cast %87 : vector<8x4x8xf32> to vector<8x32xf32>
    %89 = arith.truncf %88 : vector<8x32xf32> to vector<8x32xbf16>
    %c0_29 = arith.constant 0 : index
    %c0_30 = arith.constant 0 : index
    %90 = vector.load %arg8[%c0_29, %c0_30] : memref<32x32xbf16, #tpu.memory_space<vmem>>, vector<32x32xbf16>
    %cst_31 = arith.constant dense<0.000000e+00> : vector<8x32xf32>
    %91 = tpu.matmul %89, %90, %cst_31 {dimension_numbers = #tpu.dot_dimension_numbers<[1], [0], [0], [1], [0, 0, 1, 1], [], []>} : vector<8x32xbf16>, vector<32x32xbf16>, vector<8x32xf32> -> vector<8x32xf32>
    %c0_32 = arith.constant 0 : index
    %c0_33 = arith.constant 0 : index
    %92 = vector.load %arg9[%c0_32, %c0_33] : memref<1x32xf32, #tpu.memory_space<vmem>>, vector<1x32xf32>
    %93 = vector.broadcast %92 : vector<1x32xf32> to vector<8x32xf32>
    %94 = arith.addf %91, %93 : vector<8x32xf32>
    %95 = arith.addf %94, %1 : vector<8x32xf32>
    %c0_34 = arith.constant 0 : index
    %c0_35 = arith.constant 0 : index
    %96 = vector.load %arg10[%c0_34, %c0_35] : memref<1x32xf32, #tpu.memory_space<vmem>>, vector<1x32xf32>
    %c0_36 = arith.constant 0 : index
    %c0_37 = arith.constant 0 : index
    %97 = vector.load %arg11[%c0_36, %c0_37] : memref<1x32xf32, #tpu.memory_space<vmem>>, vector<1x32xf32>
    %cst_38 = arith.constant dense<0.000000e+00> : vector<8xf32>
    %98 = vector.multi_reduction <add>, %95, %cst_38 [1] : vector<8x32xf32> to vector<8xf32>
    %99 = vector.shape_cast %98 : vector<8xf32> to vector<8x1xf32>
    %cst_39 = arith.constant 3.200000e+01 : f32
    %100 = vector.broadcast %cst_39 : f32 to vector<8x1xf32>
    %101 = arith.divf %99, %100 : vector<8x1xf32>
    %102 = vector.broadcast %101 : vector<8x1xf32> to vector<8x32xf32>
    %103 = arith.subf %95, %102 : vector<8x32xf32>
    %104 = arith.mulf %103, %103 : vector<8x32xf32>
    %cst_40 = arith.constant dense<0.000000e+00> : vector<8xf32>
    %105 = vector.multi_reduction <add>, %104, %cst_40 [1] : vector<8x32xf32> to vector<8xf32>
    %106 = vector.shape_cast %105 : vector<8xf32> to vector<8x1xf32>
    %cst_41 = arith.constant 3.200000e+01 : f32
    %107 = vector.broadcast %cst_41 : f32 to vector<8x1xf32>
    %108 = arith.divf %106, %107 : vector<8x1xf32>
    %109 = vector.broadcast %101 : vector<8x1xf32> to vector<8x32xf32>
    %110 = arith.subf %95, %109 : vector<8x32xf32>
    %cst_42 = arith.constant 9.99999974E-6 : f32
    %111 = vector.broadcast %cst_42 : f32 to vector<8x1xf32>
    %112 = arith.addf %108, %111 : vector<8x1xf32>
    %113 = math.rsqrt %112 : vector<8x1xf32>
    %114 = vector.broadcast %113 : vector<8x1xf32> to vector<8x32xf32>
    %115 = arith.mulf %110, %114 : vector<8x32xf32>
    %116 = vector.broadcast %96 : vector<1x32xf32> to vector<8x32xf32>
    %117 = arith.mulf %115, %116 : vector<8x32xf32>
    %118 = vector.broadcast %97 : vector<1x32xf32> to vector<8x32xf32>
    %119 = arith.addf %117, %118 : vector<8x32xf32>
    %120 = arith.truncf %119 : vector<8x32xf32> to vector<8x32xbf16>
    %c0_43 = arith.constant 0 : index
    %c0_44 = arith.constant 0 : index
    %121 = vector.load %arg14[%c0_43, %c0_44] : memref<32x128xbf16, #tpu.memory_space<vmem>>, vector<32x128xbf16>
    %cst_45 = arith.constant dense<0.000000e+00> : vector<8x128xf32>
    %122 = tpu.matmul %120, %121, %cst_45 {dimension_numbers = #tpu.dot_dimension_numbers<[1], [0], [0], [1], [0, 0, 1, 1], [], []>} : vector<8x32xbf16>, vector<32x128xbf16>, vector<8x128xf32> -> vector<8x128xf32>
    %c0_46 = arith.constant 0 : index
    %c0_47 = arith.constant 0 : index
    %123 = vector.load %arg15[%c0_46, %c0_47] : memref<1x128xf32, #tpu.memory_space<vmem>>, vector<1x128xf32>
    %124 = vector.broadcast %123 : vector<1x128xf32> to vector<8x128xf32>
    %125 = arith.addf %122, %124 : vector<8x128xf32>
    %cst_48 = arith.constant 0.000000e+00 : f32
    %126 = vector.broadcast %cst_48 : f32 to vector<8x128xf32>
    %127 = arith.maximumf %125, %126 : vector<8x128xf32>
    %128 = arith.truncf %127 : vector<8x128xf32> to vector<8x128xbf16>
    %c0_49 = arith.constant 0 : index
    %c0_50 = arith.constant 0 : index
    %129 = vector.load %arg16[%c0_49, %c0_50] : memref<128x32xbf16, #tpu.memory_space<vmem>>, vector<128x32xbf16>
    %cst_51 = arith.constant dense<0.000000e+00> : vector<8x32xf32>
    %130 = tpu.matmul %128, %129, %cst_51 {dimension_numbers = #tpu.dot_dimension_numbers<[1], [0], [0], [1], [0, 0, 1, 1], [], []>} : vector<8x128xbf16>, vector<128x32xbf16>, vector<8x32xf32> -> vector<8x32xf32>
    %c0_52 = arith.constant 0 : index
    %c0_53 = arith.constant 0 : index
    %131 = vector.load %arg17[%c0_52, %c0_53] : memref<1x32xf32, #tpu.memory_space<vmem>>, vector<1x32xf32>
    %132 = vector.broadcast %131 : vector<1x32xf32> to vector<8x32xf32>
    %133 = arith.addf %130, %132 : vector<8x32xf32>
    %134 = arith.addf %133, %119 : vector<8x32xf32>
    %c0_54 = arith.constant 0 : index
    %c0_55 = arith.constant 0 : index
    %135 = vector.load %arg12[%c0_54, %c0_55] : memref<1x32xf32, #tpu.memory_space<vmem>>, vector<1x32xf32>
    %c0_56 = arith.constant 0 : index
    %c0_57 = arith.constant 0 : index
    %136 = vector.load %arg13[%c0_56, %c0_57] : memref<1x32xf32, #tpu.memory_space<vmem>>, vector<1x32xf32>
    %cst_58 = arith.constant dense<0.000000e+00> : vector<8xf32>
    %137 = vector.multi_reduction <add>, %134, %cst_58 [1] : vector<8x32xf32> to vector<8xf32>
    %138 = vector.shape_cast %137 : vector<8xf32> to vector<8x1xf32>
    %cst_59 = arith.constant 3.200000e+01 : f32
    %139 = vector.broadcast %cst_59 : f32 to vector<8x1xf32>
    %140 = arith.divf %138, %139 : vector<8x1xf32>
    %141 = vector.broadcast %140 : vector<8x1xf32> to vector<8x32xf32>
    %142 = arith.subf %134, %141 : vector<8x32xf32>
    %143 = arith.mulf %142, %142 : vector<8x32xf32>
    %cst_60 = arith.constant dense<0.000000e+00> : vector<8xf32>
    %144 = vector.multi_reduction <add>, %143, %cst_60 [1] : vector<8x32xf32> to vector<8xf32>
    %145 = vector.shape_cast %144 : vector<8xf32> to vector<8x1xf32>
    %cst_61 = arith.constant 3.200000e+01 : f32
    %146 = vector.broadcast %cst_61 : f32 to vector<8x1xf32>
    %147 = arith.divf %145, %146 : vector<8x1xf32>
    %148 = vector.broadcast %140 : vector<8x1xf32> to vector<8x32xf32>
    %149 = arith.subf %134, %148 : vector<8x32xf32>
    %cst_62 = arith.constant 9.99999974E-6 : f32
    %150 = vector.broadcast %cst_62 : f32 to vector<8x1xf32>
    %151 = arith.addf %147, %150 : vector<8x1xf32>
    %152 = math.rsqrt %151 : vector<8x1xf32>
    %153 = vector.broadcast %152 : vector<8x1xf32> to vector<8x32xf32>
    %154 = arith.mulf %149, %153 : vector<8x32xf32>
    %155 = vector.broadcast %135 : vector<1x32xf32> to vector<8x32xf32>
    %156 = arith.mulf %154, %155 : vector<8x32xf32>
    %157 = vector.broadcast %136 : vector<1x32xf32> to vector<8x32xf32>
    %158 = arith.addf %156, %157 : vector<8x32xf32>
    %159 = arith.truncf %158 : vector<8x32xf32> to vector<8x32xbf16>
    %c0_63 = arith.constant 0 : index
    %c0_64 = arith.constant 0 : index
    %c0_65 = arith.constant 0 : index
    %160 = vector.load %arg18[%c0_63, %c0_64, %c0_65] : memref<1x8x32xbf16, #tpu.memory_space<vmem>>, vector<1x8x32xbf16>
    %161 = vector.shape_cast %160 : vector<1x8x32xbf16> to vector<8x32xbf16>
    %162 = vector.shape_cast %159 : vector<8x32xbf16> to vector<1x8x32xbf16>
    tpu.vector_store %arg18[%c0_63, %c0_64, %c0_65], %162 {strides = array<i32>} : memref<1x8x32xbf16, #tpu.memory_space<vmem>>, vector<1x8x32xbf16>,
    return
  }
  func.func @transform_0(%arg0: i32, %arg1: i32) -> (i32, i32, i32) {
    %c0_i32 = arith.constant 0 : i32
    %c0_i32_0 = arith.constant 0 : i32
    return %arg0, %arg1, %c0_i32 : i32, i32, i32
  }
  func.func @transform_1(%arg0: i32, %arg1: i32) -> (i32, i32, i32) {
    %c0_i32 = arith.constant 0 : i32
    %c0_i32_0 = arith.constant 0 : i32
    %c0_i32_1 = arith.constant 0 : i32
    return %arg0, %c0_i32, %c0_i32_0 : i32, i32, i32
  }
  func.func @transform_2(%arg0: i32, %arg1: i32) -> (i32, i32, i32) {
    %c0_i32 = arith.constant 0 : i32
    %c0_i32_0 = arith.constant 0 : i32
    %c0_i32_1 = arith.constant 0 : i32
    return %arg0, %c0_i32, %c0_i32_0 : i32, i32, i32
  }
  func.func @transform_3(%arg0: i32, %arg1: i32) -> (i32, i32) {
    %c0_i32 = arith.constant 0 : i32
    %c0_i32_0 = arith.constant 0 : i32
    %c0_i32_1 = arith.constant 0 : i32
    return %c0_i32, %c0_i32_0 : i32, i32
  }
  func.func @transform_4(%arg0: i32, %arg1: i32) -> (i32, i32) {
    %c0_i32 = arith.constant 0 : i32
    %c0_i32_0 = arith.constant 0 : i32
    %c0_i32_1 = arith.constant 0 : i32
    return %c0_i32, %c0_i32_0 : i32, i32
  }
  func.func @transform_5(%arg0: i32, %arg1: i32) -> (i32, i32) {
    %c0_i32 = arith.constant 0 : i32
    %c0_i32_0 = arith.constant 0 : i32
    %c0_i32_1 = arith.constant 0 : i32
    return %c0_i32, %c0_i32_0 : i32, i32
  }
  func.func @transform_6(%arg0: i32, %arg1: i32) -> (i32, i32) {
    %c0_i32 = arith.constant 0 : i32
    %c0_i32_0 = arith.constant 0 : i32
    %c0_i32_1 = arith.constant 0 : i32
    return %c0_i32, %c0_i32_0 : i32, i32
  }
  func.func @transform_7(%arg0: i32, %arg1: i32) -> (i32, i32) {
    %c0_i32 = arith.constant 0 : i32
    %c0_i32_0 = arith.constant 0 : i32
    %c0_i32_1 = arith.constant 0 : i32
    return %c0_i32, %c0_i32_0 : i32, i32
  }
  func.func @transform_8(%arg0: i32, %arg1: i32) -> (i32, i32) {
    %c0_i32 = arith.constant 0 : i32
    %c0_i32_0 = arith.constant 0 : i32
    %c0_i32_1 = arith.constant 0 : i32
    return %c0_i32, %c0_i32_0 : i32, i32
  }
  func.func @transform_9(%arg0: i32, %arg1: i32) -> (i32, i32) {
    %c0_i32 = arith.constant 0 : i32
    %c0_i32_0 = arith.constant 0 : i32
    %c0_i32_1 = arith.constant 0 : i32
    return %c0_i32, %c0_i32_0 : i32, i32
  }
  func.func @transform_10(%arg0: i32, %arg1: i32) -> (i32, i32) {
    %c0_i32 = arith.constant 0 : i32
    %c0_i32_0 = arith.constant 0 : i32
    %c0_i32_1 = arith.constant 0 : i32
    return %c0_i32, %c0_i32_0 : i32, i32
  }
  func.func @transform_11(%arg0: i32, %arg1: i32) -> (i32, i32) {
    %c0_i32 = arith.constant 0 : i32
    %c0_i32_0 = arith.constant 0 : i32
    %c0_i32_1 = arith.constant 0 : i32
    return %c0_i32, %c0_i32_0 : i32, i32
  }
  func.func @transform_12(%arg0: i32, %arg1: i32) -> (i32, i32) {
    %c0_i32 = arith.constant 0 : i32
    %c0_i32_0 = arith.constant 0 : i32
    %c0_i32_1 = arith.constant 0 : i32
    return %c0_i32, %c0_i32_0 : i32, i32
  }
  func.func @transform_13(%arg0: i32, %arg1: i32) -> (i32, i32) {
    %c0_i32 = arith.constant 0 : i32
    %c0_i32_0 = arith.constant 0 : i32
    %c0_i32_1 = arith.constant 0 : i32
    return %c0_i32, %c0_i32_0 : i32, i32
  }
  func.func @transform_14(%arg0: i32, %arg1: i32) -> (i32, i32) {
    %c0_i32 = arith.constant 0 : i32
    %c0_i32_0 = arith.constant 0 : i32
    %c0_i32_1 = arith.constant 0 : i32
    return %c0_i32, %c0_i32_0 : i32, i32
  }
  func.func @transform_15(%arg0: i32, %arg1: i32) -> (i32, i32) {
    %c0_i32 = arith.constant 0 : i32
    %c0_i32_0 = arith.constant 0 : i32
    %c0_i32_1 = arith.constant 0 : i32
    return %c0_i32, %c0_i32_0 : i32, i32
  }
  func.func @transform_16(%arg0: i32, %arg1: i32) -> (i32, i32, i32) {
    %c0_i32 = arith.constant 0 : i32
    %c0_i32_0 = arith.constant 0 : i32
    return %arg0, %arg1, %c0_i32 : i32, i32, i32
  }
}

</mosaic_0001>

<llo_original>
// kernel: tpu_custom_call.1
$region0: #{tpu_custom_call.1}
  #allocation0 [shape = 'u32[]', space=smem, size = 0x4, offset = 0x4, fixed_abs, tag = 'smem constant byte address 0x4 - core index']
  #allocation1 [shape = 'u32[144,128]{1,0:T(1,128)}', space=vmem, size = 0x12000, scoped, tag = 'internal scratch']
  #allocation2 [shape = 'bf16[16,32]{1,0:T(8,128)(2,1)}', space=vmem, size = 0x1000, scoped, tag = 'scratch operand']
  #allocation3 [shape = 'bf16[16,32]{1,0:T(8,128)(2,1)}', space=vmem, size = 0x1000, scoped, tag = 'scratch operand']
  %s0 = inlined_call_operand.vmem [shape: f32[2,16,32], index: 0, kind: input, shape index: {}]
  %s1 = inlined_call_operand.vmem [shape: bf16[2,16,32], index: 1, kind: input, shape index: {}]
  %s2 = inlined_call_operand.vmem [shape: bf16[2,16,32], index: 2, kind: input, shape index: {}]
  %s3 = inlined_call_operand.vmem [shape: bf16[32,32], index: 3, kind: input, shape index: {}]
  %s4 = inlined_call_operand.hbm [shape: bf16[32,32], index: 4, kind: input, shape index: {}]
  %s5 = inlined_call_operand.hbm [shape: bf16[32,32], index: 5, kind: input, shape index: {}]
  %s6 = inlined_call_operand.hbm [shape: bf16[32,32], index: 6, kind: input, shape index: {}]
  %s7 = inlined_call_operand.vmem [shape: f32[1,32], index: 7, kind: input, shape index: {}]
  %s8 = inlined_call_operand.vmem [shape: f32[1,32], index: 8, kind: input, shape index: {}]
  %s9 = inlined_call_operand.vmem [shape: f32[1,32], index: 9, kind: input, shape index: {}]
  %s10 = inlined_call_operand.vmem [shape: f32[1,32], index: 10, kind: input, shape index: {}]
  %s11 = inlined_call_operand.vmem [shape: f32[1,32], index: 11, kind: input, shape index: {}]
  %s12 = inlined_call_operand.hbm [shape: bf16[32,128], index: 12, kind: input, shape index: {}]
  %s13 = inlined_call_operand.vmem [shape: f32[1,128], index: 13, kind: input, shape index: {}]
  %s14 = inlined_call_operand.vmem [shape: bf16[128,32], index: 14, kind: input, shape index: {}]
  %s15 = inlined_call_operand.vmem [shape: f32[1,32], index: 15, kind: input, shape index: {}]
  %s16 = inlined_call_operand.hbm [shape: bf16[2,16,32], index: 16, kind: output, shape index: {}]
  %s17 = sld [smem:[#allocation0]]
  $region117: #{tpu_custom_call.1} parent=0
    _
  %s19 = ssub.s32 1, %s17
  %s20 = scalar_select 0, %s19, %s17
  $region1: #{tpu_custom_call.1} parent=0
    #allocation4 [shape = 'u8[8192]{0}', space=vmem, size = 0x2000, scoped, tag = 'input window, operand 4, single buffered']
    #allocation5 [shape = 's32[2]{0}', space=sflag, size = 0x8, scoped, tag = 'scoped memory for tpu_custom_call.1']
    #allocation6 [shape = 's32[2]{0}', space=sflag, size = 0x8, scoped, tag = 'scoped memory for tpu_custom_call.1']
    #allocation7 [shape = 'u8[8192]{0}', space=vmem, size = 0x2000, scoped, tag = 'input window, operand 5, single buffered']
    #allocation8 [shape = 's32[1]{0}', space=sflag, size = 0x4, scoped, tag = 'scoped memory for tpu_custom_call.1']
    #allocation9 [shape = 'u8[8192]{0}', space=vmem, size = 0x2000, scoped, tag = 'input window, operand 6, single buffered']
    #allocation10 [shape = 'u8[8192]{0}', space=vmem, size = 0x2000, scoped, tag = 'input window, operand 12, single buffered']
    #allocation11 [shape = 's32[1]{0}', space=sflag, size = 0x4, scoped, tag = 'scoped memory for tpu_custom_call.1']
    #allocation12 [shape = 'u8[4096]{0}', space=vmem, size = 0x1000, scoped, tag = 'output window, operand 0']
    %21 = vsyncpa [#allocation5], 0
    %22 = vsyncpa [#allocation8], 0
    %23 = vsyncpa [#allocation11], 0
    %24 = vsyncpa [#allocation6], 0
    %s25 = scalar_lea.sflag [#allocation6], 1
    %26 = vsyncpa %s25, 0
    loop: start=0, step=1, limit=6
    $region2: #{tpu_custom_call.1} parent=1 // loop_pre_header
      _
    $region3: #{tpu_custom_call.1} parent=1 // loop_header
      %s28 = sphi 0, %s32
      %p29 = scmp.ge.s32.totalorder %s28, 6
      %s35 = sphi 0, %s47
      %s36 = sphi 0, %s43
      %s37 = sphi 0, %s35
      %s38 = sphi 0, %s36
      %s39 = sphi 0, %s37
      %s40 = sphi 0, %s38
      %s52 = sphi 0, %s54
      %s55 = sphi 0, %s52
      %s56 = sphi 0, %s55
      %s72 = sphi 0, %s56
      %s78 = sphi 0, %s80
      %s81 = sphi 0, %s78
      %s82 = sphi 0, %s81
      %s98 = sphi 0, %s82
      %s104 = sphi 0, %s106
      %s107 = sphi 0, %s104
      %s108 = sphi 0, %s107
      %s124 = sphi 0, %s108
      %s128 = sphi 0, %s128
      %s130 = sphi 0, %s128
      %s131 = sphi 0, %s130
      %s145 = sphi 0, %s131
      %s149 = sphi 0, %s149
      %s151 = sphi 0, %s149
      %s152 = sphi 0, %s151
      %s166 = sphi 0, %s152
      %s170 = sphi 0, %s170
      %s172 = sphi 0, %s170
      %s173 = sphi 0, %s172
      %s187 = sphi 0, %s173
      %s191 = sphi 0, %s191
      %s193 = sphi 0, %s191
      %s194 = sphi 0, %s193
      %s208 = sphi 0, %s194
      %s212 = sphi 0, %s212
      %s214 = sphi 0, %s212
      %s215 = sphi 0, %s214
      %s229 = sphi 0, %s215
      %s233 = sphi 0, %s233
      %s235 = sphi 0, %s233
      %s236 = sphi 0, %s235
      %s250 = sphi 0, %s236
      %s254 = sphi 0, %s254
      %s256 = sphi 0, %s254
      %s257 = sphi 0, %s256
      %s271 = sphi 0, %s257
      %s275 = sphi 0, %s275
      %s277 = sphi 0, %s275
      %s278 = sphi 0, %s277
      %s292 = sphi 0, %s278
      %s296 = sphi 0, %s296
      %s298 = sphi 0, %s296
      %s299 = sphi 0, %s298
      %s313 = sphi 0, %s299
      %s317 = sphi 0, %s317
      %s319 = sphi 0, %s317
      %s320 = sphi 0, %s319
      %s334 = sphi 0, %s320
      %s338 = sphi 0, %s338
      %s340 = sphi 0, %s338
      %s341 = sphi 0, %s340
      %s355 = sphi 0, %s341
      %s359 = sphi 0, %s359
      %s361 = sphi 0, %s359
      %s362 = sphi 0, %s361
      %s376 = sphi 0, %s362
      %s380 = sphi 0, %s380
      %s382 = sphi 0, %s380
      %s383 = sphi 0, %s382
      %s397 = sphi 0, %s383
      %s405 = sphi 0, %s407
      %s408 = sphi 0, %s405
      %s409 = sphi 0, %s408
      %s425 = sphi 0, %s409
    $region4: #{tpu_custom_call.1} parent=1 // loop_header_branch
      %31 = sbr.rel (%p29) target = $region8
    $region5: #{tpu_custom_call.1} parent=1 // loop_body
      %s33 = ssub.s32 %s28, 1
      %s34 = ssub.s32 %s28, 2
      %s41 = sadd.s32 1, %s36
      %p42 = scmp.ge.s32.totalorder %s41, 2
      %s43 = scalar_select %p42, 0, %s41
      %s44 = sadd.s32 1, %s35
      %s45 = scalar_select %p42, %s44, %s35
      %p46 = scmp.ge.s32.totalorder %s45, 2
      %s47 = scalar_select %p46, 0, %s45
      %s48 = ssub.s32 %s35, %s47
      %s49 = ssub.s32 %s36, %s43
      %s50 = sor.u32 %s48, %s49
      %p51 = scmp.eq.s32.totalorder %s50, 0
      %s53 = sadd.s32 %s52, 1
      %s54 = scalar_select %p51, %s52, %s53
      %p57 = pneg %p51
      %p58 = scmp.eq.s32.totalorder %s28, 3
      %p59 = por %p57, %p58
      %p60 = scmp.ne.s32.totalorder %s52, %s55
      %p61 = scmp.eq.s32.totalorder %s28, 0
      %p62 = por %p60, %p61
      %p63 = scmp.ne.s32.totalorder %s52, %s55
      %p64 = scmp.eq.s32.totalorder %s33, 3
      %p65 = por %p63, %p64
      %p66 = scmp.ne.s32.totalorder %s55, %s56
      %p67 = scmp.eq.s32.totalorder %s33, 0
      %p68 = por %p66, %p67
      %p69 = scmp.ne.s32.totalorder %s55, %s56
      %p70 = scmp.eq.s32.totalorder %s34, 3
      %p71 = por %p69, %p70
      %p73 = scmp.ne.s32.totalorder %s56, %s72
      %p74 = scmp.eq.s32.totalorder %s34, 0
      %p75 = por %p73, %p74
      %s76 = ssub.s32 %s35, %s47
      %p77 = scmp.eq.s32.totalorder %s76, 0
      %s79 = sadd.s32 %s78, 1
      %s80 = scalar_select %p77, %s78, %s79
      %p83 = pneg %p77
      %p84 = scmp.eq.s32.totalorder %s28, 3
      %p85 = por %p83, %p84
      %p86 = scmp.ne.s32.totalorder %s78, %s81
      %p87 = scmp.eq.s32.totalorder %s28, 0
      %p88 = por %p86, %p87
      %p89 = scmp.ne.s32.totalorder %s78, %s81
      %p90 = scmp.eq.s32.totalorder %s33, 3
      %p91 = por %p89, %p90
      %p92 = scmp.ne.s32.totalorder %s81, %s82
      %p93 = scmp.eq.s32.totalorder %s33, 0
      %p94 = por %p92, %p93
      %p95 = scmp.ne.s32.totalorder %s81, %s82
      %p96 = scmp.eq.s32.totalorder %s34, 3
      %p97 = por %p95, %p96
      %p99 = scmp.ne.s32.totalorder %s82, %s98
      %p100 = scmp.eq.s32.totalorder %s34, 0
      %p101 = por %p99, %p100
      %s102 = ssub.s32 %s35, %s47
      %p103 = scmp.eq.s32.totalorder %s102, 0
      %s105 = sadd.s32 %s104, 1
      %s106 = scalar_select %p103, %s104, %s105
      %p109 = pneg %p103
      %p110 = scmp.eq.s32.totalorder %s28, 3
      %p111 = por %p109, %p110
      %p112 = scmp.ne.s32.totalorder %s104, %s107
      %p113 = scmp.eq.s32.totalorder %s28, 0
      %p114 = por %p112, %p113
      %p115 = scmp.ne.s32.totalorder %s104, %s107
      %p116 = scmp.eq.s32.totalorder %s33, 3
      %p117 = por %p115, %p116
      %p118 = scmp.ne.s32.totalorder %s107, %s108
      %p119 = scmp.eq.s32.totalorder %s33, 0
      %p120 = por %p118, %p119
      %p121 = scmp.ne.s32.totalorder %s107, %s108
      %p122 = scmp.eq.s32.totalorder %s34, 3
      %p123 = por %p121, %p122
      %p125 = scmp.ne.s32.totalorder %s108, %s124
      %p126 = scmp.eq.s32.totalorder %s34, 0
      %p127 = por %p125, %p126
      %s129 = sadd.s32 %s128, 1
      %p132 = scmp.eq.s32.totalorder %s28, 3
      %p133 = scmp.ne.s32.totalorder %s128, %s130
      %p134 = scmp.eq.s32.totalorder %s28, 0
      %p135 = por %p133, %p134
      %p136 = scmp.ne.s32.totalorder %s128, %s130
      %p137 = scmp.eq.s32.totalorder %s33, 3
      %p138 = por %p136, %p137
      %p139 = scmp.ne.s32.totalorder %s130, %s131
      %p140 = scmp.eq.s32.totalorder %s33, 0
      %p141 = por %p139, %p140
      %p142 = scmp.ne.s32.totalorder %s130, %s131
      %p143 = scmp.eq.s32.totalorder %s34, 3
      %p144 = por %p142, %p143
      %p146 = scmp.ne.s32.totalorder %s131, %s145
      %p147 = scmp.eq.s32.totalorder %s34, 0
      %p148 = por %p146, %p147
      %s150 = sadd.s32 %s149, 1
      %p153 = scmp.eq.s32.totalorder %s28, 3
      %p154 = scmp.ne.s32.totalorder %s149, %s151
      %p155 = scmp.eq.s32.totalorder %s28, 0
      %p156 = por %p154, %p155
      %p157 = scmp.ne.s32.totalorder %s149, %s151
      %p158 = scmp.eq.s32.totalorder %s33, 3
      %p159 = por %p157, %p158
      %p160 = scmp.ne.s32.totalorder %s151, %s152
      %p161 = scmp.eq.s32.totalorder %s33, 0
      %p162 = por %p160, %p161
      %p163 = scmp.ne.s32.totalorder %s151, %s152
      %p164 = scmp.eq.s32.totalorder %s34, 3
      %p165 = por %p163, %p164
      %p167 = scmp.ne.s32.totalorder %s152, %s166
      %p168 = scmp.eq.s32.totalorder %s34, 0
      %p169 = por %p167, %p168
      %s171 = sadd.s32 %s170, 1
      %p174 = scmp.eq.s32.totalorder %s28, 3
      %p175 = scmp.ne.s32.totalorder %s170, %s172
      %p176 = scmp.eq.s32.totalorder %s28, 0
      %p177 = por %p175, %p176
      %p178 = scmp.ne.s32.totalorder %s170, %s172
      %p179 = scmp.eq.s32.totalorder %s33, 3
      %p180 = por %p178, %p179
      %p181 = scmp.ne.s32.totalorder %s172, %s173
      %p182 = scmp.eq.s32.totalorder %s33, 0
      %p183 = por %p181, %p182
      %p184 = scmp.ne.s32.totalorder %s172, %s173
      %p185 = scmp.eq.s32.totalorder %s34, 3
      %p186 = por %p184, %p185
      %p188 = scmp.ne.s32.totalorder %s173, %s187
      %p189 = scmp.eq.s32.totalorder %s34, 0
      %p190 = por %p188, %p189
      %s192 = sadd.s32 %s191, 1
      %p195 = scmp.eq.s32.totalorder %s28, 3
      %p196 = scmp.ne.s32.totalorder %s191, %s193
      %p197 = scmp.eq.s32.totalorder %s28, 0
      %p198 = por %p196, %p197
      %p199 = scmp.ne.s32.totalorder %s191, %s193
      %p200 = scmp.eq.s32.totalorder %s33, 3
      %p201 = por %p199, %p200
      %p202 = scmp.ne.s32.totalorder %s193, %s194
      %p203 = scmp.eq.s32.totalorder %s33, 0
      %p204 = por %p202, %p203
      %p205 = scmp.ne.s32.totalorder %s193, %s194
      %p206 = scmp.eq.s32.totalorder %s34, 3
      %p207 = por %p205, %p206
      %p209 = scmp.ne.s32.totalorder %s194, %s208
      %p210 = scmp.eq.s32.totalorder %s34, 0
      %p211 = por %p209, %p210
      %s213 = sadd.s32 %s212, 1
      %p216 = scmp.eq.s32.totalorder %s28, 3
      %p217 = scmp.ne.s32.totalorder %s212, %s214
      %p218 = scmp.eq.s32.totalorder %s28, 0
      %p219 = por %p217, %p218
      %p220 = scmp.ne.s32.totalorder %s212, %s214
      %p221 = scmp.eq.s32.totalorder %s33, 3
      %p222 = por %p220, %p221
      %p223 = scmp.ne.s32.totalorder %s214, %s215
      %p224 = scmp.eq.s32.totalorder %s33, 0
      %p225 = por %p223, %p224
      %p226 = scmp.ne.s32.totalorder %s214, %s215
      %p227 = scmp.eq.s32.totalorder %s34, 3
      %p228 = por %p226, %p227
      %p230 = scmp.ne.s32.totalorder %s215, %s229
      %p231 = scmp.eq.s32.totalorder %s34, 0
      %p232 = por %p230, %p231
      %s234 = sadd.s32 %s233, 1
      %p237 = scmp.eq.s32.totalorder %s28, 3
      %p238 = scmp.ne.s32.totalorder %s233, %s235
      %p239 = scmp.eq.s32.totalorder %s28, 0
      %p240 = por %p238, %p239
      %p241 = scmp.ne.s32.totalorder %s233, %s235
      %p242 = scmp.eq.s32.totalorder %s33, 3
      %p243 = por %p241, %p242
      %p244 = scmp.ne.s32.totalorder %s235, %s236
      %p245 = scmp.eq.s32.totalorder %s33, 0
      %p246 = por %p244, %p245
      %p247 = scmp.ne.s32.totalorder %s235, %s236
      %p248 = scmp.eq.s32.totalorder %s34, 3
      %p249 = por %p247, %p248
      %p251 = scmp.ne.s32.totalorder %s236, %s250
      %p252 = scmp.eq.s32.totalorder %s34, 0
      %p253 = por %p251, %p252
      %s255 = sadd.s32 %s254, 1
      %p258 = scmp.eq.s32.totalorder %s28, 3
      %p259 = scmp.ne.s32.totalorder %s254, %s256
      %p260 = scmp.eq.s32.totalorder %s28, 0
      %p261 = por %p259, %p260
      %p262 = scmp.ne.s32.totalorder %s254, %s256
      %p263 = scmp.eq.s32.totalorder %s33, 3
      %p264 = por %p262, %p263
      %p265 = scmp.ne.s32.totalorder %s256, %s257
      %p266 = scmp.eq.s32.totalorder %s33, 0
      %p267 = por %p265, %p266
      %p268 = scmp.ne.s32.totalorder %s256, %s257
      %p269 = scmp.eq.s32.totalorder %s34, 3
      %p270 = por %p268, %p269
      %p272 = scmp.ne.s32.totalorder %s257, %s271
      %p273 = scmp.eq.s32.totalorder %s34, 0
      %p274 = por %p272, %p273
      %s276 = sadd.s32 %s275, 1
      %p279 = scmp.eq.s32.totalorder %s28, 3
      %p280 = scmp.ne.s32.totalorder %s275, %s277
      %p281 = scmp.eq.s32.totalorder %s28, 0
      %p282 = por %p280, %p281
      %p283 = scmp.ne.s32.totalorder %s275, %s277
      %p284 = scmp.eq.s32.totalorder %s33, 3
      %p285 = por %p283, %p284
      %p286 = scmp.ne.s32.totalorder %s277, %s278
      %p287 = scmp.eq.s32.totalorder %s33, 0
      %p288 = por %p286, %p287
      %p289 = scmp.ne.s32.totalorder %s277, %s278
      %p290 = scmp.eq.s32.totalorder %s34, 3
      %p291 = por %p289, %p290
      %p293 = scmp.ne.s32.totalorder %s278, %s292
      %p294 = scmp.eq.s32.totalorder %s34, 0
      %p295 = por %p293, %p294
      %s297 = sadd.s32 %s296, 1
      %p300 = scmp.eq.s32.totalorder %s28, 3
      %p301 = scmp.ne.s32.totalorder %s296, %s298
      %p302 = scmp.eq.s32.totalorder %s28, 0
      %p303 = por %p301, %p302
      %p304 = scmp.ne.s32.totalorder %s296, %s298
      %p305 = scmp.eq.s32.totalorder %s33, 3
      %p306 = por %p304, %p305
      %p307 = scmp.ne.s32.totalorder %s298, %s299
      %p308 = scmp.eq.s32.totalorder %s33, 0
      %p309 = por %p307, %p308
      %p310 = scmp.ne.s32.totalorder %s298, %s299
      %p311 = scmp.eq.s32.totalorder %s34, 3
      %p312 = por %p310, %p311
      %p314 = scmp.ne.s32.totalorder %s299, %s313
      %p315 = scmp.eq.s32.totalorder %s34, 0
      %p316 = por %p314, %p315
      %s318 = sadd.s32 %s317, 1
      %p321 = scmp.eq.s32.totalorder %s28, 3
      %p322 = scmp.ne.s32.totalorder %s317, %s319
      %p323 = scmp.eq.s32.totalorder %s28, 0
      %p324 = por %p322, %p323
      %p325 = scmp.ne.s32.totalorder %s317, %s319
      %p326 = scmp.eq.s32.totalorder %s33, 3
      %p327 = por %p325, %p326
      %p328 = scmp.ne.s32.totalorder %s319, %s320
      %p329 = scmp.eq.s32.totalorder %s33, 0
      %p330 = por %p328, %p329
      %p331 = scmp.ne.s32.totalorder %s319, %s320
      %p332 = scmp.eq.s32.totalorder %s34, 3
      %p333 = por %p331, %p332
      %p335 = scmp.ne.s32.totalorder %s320, %s334
      %p336 = scmp.eq.s32.totalorder %s34, 0
      %p337 = por %p335, %p336
      %s339 = sadd.s32 %s338, 1
      %p342 = scmp.eq.s32.totalorder %s28, 3
      %p343 = scmp.ne.s32.totalorder %s338, %s340
      %p344 = scmp.eq.s32.totalorder %s28, 0
      %p345 = por %p343, %p344
      %p346 = scmp.ne.s32.totalorder %s338, %s340
      %p347 = scmp.eq.s32.totalorder %s33, 3
      %p348 = por %p346, %p347
      %p349 = scmp.ne.s32.totalorder %s340, %s341
      %p350 = scmp.eq.s32.totalorder %s33, 0
      %p351 = por %p349, %p350
      %p352 = scmp.ne.s32.totalorder %s340, %s341
      %p353 = scmp.eq.s32.totalorder %s34, 3
      %p354 = por %p352, %p353
      %p356 = scmp.ne.s32.totalorder %s341, %s355
      %p357 = scmp.eq.s32.totalorder %s34, 0
      %p358 = por %p356, %p357
      %s360 = sadd.s32 %s359, 1
      %p363 = scmp.eq.s32.totalorder %s28, 3
      %p364 = scmp.ne.s32.totalorder %s359, %s361
      %p365 = scmp.eq.s32.totalorder %s28, 0
      %p366 = por %p364, %p365
      %p367 = scmp.ne.s32.totalorder %s359, %s361
      %p368 = scmp.eq.s32.totalorder %s33, 3
      %p369 = por %p367, %p368
      %p370 = scmp.ne.s32.totalorder %s361, %s362
      %p371 = scmp.eq.s32.totalorder %s33, 0
      %p372 = por %p370, %p371
      %p373 = scmp.ne.s32.totalorder %s361, %s362
      %p374 = scmp.eq.s32.totalorder %s34, 3
      %p375 = por %p373, %p374
      %p377 = scmp.ne.s32.totalorder %s362, %s376
      %p378 = scmp.eq.s32.totalorder %s34, 0
      %p379 = por %p377, %p378
      %s381 = sadd.s32 %s380, 1
      %p384 = scmp.eq.s32.totalorder %s28, 3
      %p385 = scmp.ne.s32.totalorder %s380, %s382
      %p386 = scmp.eq.s32.totalorder %s28, 0
      %p387 = por %p385, %p386
      %p388 = scmp.ne.s32.totalorder %s380, %s382
      %p389 = scmp.eq.s32.totalorder %s33, 3
      %p390 = por %p388, %p389
      %p391 = scmp.ne.s32.totalorder %s382, %s383
      %p392 = scmp.eq.s32.totalorder %s33, 0
      %p393 = por %p391, %p392
      %p394 = scmp.ne.s32.totalorder %s382, %s383
      %p395 = scmp.eq.s32.totalorder %s34, 3
      %p396 = por %p394, %p395
      %p398 = scmp.ne.s32.totalorder %s383, %s397
      %p399 = scmp.eq.s32.totalorder %s34, 0
      %p400 = por %p398, %p399
      %s401 = ssub.s32 %s35, %s47
      %s402 = ssub.s32 %s36, %s43
      %s403 = sor.u32 %s401, %s402
      %p404 = scmp.eq.s32.totalorder %s403, 0
      %s406 = sadd.s32 %s405, 1
      %s407 = scalar_select %p404, %s405, %s406
      %p410 = pneg %p404
      %p411 = scmp.eq.s32.totalorder %s28, 3
      %p412 = por %p410, %p411
      %p413 = scmp.ne.s32.totalorder %s405, %s408
      %p414 = scmp.eq.s32.totalorder %s28, 0
      %p415 = por %p413, %p414
      %p416 = scmp.ne.s32.totalorder %s405, %s408
      %p417 = scmp.eq.s32.totalorder %s33, 3
      %p418 = por %p416, %p417
      %p419 = scmp.ne.s32.totalorder %s408, %s409
      %p420 = scmp.eq.s32.totalorder %s33, 0
      %p421 = por %p419, %p420
      %p422 = scmp.ne.s32.totalorder %s408, %s409
      %p423 = scmp.eq.s32.totalorder %s34, 3
      %p424 = por %p422, %p423
      %p426 = scmp.ne.s32.totalorder %s409, %s425
      %p427 = scmp.eq.s32.totalorder %s34, 0
      %p428 = por %p426, %p427
      %p429 = scmp.le.s32.totalorder 1, %s28
      %p430 = scmp.lt.s32.totalorder %s28, 5
      %p431 = pnand %p429, %p430
      %p432 = pneg %p431
      // Predicated region
      $region9: #{tpu_custom_call.1} parent=5 // pred_check
        _
      $region10: #{tpu_custom_call.1} parent=5 // pred_check_branch
        %434 = sbr.rel (%p431) target = $region12
      $region11: #{tpu_custom_call.1} parent=5 // pred_region
        %s435 = ssub.s32 %s28, 1
        // Predicated region
        $region13: #{tpu_custom_call.1} parent=11 // pred_check
          %p436 = pneg %p141
        $region14: #{tpu_custom_call.1} parent=11 // pred_check_branch
          %438 = sbr.rel (%p436) target = $region16
        $region15: #{tpu_custom_call.1} parent=11 // pred_region
          _
        $region16: #{tpu_custom_call.1} parent=11 // pred_fallthru
          _
        // Predicated region
        $region17: #{tpu_custom_call.1} parent=11 // pred_check
          %p439 = pneg %p162
        $region18: #{tpu_custom_call.1} parent=11 // pred_check_branch
          %441 = sbr.rel (%p439) target = $region20
        $region19: #{tpu_custom_call.1} parent=11 // pred_region
          %s443 = ssub.s32 256, 256
          %444 = vsyncadd [#allocation5], %s443
          %s445 = sshll.u32 [#allocation4], 4
          %s446 = int_to_ptr.vmem [resolvable:$true] %s445
          %451 = dma.hbm_to_vmem [thread:$0]  %s4, 256, %s446, [#allocation5], 64, 64, 4
        $region20: #{tpu_custom_call.1} parent=11 // pred_fallthru
          _
        // Predicated region
        $region21: #{tpu_custom_call.1} parent=11 // pred_check
          %p452 = pneg %p183
        $region22: #{tpu_custom_call.1} parent=11 // pred_check_branch
          %454 = sbr.rel (%p452) target = $region24
        $region23: #{tpu_custom_call.1} parent=11 // pred_region
          %s456 = ssub.s32 256, 256
          %457 = vsyncadd [#allocation8], %s456
          %s458 = sshll.u32 [#allocation7], 4
          %s459 = int_to_ptr.vmem [resolvable:$true] %s458
          %464 = dma.hbm_to_vmem [thread:$0]  %s5, 256, %s459, [#allocation8], 64, 64, 4
        $region24: #{tpu_custom_call.1} parent=11 // pred_fallthru
          _
        // Predicated region
        $region25: #{tpu_custom_call.1} parent=11 // pred_check
          %p465 = pneg %p204
        $region26: #{tpu_custom_call.1} parent=11 // pred_check_branch
          %467 = sbr.rel (%p465) target = $region28
        $region27: #{tpu_custom_call.1} parent=11 // pred_region
          %s469 = ssub.s32 256, 256
          %470 = vsyncadd [#allocation8], %s469
          %s471 = sshll.u32 [#allocation9], 4
          %s472 = int_to_ptr.vmem [resolvable:$true] %s471
          %477 = dma.hbm_to_vmem [thread:$0]  %s6, 256, %s472, [#allocation8], 64, 64, 4
        $region28: #{tpu_custom_call.1} parent=11 // pred_fallthru
          _
        // Predicated region
        $region29: #{tpu_custom_call.1} parent=11 // pred_check
          %p478 = pneg %p225
        $region30: #{tpu_custom_call.1} parent=11 // pred_check_branch
          %480 = sbr.rel (%p478) target = $region32
        $region31: #{tpu_custom_call.1} parent=11 // pred_region
          _
        $region32: #{tpu_custom_call.1} parent=11 // pred_fallthru
          _
        // Predicated region
        $region33: #{tpu_custom_call.1} parent=11 // pred_check
          %p481 = pneg %p246
        $region34: #{tpu_custom_call.1} parent=11 // pred_check_branch
          %483 = sbr.rel (%p481) target = $region36
        $region35: #{tpu_custom_call.1} parent=11 // pred_region
          _
        $region36: #{tpu_custom_call.1} parent=11 // pred_fallthru
          _
        // Predicated region
        $region37: #{tpu_custom_call.1} parent=11 // pred_check
          %p484 = pneg %p267
        $region38: #{tpu_custom_call.1} parent=11 // pred_check_branch
          %486 = sbr.rel (%p484) target = $region40
        $region39: #{tpu_custom_call.1} parent=11 // pred_region
          _
        $region40: #{tpu_custom_call.1} parent=11 // pred_fallthru
          _
        // Predicated region
        $region41: #{tpu_custom_call.1} parent=11 // pred_check
          %p487 = pneg %p288
        $region42: #{tpu_custom_call.1} parent=11 // pred_check_branch
          %489 = sbr.rel (%p487) target = $region44
        $region43: #{tpu_custom_call.1} parent=11 // pred_region
          _
        $region44: #{tpu_custom_call.1} parent=11 // pred_fallthru
          _
        // Predicated region
        $region45: #{tpu_custom_call.1} parent=11 // pred_check
          %p490 = pneg %p309
        $region46: #{tpu_custom_call.1} parent=11 // pred_check_branch
          %492 = sbr.rel (%p490) target = $region48
        $region47: #{tpu_custom_call.1} parent=11 // pred_region
          _
        $region48: #{tpu_custom_call.1} parent=11 // pred_fallthru
          _
        // Predicated region
        $region49: #{tpu_custom_call.1} parent=11 // pred_check
          %p493 = pneg %p330
        $region50: #{tpu_custom_call.1} parent=11 // pred_check_branch
          %495 = sbr.rel (%p493) target = $region52
        $region51: #{tpu_custom_call.1} parent=11 // pred_region
          %s497 = ssub.s32 256, 256
          %498 = vsyncadd [#allocation11], %s497
          %s499 = sshll.u32 [#allocation10], 4
          %s500 = int_to_ptr.vmem [resolvable:$true] %s499
          %505 = dma.hbm_to_vmem [thread:$0]  %s12, 256, %s500, [#allocation11], 64, 64, 4
        $region52: #{tpu_custom_call.1} parent=11 // pred_fallthru
          _
        // Predicated region
        $region53: #{tpu_custom_call.1} parent=11 // pred_check
          %p506 = pneg %p351
        $region54: #{tpu_custom_call.1} parent=11 // pred_check_branch
          %508 = sbr.rel (%p506) target = $region56
        $region55: #{tpu_custom_call.1} parent=11 // pred_region
          _
        $region56: #{tpu_custom_call.1} parent=11 // pred_fallthru
          _
        // Predicated region
        $region57: #{tpu_custom_call.1} parent=11 // pred_check
          %p509 = pneg %p372
        $region58: #{tpu_custom_call.1} parent=11 // pred_check_branch
          %511 = sbr.rel (%p509) target = $region60
        $region59: #{tpu_custom_call.1} parent=11 // pred_region
          _
        $region60: #{tpu_custom_call.1} parent=11 // pred_fallthru
          _
        // Predicated region
        $region61: #{tpu_custom_call.1} parent=11 // pred_check
          %p512 = pneg %p393
        $region62: #{tpu_custom_call.1} parent=11 // pred_check_branch
          %514 = sbr.rel (%p512) target = $region64
        $region63: #{tpu_custom_call.1} parent=11 // pred_region
          _
        $region64: #{tpu_custom_call.1} parent=11 // pred_fallthru
          _
      $region12: #{tpu_custom_call.1} parent=5 // pred_fallthru
        _
      %p515 = scmp.lt.s32.totalorder %s28, 4
      // Predicated region
      $region65: #{tpu_custom_call.1} parent=5 // pred_check
        %p516 = pneg %p515
      $region66: #{tpu_custom_call.1} parent=5 // pred_check_branch
        %518 = sbr.rel (%p516) target = $region68
      $region67: #{tpu_custom_call.1} parent=5 // pred_region
        // Predicated region
        $region69: #{tpu_custom_call.1} parent=67 // pred_check
          %p519 = pneg %p62
        $region70: #{tpu_custom_call.1} parent=67 // pred_check_branch
          %521 = sbr.rel (%p519) target = $region72
        $region71: #{tpu_custom_call.1} parent=67 // pred_region
          %p522 = scmp.lt.s32.totalorder %s35, 1
          %s523 = scalar_select %p522, %s35, 1
          %p524 = scmp.lt.s32.totalorder %s36, 1
          %s525 = scalar_select %p524, %s36, 1
          %s526 = smul.addr %s523, 2
          %s527 = sadd.s32 %s525, %s526
          %s528 = smul.addr %s527, 8
          %s529 = scalar_lea.vmem %s0, %s528
        $region72: #{tpu_custom_call.1} parent=67 // pred_fallthru
          _
        // Predicated region
        $region73: #{tpu_custom_call.1} parent=67 // pred_check
          %p530 = pneg %p88
        $region74: #{tpu_custom_call.1} parent=67 // pred_check_branch
          %532 = sbr.rel (%p530) target = $region76
        $region75: #{tpu_custom_call.1} parent=67 // pred_region
          %p533 = scmp.lt.s32.totalorder %s35, 1
          %s534 = scalar_select %p533, %s35, 1
          %s535 = smul.addr %s534, 2
          %s536 = smul.addr %s535, 4
          %s537 = scalar_lea.vmem %s1, %s536
        $region76: #{tpu_custom_call.1} parent=67 // pred_fallthru
          _
        // Predicated region
        $region77: #{tpu_custom_call.1} parent=67 // pred_check
          %p538 = pneg %p114
        $region78: #{tpu_custom_call.1} parent=67 // pred_check_branch
          %540 = sbr.rel (%p538) target = $region80
        $region79: #{tpu_custom_call.1} parent=67 // pred_region
          %p541 = scmp.lt.s32.totalorder %s35, 1
          %s542 = scalar_select %p541, %s35, 1
          %s543 = smul.addr %s542, 2
          %s544 = smul.addr %s543, 4
          %s545 = scalar_lea.vmem %s2, %s544
        $region80: #{tpu_custom_call.1} parent=67 // pred_fallthru
          _
      $region68: #{tpu_custom_call.1} parent=5 // pred_fallthru
        _
      %p546 = scmp.le.s32.totalorder 1, %s28
      %p547 = scmp.lt.s32.totalorder %s28, 5
      %p548 = pnand %p546, %p547
      %p549 = pneg %p548
      // Predicated region
      $region81: #{tpu_custom_call.1} parent=5 // pred_check
        _
      $region82: #{tpu_custom_call.1} parent=5 // pred_check_branch
        %551 = sbr.rel (%p548) target = $region84
      $region83: #{tpu_custom_call.1} parent=5 // pred_region
        %s552 = ssub.s32 %s28, 1
        // Predicated region
        $region85: #{tpu_custom_call.1} parent=83 // pred_check
          %p553 = pneg %p162
        $region86: #{tpu_custom_call.1} parent=83 // pred_check_branch
          %555 = sbr.rel (%p553) target = $region88
        $region87: #{tpu_custom_call.1} parent=83 // pred_region
          %556 = dma.done [#allocation5], 256
        $region88: #{tpu_custom_call.1} parent=83 // pred_fallthru
          _
        // Predicated region
        $region89: #{tpu_custom_call.1} parent=83 // pred_check
          %p557 = pneg %p183
        $region90: #{tpu_custom_call.1} parent=83 // pred_check_branch
          %559 = sbr.rel (%p557) target = $region92
        $region91: #{tpu_custom_call.1} parent=83 // pred_region
          %560 = dma.done [#allocation8], 256
        $region92: #{tpu_custom_call.1} parent=83 // pred_fallthru
          _
        // Predicated region
        $region93: #{tpu_custom_call.1} parent=83 // pred_check
          %p561 = pneg %p204
        $region94: #{tpu_custom_call.1} parent=83 // pred_check_branch
          %563 = sbr.rel (%p561) target = $region96
        $region95: #{tpu_custom_call.1} parent=83 // pred_region
          %564 = dma.done [#allocation8], 256
        $region96: #{tpu_custom_call.1} parent=83 // pred_fallthru
          _
        // Predicated region
        $region97: #{tpu_custom_call.1} parent=83 // pred_check
          %p565 = pneg %p330
        $region98: #{tpu_custom_call.1} parent=83 // pred_check_branch
          %567 = sbr.rel (%p565) target = $region100
        $region99: #{tpu_custom_call.1} parent=83 // pred_region
          %568 = dma.done [#allocation11], 256
        $region100: #{tpu_custom_call.1} parent=83 // pred_fallthru
          _
        %p569 = scmp.lt.s32.totalorder %s37, 1
        %s570 = scalar_select %p569, %s37, 1
        %p571 = scmp.lt.s32.totalorder %s38, 1
        %s572 = scalar_select %p571, %s38, 1
        %s573 = smul.addr %s570, 2
        %s574 = sadd.s32 %s572, %s573
        %s575 = smul.addr %s574, 8
        %s576 = scalar_lea.vmem %s0, %s575
        %p577 = pneg %p68
        %p578 = pneg %p65
        %p579 = scmp.lt.s32.totalorder %s37, 1
        %s580 = scalar_select %p579, %s37, 1
        %s581 = smul.addr %s580, 2
        %s582 = smul.addr %s581, 4
        %s583 = scalar_lea.vmem %s1, %s582
        %p584 = pneg %p94
        %p585 = pneg %p91
        %p586 = scmp.lt.s32.totalorder %s37, 1
        %s587 = scalar_select %p586, %s37, 1
        %s588 = smul.addr %s587, 2
        %s589 = smul.addr %s588, 4
        %s590 = scalar_lea.vmem %s2, %s589
        %p591 = pneg %p120
        %p592 = pneg %p117
        %p593 = pneg %p141
        %p594 = pneg %p138
        %p595 = pneg %p162
        %p596 = pneg %p159
        %p597 = pneg %p183
        %p598 = pneg %p180
        %p599 = pneg %p204
        %p600 = pneg %p201
        %p601 = pneg %p225
        %p602 = pneg %p222
        %p603 = pneg %p246
        %p604 = pneg %p243
        %p605 = pneg %p267
        %p606 = pneg %p264
        %p607 = pneg %p288
        %p608 = pneg %p285
        %p609 = pneg %p309
        %p610 = pneg %p306
        %p611 = pneg %p330
        %p612 = pneg %p327
        %p613 = pneg %p351
        %p614 = pneg %p348
        %p615 = pneg %p372
        %p616 = pneg %p369
        %p617 = pneg %p393
        %p618 = pneg %p390
        %p619 = pneg %p421
        %p620 = pneg %p418
        %s621 = sand.u32 %s408, 1
        %s622 = scalar_lea.sflag [#allocation6], %s621
        %s623 = sand.u32 %s408, 1
        %s624 = smul.addr %s623, 4
        %s625 = scalar_lea.vmem [#allocation12], %s624
        %p626 = scmp.lt.s32.totalorder %s37, 1
        %s627 = scalar_select %p626, %s37, 1
        %p628 = scmp.lt.s32.totalorder %s38, 1
        %s629 = scalar_select %p628, %s38, 1
        %s630 = smul.addr %s627, 2
        %s631 = sadd.s32 %s629, %s630
        %s632 = smul.addr %s631, 8
        %s633 = scalar_lea.vmem %s0, %s632
        %p634 = scmp.lt.s32.totalorder %s37, 1
        %s635 = scalar_select %p634, %s37, 1
        %s636 = smul.addr %s635, 2
        %s637 = smul.addr %s636, 4
        %s638 = scalar_lea.vmem %s1, %s637
        %p639 = scmp.lt.s32.totalorder %s37, 1
        %s640 = scalar_select %p639, %s37, 1
        %s641 = smul.addr %s640, 2
        %s642 = smul.addr %s641, 4
        %s643 = scalar_lea.vmem %s2, %s642
        %v645 = vld [vmem:[%s633] sm:$0xff]
        %p646 = scmp.eq.s32.totalorder %s38, 0
        // Predicated region
        $region101: #{tpu_custom_call.1} parent=83 // pred_check
          %p647 = pneg %p646
        $region102: #{tpu_custom_call.1} parent=83 // pred_check_branch
          %649 = sbr.rel (%p647) target = $region104
        $region103: #{tpu_custom_call.1} parent=83 // pred_region
          %v650 = vld [vmem:[%s638] sm:$0xf]
          %v651 = vld [vmem:[%s638 + $0x4] sm:$0xf]
          %v652 = vld [vmem:[#allocation4] sm:$0xf]
          %v653 = vld [vmem:[#allocation4 + $0x4] sm:$0xf]
          %v654 = vld [vmem:[#allocation4 + $0x8] sm:$0xf]
          %v655 = vld [vmem:[#allocation4 + $0xc] sm:$0xf]
          %v658 = vunpack.c.l.b16 %v650
          %v659 = vunpack.c.l.b16 %v651
          %v660 = vpack.c.b16 %v659, %v658
          %v665 = vunpack.c.l.b16 %v652
          %v666 = vunpack.c.l.b16 %v653
          %v667 = vunpack.c.l.b16 %v654
          %v668 = vunpack.c.l.b16 %v655
          %v669 = vpack.c.b16 %v666, %v665
          %v670 = vpack.c.b16 %v668, %v667
          %vm673 = vcmask 261120
          %v675 = vsel %vm673, %v660, 0
          %677 = vmatprep.subr.bf16.mxu0 0
          %678 = vmatpush1.bf16.msra.mxu0 0
          %679 = vmatprep.subr.bf16.mxu0 0
          %680 = vmatpush1.bf16.msra.mxu0 0
          %681 = vmatprep.subr.bf16.mxu0 0
          %682 = vmatpush1.bf16.msra.mxu0 0
          %683 = vmatprep.subr.bf16.mxu0 0
          %684 = vmatpush1.bf16.msra.mxu0 0
          %685 = vmatprep.subr.bf16.mxu0 0
          %686 = vmatpush1.bf16.msra.mxu0 0
          %687 = vmatprep.subr.bf16.mxu0 0
          %688 = vmatpush1.bf16.msra.mxu0 0
          %689 = vmatprep.subr.bf16.mxu0 0
          %690 = vmatpush1.bf16.msra.mxu0 %v670
          %691 = vmatprep.subr.bf16.mxu0 0
          %692 = vmatpush1.bf16.msra.mxu0 %v669
          %693 = vmatprep.subr.bf16.mxu0 0
          %694 = vmatpush2.bf16.msra.mxu0 0
          %695 = vmatprep.subr.bf16.mxu0 0
          %696 = vmatpush2.bf16.msra.mxu0 0
          %697 = vmatprep.subr.bf16.mxu0 0
          %698 = vmatpush2.bf16.msra.mxu0 0
          %699 = vmatprep.subr.bf16.mxu0 0
          %700 = vmatpush2.bf16.msra.mxu0 0
          %701 = vmatprep.subr.bf16.mxu0 0
          %702 = vmatpush2.bf16.msra.mxu0 0
          %703 = vmatprep.subr.bf16.mxu0 0
          %704 = vmatpush2.bf16.msra.mxu0 0
          %705 = vmatprep.subr.bf16.mxu0 0
          %706 = vmatpush2.bf16.msra.mxu0 0
          %707 = vmatprep.subr.bf16.mxu0 0
          %708 = vmatpush2.bf16.msra.mxu0 0
          %709 = vmatprep.mubr.bf16.mxu0 0
          %710 = vmatmul.mubr.bf16.gmra.mxu0 %v675
          %v711 = vpop.f32.mrf.mxu0
          %v712 = vadd.f32 0.0, %v711
          %v713 = vpop.f32.mrf.mxu0
          %v714 = vpop.f32.mrf.mxu0
          %v715 = vadd.f32 0.0, %v714
          %v716 = vpop.f32.mrf.mxu0
          %717 = vdwg.mxu0
          %v718 = vpack.c.bf16 %v715, %v712
          %v720 = vunpack.c.l.b16 %v718
          %v721 = vunpack.c.h.b16 %v718
          %v722 = vpack.c.b16 %v720, %v720
          %v723 = vpack.c.b16 %v721, %v721
          %vm726 = vcmask 257024
          %727 = vst.msk [vmem:[#allocation2] sm:$0xf] %vm726, %v722
          %728 = vst.msk [vmem:[#allocation2 + $0x4] sm:$0xf] %vm726, %v723
          %v729 = vld [vmem:[%s643] sm:$0xf]
          %v730 = vld [vmem:[%s643 + $0x4] sm:$0xf]
          %v731 = vld [vmem:[#allocation7] sm:$0xf]
          %v732 = vld [vmem:[#allocation7 + $0x4] sm:$0xf]
          %v733 = vld [vmem:[#allocation7 + $0x8] sm:$0xf]
          %v734 = vld [vmem:[#allocation7 + $0xc] sm:$0xf]
          %v737 = vunpack.c.l.b16 %v729
          %v738 = vunpack.c.l.b16 %v730
          %v739 = vpack.c.b16 %v738, %v737
          %v744 = vunpack.c.l.b16 %v731
          %v745 = vunpack.c.l.b16 %v732
          %v746 = vunpack.c.l.b16 %v733
          %v747 = vunpack.c.l.b16 %v734
          %v748 = vpack.c.b16 %v745, %v744
          %v749 = vpack.c.b16 %v747, %v746
          %v753 = vsel %vm673, %v739, 0
          %755 = vmatprep.subr.bf16.mxu0 0
          %756 = vmatpush1.bf16.msra.mxu0 0
          %757 = vmatprep.subr.bf16.mxu0 0
          %758 = vmatpush1.bf16.msra.mxu0 0
          %759 = vmatprep.subr.bf16.mxu0 0
          %760 = vmatpush1.bf16.msra.mxu0 0
          %761 = vmatprep.subr.bf16.mxu0 0
          %762 = vmatpush1.bf16.msra.mxu0 0
          %763 = vmatprep.subr.bf16.mxu0 0
          %764 = vmatpush1.bf16.msra.mxu0 0
          %765 = vmatprep.subr.bf16.mxu0 0
          %766 = vmatpush1.bf16.msra.mxu0 0
          %767 = vmatprep.subr.bf16.mxu0 0
          %768 = vmatpush1.bf16.msra.mxu0 %v749
          %769 = vmatprep.subr.bf16.mxu0 0
          %770 = vmatpush1.bf16.msra.mxu0 %v748
          %771 = vmatprep.subr.bf16.mxu0 0
          %772 = vmatpush2.bf16.msra.mxu0 0
          %773 = vmatprep.subr.bf16.mxu0 0
          %774 = vmatpush2.bf16.msra.mxu0 0
          %775 = vmatprep.subr.bf16.mxu0 0
          %776 = vmatpush2.bf16.msra.mxu0 0
          %777 = vmatprep.subr.bf16.mxu0 0
          %778 = vmatpush2.bf16.msra.mxu0 0
          %779 = vmatprep.subr.bf16.mxu0 0
          %780 = vmatpush2.bf16.msra.mxu0 0
          %781 = vmatprep.subr.bf16.mxu0 0
          %782 = vmatpush2.bf16.msra.mxu0 0
          %783 = vmatprep.subr.bf16.mxu0 0
          %784 = vmatpush2.bf16.msra.mxu0 0
          %785 = vmatprep.subr.bf16.mxu0 0
          %786 = vmatpush2.bf16.msra.mxu0 0
          %787 = vmatprep.mubr.bf16.mxu0 0
          %788 = vmatmul.mubr.bf16.gmra.mxu0 %v753
          %v789 = vpop.f32.mrf.mxu0
          %v790 = vadd.f32 0.0, %v789
          %v791 = vpop.f32.mrf.mxu0
          %v792 = vpop.f32.mrf.mxu0
          %v793 = vadd.f32 0.0, %v792
          %v794 = vpop.f32.mrf.mxu0
          %795 = vdwg.mxu0
          %v796 = vpack.c.bf16 %v793, %v790
          %v798 = vunpack.c.l.b16 %v796
          %v799 = vunpack.c.h.b16 %v796
          %v800 = vpack.c.b16 %v798, %v798
          %v801 = vpack.c.b16 %v799, %v799
          %804 = vst.msk [vmem:[#allocation3] sm:$0xf] %vm726, %v800
          %805 = vst.msk [vmem:[#allocation3 + $0x4] sm:$0xf] %vm726, %v801
        $region104: #{tpu_custom_call.1} parent=83 // pred_fallthru
          _
        %v806 = vpack.c.bf16 %v645, %v645
        %v807 = vld [vmem:[%s3] sm:$0xf]
        %v808 = vld [vmem:[%s3 + $0x4] sm:$0xf]
        %v809 = vld [vmem:[%s3 + $0x8] sm:$0xf]
        %v810 = vld [vmem:[%s3 + $0xc] sm:$0xf]
        %v815 = vunpack.c.l.b16 %v807
        %v816 = vunpack.c.l.b16 %v808
        %v817 = vunpack.c.l.b16 %v809
        %v818 = vunpack.c.l.b16 %v810
        %v819 = vpack.c.b16 %v816, %v815
        %v820 = vpack.c.b16 %v818, %v817
        %vm823 = vcmask 261120
        %v825 = vsel %vm823, %v806, 0
        %827 = vmatprep.subr.bf16.mxu0 0
        %828 = vmatpush1.bf16.msra.mxu0 0
        %829 = vmatprep.subr.bf16.mxu0 0
        %830 = vmatpush1.bf16.msra.mxu0 0
        %831 = vmatprep.subr.bf16.mxu0 0
        %832 = vmatpush1.bf16.msra.mxu0 0
        %833 = vmatprep.subr.bf16.mxu0 0
        %834 = vmatpush1.bf16.msra.mxu0 0
        %835 = vmatprep.subr.bf16.mxu0 0
        %836 = vmatpush1.bf16.msra.mxu0 0
        %837 = vmatprep.subr.bf16.mxu0 0
        %838 = vmatpush1.bf16.msra.mxu0 0
        %839 = vmatprep.subr.bf16.mxu0 0
        %840 = vmatpush1.bf16.msra.mxu0 %v820
        %841 = vmatprep.subr.bf16.mxu0 0
        %842 = vmatpush1.bf16.msra.mxu0 %v819
        %843 = vmatprep.subr.bf16.mxu0 0
        %844 = vmatpush2.bf16.msra.mxu0 0
        %845 = vmatprep.subr.bf16.mxu0 0
        %846 = vmatpush2.bf16.msra.mxu0 0
        %847 = vmatprep.subr.bf16.mxu0 0
        %848 = vmatpush2.bf16.msra.mxu0 0
        %849 = vmatprep.subr.bf16.mxu0 0
        %850 = vmatpush2.bf16.msra.mxu0 0
        %851 = vmatprep.subr.bf16.mxu0 0
        %852 = vmatpush2.bf16.msra.mxu0 0
        %853 = vmatprep.subr.bf16.mxu0 0
        %854 = vmatpush2.bf16.msra.mxu0 0
        %855 = vmatprep.subr.bf16.mxu0 0
        %856 = vmatpush2.bf16.msra.mxu0 0
        %857 = vmatprep.subr.bf16.mxu0 0
        %858 = vmatpush2.bf16.msra.mxu0 0
        %859 = vmatprep.mubr.bf16.mxu0 0
        %860 = vmatmul.mubr.bf16.gmra.mxu0 %v825
        %v861 = vpop.f32.mrf.mxu0
        %v862 = vadd.f32 0.0, %v861
        %v863 = vpop.f32.mrf.mxu0
        %v864 = vpop.f32.mrf.mxu0
        %v865 = vpop.f32.mrf.mxu0
        %866 = vdwg.mxu0
        %868 = vrot.lane.b32.xlu0 %v862, 120
        %v869 = vpop.permute.xlu0 %868
        %871 = vrot.lane.b32.xlu0 %v862, 112
        %v872 = vpop.permute.xlu0 %871
        %874 = vrot.lane.b32.xlu0 %v862, 104
        %v875 = vpop.permute.xlu0 %874
        %v877 = vcombine.low %v862, %v872
        %v878 = vcombine.high %v862, %v872
        %v880 = vunpack.c.l.s4 1983009808
        %v881 = vunpack.c.0.s8 %v880
        %v882 = vlaneseq
        %v883 = vshrl.u32 %v882, 7
        %v884 = vsub.s32 %v881, %v883
        %v885 = vrot.slane %v877, %v884
        %v887 = vunpack.c.l.s4 1983009808
        %v888 = vunpack.c.0.s8 %v887
        %v889 = vlaneseq
        %v890 = vshrl.u32 %v889, 7
        %v891 = vsub.s32 %v888, %v890
        %v892 = vrot.slane %v878, %v891
        %v893 = vcombine.low %v869, %v875
        %v894 = vcombine.high %v869, %v875
        %v896 = vunpack.c.l.s4 1983009808
        %v897 = vunpack.c.0.s8 %v896
        %v898 = vlaneseq
        %v899 = vshrl.u32 %v898, 7
        %v900 = vsub.s32 %v897, %v899
        %v901 = vrot.slane %v893, %v900
        %v903 = vunpack.c.l.s4 1983009808
        %v904 = vunpack.c.0.s8 %v903
        %v905 = vlaneseq
        %v906 = vshrl.u32 %v905, 7
        %v907 = vsub.s32 %v904, %v906
        %v908 = vrot.slane %v894, %v907
        %v909 = vcombine.low %v885, %v901
        %v910 = vcombine.high %v885, %v901
        %v912 = vunpack.c.l.s4 1934713408
        %v913 = vunpack.c.0.s8 %v912
        %v914 = vlaneseq
        %v915 = vshrl.u32 %v914, 7
        %v916 = vsub.s32 %v913, %v915
        %v917 = vrot.slane %v909, %v916
        %v919 = vunpack.c.l.s4 1934713408
        %v920 = vunpack.c.0.s8 %v919
        %v921 = vlaneseq
        %v922 = vshrl.u32 %v921, 7
        %v923 = vsub.s32 %v920, %v922
        %v924 = vrot.slane %v910, %v923
        %v925 = vcombine.low %v892, %v908
        %v926 = vcombine.high %v892, %v908
        %v928 = vunpack.c.l.s4 1934713408
        %v929 = vunpack.c.0.s8 %v928
        %v930 = vlaneseq
        %v931 = vshrl.u32 %v930, 7
        %v932 = vsub.s32 %v929, %v931
        %v933 = vrot.slane %v925, %v932
        %v935 = vunpack.c.l.s4 1934713408
        %v936 = vunpack.c.0.s8 %v935
        %v937 = vlaneseq
        %v938 = vshrl.u32 %v937, 7
        %v939 = vsub.s32 %v936, %v938
        %v940 = vrot.slane %v926, %v939
        %v941 = vcombine.high %v917, 0.0
        %v942 = vcombine.high %v924, 0.0
        %v943 = vcombine.high %v933, 0.0
        %v944 = vcombine.high %v940, 0.0
        %v945 = vpack.c.bf16 %v917, %v917
        %v946 = vpack.c.bf16 %v941, %v941
        %v947 = vpack.c.bf16 %v924, %v924
        %v948 = vpack.c.bf16 %v942, %v942
        %v949 = vpack.c.bf16 %v933, %v933
        %v950 = vpack.c.bf16 %v943, %v943
        %v951 = vpack.c.bf16 %v940, %v940
        %v952 = vpack.c.bf16 %v944, %v944
        %s953 = smul.u32 %s38, 8
        %v954 = vld [vmem:[#allocation2] sm:$0xf]
        %956 = vrot.lane.b32.xlu0 %v954, 120
        %v957 = vpop.permute.xlu0 %956
        %959 = vrot.lane.b32.xlu0 %v954, 112
        %v960 = vpop.permute.xlu0 %959
        %962 = vrot.lane.b32.xlu0 %v954, 104
        %v963 = vpop.permute.xlu0 %962
        %v965 = vld [vmem:[#allocation3] sm:$0xf]
        %967 = vrot.lane.b32.xlu0 %v965, 120
        %v968 = vpop.permute.xlu0 %967
        %969 = vrot.lane.b32.xlu0 %v965, 112
        %v970 = vpop.permute.xlu0 %969
        %971 = vrot.lane.b32.xlu0 %v965, 104
        %v972 = vpop.permute.xlu0 %971
        %v973 = vlaneseq
        %v974 = vshrl.u32 %v973, 7
        %v975 = vstv %s953
        %v976 = vadd.s32 %v975, %v974
        %v977 = vlaneseq
        %v978 = vand.u32 %v977, 127
        %vm979 = vcmp.ge.s32.totalorder %v976, %v978
        %v980 = vsel %vm979, 0.0, -1e+20
        %v981 = vcombine.low %v945, %v949
        %v983 = vunpack.c.l.s4 1983009808
        %v984 = vunpack.c.0.s8 %v983
        %v985 = vlaneseq
        %v986 = vshrl.u32 %v985, 7
        %v987 = vsub.s32 %v984, %v986
        %v988 = vrot.slane %v981, %v987
        %v989 = vcombine.low %v947, %v951
        %v991 = vunpack.c.l.s4 1983009808
        %v992 = vunpack.c.0.s8 %v991
        %v993 = vlaneseq
        %v994 = vshrl.u32 %v993, 7
        %v995 = vsub.s32 %v992, %v994
        %v996 = vrot.slane %v989, %v995
        %v997 = vcombine.low %v988, %v996
        %v999 = vunpack.c.l.s4 1934713408
        %v1000 = vunpack.c.0.s8 %v999
        %v1001 = vlaneseq
        %v1002 = vshrl.u32 %v1001, 7
        %v1003 = vsub.s32 %v1000, %v1002
        %v1004 = vrot.slane %v997, %v1003
        %v1005 = vcombine.high %v1004, 0
        %v1006 = vcombine.low %v946, %v950
        %v1008 = vunpack.c.l.s4 1983009808
        %v1009 = vunpack.c.0.s8 %v1008
        %v1010 = vlaneseq
        %v1011 = vshrl.u32 %v1010, 7
        %v1012 = vsub.s32 %v1009, %v1011
        %v1013 = vrot.slane %v1006, %v1012
        %v1014 = vcombine.low %v948, %v952
        %v1016 = vunpack.c.l.s4 1983009808
        %v1017 = vunpack.c.0.s8 %v1016
        %v1018 = vlaneseq
        %v1019 = vshrl.u32 %v1018, 7
        %v1020 = vsub.s32 %v1017, %v1019
        %v1021 = vrot.slane %v1014, %v1020
        %v1022 = vcombine.low %v1013, %v1021
        %v1024 = vunpack.c.l.s4 1934713408
        %v1025 = vunpack.c.0.s8 %v1024
        %v1026 = vlaneseq
        %v1027 = vshrl.u32 %v1026, 7
        %v1028 = vsub.s32 %v1025, %v1027
        %v1029 = vrot.slane %v1022, %v1028
        %v1030 = vcombine.high %v1029, 0
        %v1033 = vpack.i.b16 %v1029, %v1004
        %v1034 = vshrl.u32 %v1004, 16
        %v1035 = vshrl.u32 %v1029, 16
        %v1036 = vpack.i.b16 %v1035, %v1034
        %v1039 = vpack.i.b16 %v1030, %v1005
        %v1040 = vshrl.u32 %v1005, 16
        %v1041 = vshrl.u32 %v1030, 16
        %v1042 = vpack.i.b16 %v1041, %v1040
        %1043 = vxpose.xlu0.c.b16.start [1/8] %v954, 128
        %1044 = vxpose.xlu0.c.b16.cont [2/8] 0, 128
        %1045 = vxpose.xlu0.c.b16.cont [3/8] 0, 128
        %1046 = vxpose.xlu0.c.b16.cont [4/8] 0, 128
        %1047 = vxpose.xlu0.c.b16.cont [5/8] 0, 128
        %1048 = vxpose.xlu0.c.b16.cont [6/8] 0, 128
        %1049 = vxpose.xlu0.c.b16.cont [7/8] 0, 128
        %1050 = vxpose.xlu0.c.b16.end [8/8] 0, 128
        %v1051 = vpop.trf.xlu0
        %v1052 = vpop.trf.xlu0
        %v1053 = vpop.trf.xlu0
        %v1054 = vpop.trf.xlu0
        %v1055 = vpop.trf.xlu0
        %v1056 = vpop.trf.xlu0
        %v1057 = vpop.trf.xlu0
        %v1058 = vpop.trf.xlu0
        %1059 = vxpose.xlu0.c.b16.start [1/8] %v957, 128
        %1060 = vxpose.xlu0.c.b16.cont [2/8] 0, 128
        %1061 = vxpose.xlu0.c.b16.cont [3/8] 0, 128
        %1062 = vxpose.xlu0.c.b16.cont [4/8] 0, 128
        %1063 = vxpose.xlu0.c.b16.cont [5/8] 0, 128
        %1064 = vxpose.xlu0.c.b16.cont [6/8] 0, 128
        %1065 = vxpose.xlu0.c.b16.cont [7/8] 0, 128
        %1066 = vxpose.xlu0.c.b16.end [8/8] 0, 128
        %v1067 = vpop.trf.xlu0
        %v1068 = vpop.trf.xlu0
        %v1069 = vpop.trf.xlu0
        %v1070 = vpop.trf.xlu0
        %v1071 = vpop.trf.xlu0
        %v1072 = vpop.trf.xlu0
        %v1073 = vpop.trf.xlu0
        %v1074 = vpop.trf.xlu0
        %1075 = vxpose.xlu0.c.b16.start [1/8] %v960, 128
        %1076 = vxpose.xlu0.c.b16.cont [2/8] 0, 128
        %1077 = vxpose.xlu0.c.b16.cont [3/8] 0, 128
        %1078 = vxpose.xlu0.c.b16.cont [4/8] 0, 128
        %1079 = vxpose.xlu0.c.b16.cont [5/8] 0, 128
        %1080 = vxpose.xlu0.c.b16.cont [6/8] 0, 128
        %1081 = vxpose.xlu0.c.b16.cont [7/8] 0, 128
        %1082 = vxpose.xlu0.c.b16.end [8/8] 0, 128
        %v1083 = vpop.trf.xlu0
        %v1084 = vpop.trf.xlu0
        %v1085 = vpop.trf.xlu0
        %v1086 = vpop.trf.xlu0
        %v1087 = vpop.trf.xlu0
        %v1088 = vpop.trf.xlu0
        %v1089 = vpop.trf.xlu0
        %v1090 = vpop.trf.xlu0
        %1091 = vxpose.xlu0.c.b16.start [1/8] %v963, 128
        %1092 = vxpose.xlu0.c.b16.cont [2/8] 0, 128
        %1093 = vxpose.xlu0.c.b16.cont [3/8] 0, 128
        %1094 = vxpose.xlu0.c.b16.cont [4/8] 0, 128
        %1095 = vxpose.xlu0.c.b16.cont [5/8] 0, 128
        %1096 = vxpose.xlu0.c.b16.cont [6/8] 0, 128
        %1097 = vxpose.xlu0.c.b16.cont [7/8] 0, 128
        %1098 = vxpose.xlu0.c.b16.end [8/8] 0, 128
        %v1099 = vpop.trf.xlu0
        %v1100 = vpop.trf.xlu0
        %v1101 = vpop.trf.xlu0
        %v1102 = vpop.trf.xlu0
        %v1103 = vpop.trf.xlu0
        %v1104 = vpop.trf.xlu0
        %v1105 = vpop.trf.xlu0
        %v1106 = vpop.trf.xlu0
        %vm1107 = vcmask 64512
        %v1109 = vsel %vm1107, %v1033, 0
        %vm1111 = vcmask 1043456
        %v1113 = vsel %vm1111, %v1051, 0
        %1115 = vmatprep.subr.bf16.mxu0 0
        %1116 = vmatpush1.bf16.msra.mxu0 0
        %1117 = vmatprep.subr.bf16.mxu0 0
        %1118 = vmatpush1.bf16.msra.mxu0 0
        %1119 = vmatprep.subr.bf16.mxu0 0
        %1120 = vmatpush1.bf16.msra.mxu0 0
        %1121 = vmatprep.subr.bf16.mxu0 0
        %1122 = vmatpush1.bf16.msra.mxu0 0
        %1123 = vmatprep.subr.bf16.mxu0 0
        %1124 = vmatpush1.bf16.msra.mxu0 0
        %1125 = vmatprep.subr.bf16.mxu0 0
        %1126 = vmatpush1.bf16.msra.mxu0 0
        %1127 = vmatprep.subr.bf16.mxu0 0
        %1128 = vmatpush1.bf16.msra.mxu0 0
        %1129 = vmatprep.subr.bf16.mxu0 0
        %1130 = vmatpush1.bf16.msra.mxu0 %v1113
        %1131 = vmatprep.subr.bf16.mxu0 0
        %1132 = vmatpush2.bf16.msra.mxu0 0
        %1133 = vmatprep.subr.bf16.mxu0 0
        %1134 = vmatpush2.bf16.msra.mxu0 0
        %1135 = vmatprep.subr.bf16.mxu0 0
        %1136 = vmatpush2.bf16.msra.mxu0 0
        %1137 = vmatprep.subr.bf16.mxu0 0
        %1138 = vmatpush2.bf16.msra.mxu0 0
        %1139 = vmatprep.subr.bf16.mxu0 0
        %1140 = vmatpush2.bf16.msra.mxu0 0
        %1141 = vmatprep.subr.bf16.mxu0 0
        %1142 = vmatpush2.bf16.msra.mxu0 0
        %1143 = vmatprep.subr.bf16.mxu0 0
        %1144 = vmatpush2.bf16.msra.mxu0 0
        %1145 = vmatprep.subr.bf16.mxu0 0
        %1146 = vmatpush2.bf16.msra.mxu0 0
        %1147 = vmatprep.mubr.bf16.mxu0 0
        %1148 = vmatmul.mubr.bf16.gmra.mxu0 %v1109
        %v1149 = vpop.f32.mrf.mxu0
        %v1150 = vadd.f32 %v980, %v1149
        %v1151 = vpop.f32.mrf.mxu0
        %v1152 = vpop.f32.mrf.mxu0
        %v1153 = vpop.f32.mrf.mxu0
        %1154 = vdwg.mxu0
        %v1156 = vsel %vm1107, %v1036, 0
        %v1159 = vsel %vm1111, %v1067, 0
        %1161 = vmatprep.subr.bf16.mxu0 0
        %1162 = vmatpush1.bf16.msra.mxu0 0
        %1163 = vmatprep.subr.bf16.mxu0 0
        %1164 = vmatpush1.bf16.msra.mxu0 0
        %1165 = vmatprep.subr.bf16.mxu0 0
        %1166 = vmatpush1.bf16.msra.mxu0 0
        %1167 = vmatprep.subr.bf16.mxu0 0
        %1168 = vmatpush1.bf16.msra.mxu0 0
        %1169 = vmatprep.subr.bf16.mxu0 0
        %1170 = vmatpush1.bf16.msra.mxu0 0
        %1171 = vmatprep.subr.bf16.mxu0 0
        %1172 = vmatpush1.bf16.msra.mxu0 0
        %1173 = vmatprep.subr.bf16.mxu0 0
        %1174 = vmatpush1.bf16.msra.mxu0 0
        %1175 = vmatprep.subr.bf16.mxu0 0
        %1176 = vmatpush1.bf16.msra.mxu0 %v1159
        %1177 = vmatprep.subr.bf16.mxu0 0
        %1178 = vmatpush2.bf16.msra.mxu0 0
        %1179 = vmatprep.subr.bf16.mxu0 0
        %1180 = vmatpush2.bf16.msra.mxu0 0
        %1181 = vmatprep.subr.bf16.mxu0 0
        %1182 = vmatpush2.bf16.msra.mxu0 0
        %1183 = vmatprep.subr.bf16.mxu0 0
        %1184 = vmatpush2.bf16.msra.mxu0 0
        %1185 = vmatprep.subr.bf16.mxu0 0
        %1186 = vmatpush2.bf16.msra.mxu0 0
        %1187 = vmatprep.subr.bf16.mxu0 0
        %1188 = vmatpush2.bf16.msra.mxu0 0
        %1189 = vmatprep.subr.bf16.mxu0 0
        %1190 = vmatpush2.bf16.msra.mxu0 0
        %1191 = vmatprep.subr.bf16.mxu0 0
        %1192 = vmatpush2.bf16.msra.mxu0 0
        %1193 = vmatprep.mubr.bf16.mxu0 0
        %1194 = vmatmul.mubr.bf16.gmra.mxu0 %v1156
        %v1195 = vpop.f32.mrf.mxu0
        %v1196 = vadd.f32 %v980, %v1195
        %v1197 = vpop.f32.mrf.mxu0
        %v1198 = vpop.f32.mrf.mxu0
        %v1199 = vpop.f32.mrf.mxu0
        %1200 = vdwg.mxu0
        %v1202 = vsel %vm1107, %v1039, 0
        %v1205 = vsel %vm1111, %v1083, 0
        %1207 = vmatprep.subr.bf16.mxu0 0
        %1208 = vmatpush1.bf16.msra.mxu0 0
        %1209 = vmatprep.subr.bf16.mxu0 0
        %1210 = vmatpush1.bf16.msra.mxu0 0
        %1211 = vmatprep.subr.bf16.mxu0 0
        %1212 = vmatpush1.bf16.msra.mxu0 0
        %1213 = vmatprep.subr.bf16.mxu0 0
        %1214 = vmatpush1.bf16.msra.mxu0 0
        %1215 = vmatprep.subr.bf16.mxu0 0
        %1216 = vmatpush1.bf16.msra.mxu0 0
        %1217 = vmatprep.subr.bf16.mxu0 0
        %1218 = vmatpush1.bf16.msra.mxu0 0
        %1219 = vmatprep.subr.bf16.mxu0 0
        %1220 = vmatpush1.bf16.msra.mxu0 0
        %1221 = vmatprep.subr.bf16.mxu0 0
        %1222 = vmatpush1.bf16.msra.mxu0 %v1205
        %1223 = vmatprep.subr.bf16.mxu0 0
        %1224 = vmatpush2.bf16.msra.mxu0 0
        %1225 = vmatprep.subr.bf16.mxu0 0
        %1226 = vmatpush2.bf16.msra.mxu0 0
        %1227 = vmatprep.subr.bf16.mxu0 0
        %1228 = vmatpush2.bf16.msra.mxu0 0
        %1229 = vmatprep.subr.bf16.mxu0 0
        %1230 = vmatpush2.bf16.msra.mxu0 0
        %1231 = vmatprep.subr.bf16.mxu0 0
        %1232 = vmatpush2.bf16.msra.mxu0 0
        %1233 = vmatprep.subr.bf16.mxu0 0
        %1234 = vmatpush2.bf16.msra.mxu0 0
        %1235 = vmatprep.subr.bf16.mxu0 0
        %1236 = vmatpush2.bf16.msra.mxu0 0
        %1237 = vmatprep.subr.bf16.mxu0 0
        %1238 = vmatpush2.bf16.msra.mxu0 0
        %1239 = vmatprep.mubr.bf16.mxu0 0
        %1240 = vmatmul.mubr.bf16.gmra.mxu0 %v1202
        %v1241 = vpop.f32.mrf.mxu0
        %v1242 = vadd.f32 %v980, %v1241
        %v1243 = vpop.f32.mrf.mxu0
        %v1244 = vpop.f32.mrf.mxu0
        %v1245 = vpop.f32.mrf.mxu0
        %1246 = vdwg.mxu0
        %v1248 = vsel %vm1107, %v1042, 0
        %v1251 = vsel %vm1111, %v1099, 0
        %1253 = vmatprep.subr.bf16.mxu0 0
        %1254 = vmatpush1.bf16.msra.mxu0 0
        %1255 = vmatprep.subr.bf16.mxu0 0
        %1256 = vmatpush1.bf16.msra.mxu0 0
        %1257 = vmatprep.subr.bf16.mxu0 0
        %1258 = vmatpush1.bf16.msra.mxu0 0
        %1259 = vmatprep.subr.bf16.mxu0 0
        %1260 = vmatpush1.bf16.msra.mxu0 0
        %1261 = vmatprep.subr.bf16.mxu0 0
        %1262 = vmatpush1.bf16.msra.mxu0 0
        %1263 = vmatprep.subr.bf16.mxu0 0
        %1264 = vmatpush1.bf16.msra.mxu0 0
        %1265 = vmatprep.subr.bf16.mxu0 0
        %1266 = vmatpush1.bf16.msra.mxu0 0
        %1267 = vmatprep.subr.bf16.mxu0 0
        %1268 = vmatpush1.bf16.msra.mxu0 %v1251
        %1269 = vmatprep.subr.bf16.mxu0 0
        %1270 = vmatpush2.bf16.msra.mxu0 0
        %1271 = vmatprep.subr.bf16.mxu0 0
        %1272 = vmatpush2.bf16.msra.mxu0 0
        %1273 = vmatprep.subr.bf16.mxu0 0
        %1274 = vmatpush2.bf16.msra.mxu0 0
        %1275 = vmatprep.subr.bf16.mxu0 0
        %1276 = vmatpush2.bf16.msra.mxu0 0
        %1277 = vmatprep.subr.bf16.mxu0 0
        %1278 = vmatpush2.bf16.msra.mxu0 0
        %1279 = vmatprep.subr.bf16.mxu0 0
        %1280 = vmatpush2.bf16.msra.mxu0 0
        %1281 = vmatprep.subr.bf16.mxu0 0
        %1282 = vmatpush2.bf16.msra.mxu0 0
        %1283 = vmatprep.subr.bf16.mxu0 0
        %1284 = vmatpush2.bf16.msra.mxu0 0
        %1285 = vmatprep.mubr.bf16.mxu0 0
        %1286 = vmatmul.mubr.bf16.gmra.mxu0 %v1248
        %v1287 = vpop.f32.mrf.mxu0
        %v1288 = vadd.f32 %v980, %v1287
        %v1289 = vpop.f32.mrf.mxu0
        %v1290 = vpop.f32.mrf.mxu0
        %v1291 = vpop.f32.mrf.mxu0
        %1292 = vdwg.mxu0
        %v1293 = vsel %vm1107, %v1150, -inf
        %1294 = vmax.xlane.f32.xlu0 %v1293
        %v1295 = vpop.xlane.xlu0 %1294
        %v1296 = vsel %vm1107, %v1196, -inf
        %1297 = vmax.xlane.f32.xlu0 %v1296
        %v1298 = vpop.xlane.xlu0 %1297
        %v1299 = vsel %vm1107, %v1242, -inf
        %1300 = vmax.xlane.f32.xlu0 %v1299
        %v1301 = vpop.xlane.xlu0 %1300
        %v1302 = vsel %vm1107, %v1288, -inf
        %1303 = vmax.xlane.f32.xlu0 %v1302
        %v1304 = vpop.xlane.xlu0 %1303
        %v1305 = vsub.f32 -inf, %v1295
        %v1306 = vsub.f32 -inf, %v1298
        %v1307 = vsub.f32 -inf, %v1301
        %v1308 = vsub.f32 -inf, %v1304
        %v1309 = vmul.f32 %v1305, 1.442695
        %v1310 = vpow.pop %v1309
        %v1311 = vmul.f32 %v1306, 1.442695
        %v1312 = vpow.pop %v1311
        %v1313 = vmul.f32 %v1307, 1.442695
        %v1314 = vpow.pop %v1313
        %v1315 = vmul.f32 %v1308, 1.442695
        %v1316 = vpow.pop %v1315
        %v1317 = vsub.f32 %v1150, %v1295
        %v1318 = vsub.f32 %v1196, %v1298
        %v1319 = vsub.f32 %v1242, %v1301
        %v1320 = vsub.f32 %v1288, %v1304
        %v1321 = vmul.f32 %v1317, 1.442695
        %v1322 = vpow.pop %v1321
        %v1323 = vmul.f32 %v1318, 1.442695
        %v1324 = vpow.pop %v1323
        %v1325 = vmul.f32 %v1319, 1.442695
        %v1326 = vpow.pop %v1325
        %v1327 = vmul.f32 %v1320, 1.442695
        %v1328 = vpow.pop %v1327
        %v1329 = vmul.f32 %v1310, 0.0
        %v1330 = vmul.f32 %v1312, 0.0
        %v1331 = vmul.f32 %v1314, 0.0
        %v1332 = vmul.f32 %v1316, 0.0
        %v1333 = vsel %vm1107, %v1322, 0.0
        %1334 = vadd.xlane.f32.xlu0 %v1333
        %v1335 = vpop.xlane.xlu0 %1334
        %v1336 = vsel %vm1107, %v1324, 0.0
        %1337 = vadd.xlane.f32.xlu0 %v1336
        %v1338 = vpop.xlane.xlu0 %1337
        %v1339 = vsel %vm1107, %v1326, 0.0
        %1340 = vadd.xlane.f32.xlu0 %v1339
        %v1341 = vpop.xlane.xlu0 %1340
        %v1342 = vsel %vm1107, %v1328, 0.0
        %1343 = vadd.xlane.f32.xlu0 %v1342
        %v1344 = vpop.xlane.xlu0 %1343
        %v1345 = vadd.f32 %v1329, %v1335
        %v1346 = vadd.f32 %v1330, %v1338
        %v1347 = vadd.f32 %v1331, %v1341
        %v1348 = vadd.f32 %v1332, %v1344
        %v1349 = vpack.c.bf16 %v1322, %v1322
        %v1350 = vpack.c.bf16 %v1324, %v1324
        %v1351 = vpack.c.bf16 %v1326, %v1326
        %v1352 = vpack.c.bf16 %v1328, %v1328
        %v1354 = vsel %vm1107, %v1349, 0
        %v1357 = vsel %vm1111, %v965, 0
        %1359 = vmatprep.subr.bf16.mxu0 0
        %1360 = vmatpush1.bf16.msra.mxu0 0
        %1361 = vmatprep.subr.bf16.mxu0 0
        %1362 = vmatpush1.bf16.msra.mxu0 0
        %1363 = vmatprep.subr.bf16.mxu0 0
        %1364 = vmatpush1.bf16.msra.mxu0 0
        %1365 = vmatprep.subr.bf16.mxu0 0
        %1366 = vmatpush1.bf16.msra.mxu0 0
        %1367 = vmatprep.subr.bf16.mxu0 0
        %1368 = vmatpush1.bf16.msra.mxu0 0
        %1369 = vmatprep.subr.bf16.mxu0 0
        %1370 = vmatpush1.bf16.msra.mxu0 0
        %1371 = vmatprep.subr.bf16.mxu0 0
        %1372 = vmatpush1.bf16.msra.mxu0 0
        %1373 = vmatprep.subr.bf16.mxu0 0
        %1374 = vmatpush1.bf16.msra.mxu0 %v1357
        %1375 = vmatprep.subr.bf16.mxu0 0
        %1376 = vmatpush2.bf16.msra.mxu0 0
        %1377 = vmatprep.subr.bf16.mxu0 0
        %1378 = vmatpush2.bf16.msra.mxu0 0
        %1379 = vmatprep.subr.bf16.mxu0 0
        %1380 = vmatpush2.bf16.msra.mxu0 0
        %1381 = vmatprep.subr.bf16.mxu0 0
        %1382 = vmatpush2.bf16.msra.mxu0 0
        %1383 = vmatprep.subr.bf16.mxu0 0
        %1384 = vmatpush2.bf16.msra.mxu0 0
        %1385 = vmatprep.subr.bf16.mxu0 0
        %1386 = vmatpush2.bf16.msra.mxu0 0
        %1387 = vmatprep.subr.bf16.mxu0 0
        %1388 = vmatpush2.bf16.msra.mxu0 0
        %1389 = vmatprep.subr.bf16.mxu0 0
        %1390 = vmatpush2.bf16.msra.mxu0 0
        %1391 = vmatprep.mubr.bf16.mxu0 0
        %1392 = vmatmul.mubr.bf16.gmra.mxu0 %v1354
        %v1393 = vpop.f32.mrf.mxu0
        %v1394 = vadd.f32 0.0, %v1393
        %v1395 = vpop.f32.mrf.mxu0
        %v1396 = vpop.f32.mrf.mxu0
        %v1397 = vpop.f32.mrf.mxu0
        %1398 = vdwg.mxu0
        %v1400 = vsel %vm1107, %v1350, 0
        %v1403 = vsel %vm1111, %v968, 0
        %1405 = vmatprep.subr.bf16.mxu0 0
        %1406 = vmatpush1.bf16.msra.mxu0 0
        %1407 = vmatprep.subr.bf16.mxu0 0
        %1408 = vmatpush1.bf16.msra.mxu0 0
        %1409 = vmatprep.subr.bf16.mxu0 0
        %1410 = vmatpush1.bf16.msra.mxu0 0
        %1411 = vmatprep.subr.bf16.mxu0 0
        %1412 = vmatpush1.bf16.msra.mxu0 0
        %1413 = vmatprep.subr.bf16.mxu0 0
        %1414 = vmatpush1.bf16.msra.mxu0 0
        %1415 = vmatprep.subr.bf16.mxu0 0
        %1416 = vmatpush1.bf16.msra.mxu0 0
        %1417 = vmatprep.subr.bf16.mxu0 0
        %1418 = vmatpush1.bf16.msra.mxu0 0
        %1419 = vmatprep.subr.bf16.mxu0 0
        %1420 = vmatpush1.bf16.msra.mxu0 %v1403
        %1421 = vmatprep.subr.bf16.mxu0 0
        %1422 = vmatpush2.bf16.msra.mxu0 0
        %1423 = vmatprep.subr.bf16.mxu0 0
        %1424 = vmatpush2.bf16.msra.mxu0 0
        %1425 = vmatprep.subr.bf16.mxu0 0
        %1426 = vmatpush2.bf16.msra.mxu0 0
        %1427 = vmatprep.subr.bf16.mxu0 0
        %1428 = vmatpush2.bf16.msra.mxu0 0
        %1429 = vmatprep.subr.bf16.mxu0 0
        %1430 = vmatpush2.bf16.msra.mxu0 0
        %1431 = vmatprep.subr.bf16.mxu0 0
        %1432 = vmatpush2.bf16.msra.mxu0 0
        %1433 = vmatprep.subr.bf16.mxu0 0
        %1434 = vmatpush2.bf16.msra.mxu0 0
        %1435 = vmatprep.subr.bf16.mxu0 0
        %1436 = vmatpush2.bf16.msra.mxu0 0
        %1437 = vmatprep.mubr.bf16.mxu0 0
        %1438 = vmatmul.mubr.bf16.gmra.mxu0 %v1400
        %v1439 = vpop.f32.mrf.mxu0
        %v1440 = vadd.f32 0.0, %v1439
        %v1441 = vpop.f32.mrf.mxu0
        %v1442 = vpop.f32.mrf.mxu0
        %v1443 = vpop.f32.mrf.mxu0
        %1444 = vdwg.mxu0
        %v1446 = vsel %vm1107, %v1351, 0
        %v1449 = vsel %vm1111, %v970, 0
        %1451 = vmatprep.subr.bf16.mxu0 0
        %1452 = vmatpush1.bf16.msra.mxu0 0
        %1453 = vmatprep.subr.bf16.mxu0 0
        %1454 = vmatpush1.bf16.msra.mxu0 0
        %1455 = vmatprep.subr.bf16.mxu0 0
        %1456 = vmatpush1.bf16.msra.mxu0 0
        %1457 = vmatprep.subr.bf16.mxu0 0
        %1458 = vmatpush1.bf16.msra.mxu0 0
        %1459 = vmatprep.subr.bf16.mxu0 0
        %1460 = vmatpush1.bf16.msra.mxu0 0
        %1461 = vmatprep.subr.bf16.mxu0 0
        %1462 = vmatpush1.bf16.msra.mxu0 0
        %1463 = vmatprep.subr.bf16.mxu0 0
        %1464 = vmatpush1.bf16.msra.mxu0 0
        %1465 = vmatprep.subr.bf16.mxu0 0
        %1466 = vmatpush1.bf16.msra.mxu0 %v1449
        %1467 = vmatprep.subr.bf16.mxu0 0
        %1468 = vmatpush2.bf16.msra.mxu0 0
        %1469 = vmatprep.subr.bf16.mxu0 0
        %1470 = vmatpush2.bf16.msra.mxu0 0
        %1471 = vmatprep.subr.bf16.mxu0 0
        %1472 = vmatpush2.bf16.msra.mxu0 0
        %1473 = vmatprep.subr.bf16.mxu0 0
        %1474 = vmatpush2.bf16.msra.mxu0 0
        %1475 = vmatprep.subr.bf16.mxu0 0
        %1476 = vmatpush2.bf16.msra.mxu0 0
        %1477 = vmatprep.subr.bf16.mxu0 0
        %1478 = vmatpush2.bf16.msra.mxu0 0
        %1479 = vmatprep.subr.bf16.mxu0 0
        %1480 = vmatpush2.bf16.msra.mxu0 0
        %1481 = vmatprep.subr.bf16.mxu0 0
        %1482 = vmatpush2.bf16.msra.mxu0 0
        %1483 = vmatprep.mubr.bf16.mxu0 0
        %1484 = vmatmul.mubr.bf16.gmra.mxu0 %v1446
        %v1485 = vpop.f32.mrf.mxu0
        %v1486 = vadd.f32 0.0, %v1485
        %v1487 = vpop.f32.mrf.mxu0
        %v1488 = vpop.f32.mrf.mxu0
        %v1489 = vpop.f32.mrf.mxu0
        %1490 = vdwg.mxu0
        %v1492 = vsel %vm1107, %v1352, 0
        %v1495 = vsel %vm1111, %v972, 0
        %1497 = vmatprep.subr.bf16.mxu0 0
        %1498 = vmatpush1.bf16.msra.mxu0 0
        %1499 = vmatprep.subr.bf16.mxu0 0
        %1500 = vmatpush1.bf16.msra.mxu0 0
        %1501 = vmatprep.subr.bf16.mxu0 0
        %1502 = vmatpush1.bf16.msra.mxu0 0
        %1503 = vmatprep.subr.bf16.mxu0 0
        %1504 = vmatpush1.bf16.msra.mxu0 0
        %1505 = vmatprep.subr.bf16.mxu0 0
        %1506 = vmatpush1.bf16.msra.mxu0 0
        %1507 = vmatprep.subr.bf16.mxu0 0
        %1508 = vmatpush1.bf16.msra.mxu0 0
        %1509 = vmatprep.subr.bf16.mxu0 0
        %1510 = vmatpush1.bf16.msra.mxu0 0
        %1511 = vmatprep.subr.bf16.mxu0 0
        %1512 = vmatpush1.bf16.msra.mxu0 %v1495
        %1513 = vmatprep.subr.bf16.mxu0 0
        %1514 = vmatpush2.bf16.msra.mxu0 0
        %1515 = vmatprep.subr.bf16.mxu0 0
        %1516 = vmatpush2.bf16.msra.mxu0 0
        %1517 = vmatprep.subr.bf16.mxu0 0
        %1518 = vmatpush2.bf16.msra.mxu0 0
        %1519 = vmatprep.subr.bf16.mxu0 0
        %1520 = vmatpush2.bf16.msra.mxu0 0
        %1521 = vmatprep.subr.bf16.mxu0 0
        %1522 = vmatpush2.bf16.msra.mxu0 0
        %1523 = vmatprep.subr.bf16.mxu0 0
        %1524 = vmatpush2.bf16.msra.mxu0 0
        %1525 = vmatprep.subr.bf16.mxu0 0
        %1526 = vmatpush2.bf16.msra.mxu0 0
        %1527 = vmatprep.subr.bf16.mxu0 0
        %1528 = vmatpush2.bf16.msra.mxu0 0
        %1529 = vmatprep.mubr.bf16.mxu0 0
        %1530 = vmatmul.mubr.bf16.gmra.mxu0 %v1492
        %v1531 = vpop.f32.mrf.mxu0
        %v1532 = vadd.f32 0.0, %v1531
        %v1533 = vpop.f32.mrf.mxu0
        %v1534 = vpop.f32.mrf.mxu0
        %v1535 = vpop.f32.mrf.mxu0
        %1536 = vdwg.mxu0
        %v1537 = vadd.f32 %v1329, %v1394
        %v1538 = vadd.f32 %v1330, %v1440
        %v1539 = vadd.f32 %v1331, %v1486
        %v1540 = vadd.f32 %v1332, %v1532
        %v1541 = vld [vmem:[#allocation2 + $0x4] sm:$0xf]
        %1543 = vrot.lane.b32.xlu0 %v1541, 120
        %v1544 = vpop.permute.xlu0 %1543
        %1546 = vrot.lane.b32.xlu0 %v1541, 112
        %v1547 = vpop.permute.xlu0 %1546
        %1549 = vrot.lane.b32.xlu0 %v1541, 104
        %v1550 = vpop.permute.xlu0 %1549
        %v1552 = vld [vmem:[#allocation3 + $0x4] sm:$0xf]
        %1554 = vrot.lane.b32.xlu0 %v1552, 120
        %v1555 = vpop.permute.xlu0 %1554
        %1556 = vrot.lane.b32.xlu0 %v1552, 112
        %v1557 = vpop.permute.xlu0 %1556
        %1558 = vrot.lane.b32.xlu0 %v1552, 104
        %v1559 = vpop.permute.xlu0 %1558
        %v1560 = vadd.s32 %v978, 8
        %vm1561 = vcmp.ge.s32.totalorder %v976, %v1560
        %v1562 = vsel %vm1561, 0.0, -1e+20
        %1563 = vxpose.xlu0.c.b16.start [1/8] %v1541, 128
        %1564 = vxpose.xlu0.c.b16.cont [2/8] 0, 128
        %1565 = vxpose.xlu0.c.b16.cont [3/8] 0, 128
        %1566 = vxpose.xlu0.c.b16.cont [4/8] 0, 128
        %1567 = vxpose.xlu0.c.b16.cont [5/8] 0, 128
        %1568 = vxpose.xlu0.c.b16.cont [6/8] 0, 128
        %1569 = vxpose.xlu0.c.b16.cont [7/8] 0, 128
        %1570 = vxpose.xlu0.c.b16.end [8/8] 0, 128
        %v1571 = vpop.trf.xlu0
        %v1572 = vpop.trf.xlu0
        %v1573 = vpop.trf.xlu0
        %v1574 = vpop.trf.xlu0
        %v1575 = vpop.trf.xlu0
        %v1576 = vpop.trf.xlu0
        %v1577 = vpop.trf.xlu0
        %v1578 = vpop.trf.xlu0
        %1579 = vxpose.xlu0.c.b16.start [1/8] %v1544, 128
        %1580 = vxpose.xlu0.c.b16.cont [2/8] 0, 128
        %1581 = vxpose.xlu0.c.b16.cont [3/8] 0, 128
        %1582 = vxpose.xlu0.c.b16.cont [4/8] 0, 128
        %1583 = vxpose.xlu0.c.b16.cont [5/8] 0, 128
        %1584 = vxpose.xlu0.c.b16.cont [6/8] 0, 128
        %1585 = vxpose.xlu0.c.b16.cont [7/8] 0, 128
        %1586 = vxpose.xlu0.c.b16.end [8/8] 0, 128
        %v1587 = vpop.trf.xlu0
        %v1588 = vpop.trf.xlu0
        %v1589 = vpop.trf.xlu0
        %v1590 = vpop.trf.xlu0
        %v1591 = vpop.trf.xlu0
        %v1592 = vpop.trf.xlu0
        %v1593 = vpop.trf.xlu0
        %v1594 = vpop.trf.xlu0
        %1595 = vxpose.xlu0.c.b16.start [1/8] %v1547, 128
        %1596 = vxpose.xlu0.c.b16.cont [2/8] 0, 128
        %1597 = vxpose.xlu0.c.b16.cont [3/8] 0, 128
        %1598 = vxpose.xlu0.c.b16.cont [4/8] 0, 128
        %1599 = vxpose.xlu0.c.b16.cont [5/8] 0, 128
        %1600 = vxpose.xlu0.c.b16.cont [6/8] 0, 128
        %1601 = vxpose.xlu0.c.b16.cont [7/8] 0, 128
        %1602 = vxpose.xlu0.c.b16.end [8/8] 0, 128
        %v1603 = vpop.trf.xlu0
        %v1604 = vpop.trf.xlu0
        %v1605 = vpop.trf.xlu0
        %v1606 = vpop.trf.xlu0
        %v1607 = vpop.trf.xlu0
        %v1608 = vpop.trf.xlu0
        %v1609 = vpop.trf.xlu0
        %v1610 = vpop.trf.xlu0
        %1611 = vxpose.xlu0.c.b16.start [1/8] %v1550, 128
        %1612 = vxpose.xlu0.c.b16.cont [2/8] 0, 128
        %1613 = vxpose.xlu0.c.b16.cont [3/8] 0, 128
        %1614 = vxpose.xlu0.c.b16.cont [4/8] 0, 128
        %1615 = vxpose.xlu0.c.b16.cont [5/8] 0, 128
        %1616 = vxpose.xlu0.c.b16.cont [6/8] 0, 128
        %1617 = vxpose.xlu0.c.b16.cont [7/8] 0, 128
        %1618 = vxpose.xlu0.c.b16.end [8/8] 0, 128
        %v1619 = vpop.trf.xlu0
        %v1620 = vpop.trf.xlu0
        %v1621 = vpop.trf.xlu0
        %v1622 = vpop.trf.xlu0
        %v1623 = vpop.trf.xlu0
        %v1624 = vpop.trf.xlu0
        %v1625 = vpop.trf.xlu0
        %v1626 = vpop.trf.xlu0
        %v1628 = vsel %vm1111, %v1571, 0
        %1630 = vmatprep.subr.bf16.mxu0 0
        %1631 = vmatpush1.bf16.msra.mxu0 0
        %1632 = vmatprep.subr.bf16.mxu0 0
        %1633 = vmatpush1.bf16.msra.mxu0 0
        %1634 = vmatprep.subr.bf16.mxu0 0
        %1635 = vmatpush1.bf16.msra.mxu0 0
        %1636 = vmatprep.subr.bf16.mxu0 0
        %1637 = vmatpush1.bf16.msra.mxu0 0
        %1638 = vmatprep.subr.bf16.mxu0 0
        %1639 = vmatpush1.bf16.msra.mxu0 0
        %1640 = vmatprep.subr.bf16.mxu0 0
        %1641 = vmatpush1.bf16.msra.mxu0 0
        %1642 = vmatprep.subr.bf16.mxu0 0
        %1643 = vmatpush1.bf16.msra.mxu0 0
        %1644 = vmatprep.subr.bf16.mxu0 0
        %1645 = vmatpush1.bf16.msra.mxu0 %v1628
        %1646 = vmatprep.subr.bf16.mxu0 0
        %1647 = vmatpush2.bf16.msra.mxu0 0
        %1648 = vmatprep.subr.bf16.mxu0 0
        %1649 = vmatpush2.bf16.msra.mxu0 0
        %1650 = vmatprep.subr.bf16.mxu0 0
        %1651 = vmatpush2.bf16.msra.mxu0 0
        %1652 = vmatprep.subr.bf16.mxu0 0
        %1653 = vmatpush2.bf16.msra.mxu0 0
        %1654 = vmatprep.subr.bf16.mxu0 0
        %1655 = vmatpush2.bf16.msra.mxu0 0
        %1656 = vmatprep.subr.bf16.mxu0 0
        %1657 = vmatpush2.bf16.msra.mxu0 0
        %1658 = vmatprep.subr.bf16.mxu0 0
        %1659 = vmatpush2.bf16.msra.mxu0 0
        %1660 = vmatprep.subr.bf16.mxu0 0
        %1661 = vmatpush2.bf16.msra.mxu0 0
        %1662 = vmatprep.mubr.bf16.mxu0 0
        %1663 = vmatmul.mubr.bf16.gmra.mxu0 %v1109
        %v1664 = vpop.f32.mrf.mxu0
        %v1665 = vadd.f32 %v1562, %v1664
        %v1666 = vpop.f32.mrf.mxu0
        %v1667 = vpop.f32.mrf.mxu0
        %v1668 = vpop.f32.mrf.mxu0
        %1669 = vdwg.mxu0
        %v1671 = vsel %vm1111, %v1587, 0
        %1673 = vmatprep.subr.bf16.mxu0 0
        %1674 = vmatpush1.bf16.msra.mxu0 0
        %1675 = vmatprep.subr.bf16.mxu0 0
        %1676 = vmatpush1.bf16.msra.mxu0 0
        %1677 = vmatprep.subr.bf16.mxu0 0
        %1678 = vmatpush1.bf16.msra.mxu0 0
        %1679 = vmatprep.subr.bf16.mxu0 0
        %1680 = vmatpush1.bf16.msra.mxu0 0
        %1681 = vmatprep.subr.bf16.mxu0 0
        %1682 = vmatpush1.bf16.msra.mxu0 0
        %1683 = vmatprep.subr.bf16.mxu0 0
        %1684 = vmatpush1.bf16.msra.mxu0 0
        %1685 = vmatprep.subr.bf16.mxu0 0
        %1686 = vmatpush1.bf16.msra.mxu0 0
        %1687 = vmatprep.subr.bf16.mxu0 0
        %1688 = vmatpush1.bf16.msra.mxu0 %v1671
        %1689 = vmatprep.subr.bf16.mxu0 0
        %1690 = vmatpush2.bf16.msra.mxu0 0
        %1691 = vmatprep.subr.bf16.mxu0 0
        %1692 = vmatpush2.bf16.msra.mxu0 0
        %1693 = vmatprep.subr.bf16.mxu0 0
        %1694 = vmatpush2.bf16.msra.mxu0 0
        %1695 = vmatprep.subr.bf16.mxu0 0
        %1696 = vmatpush2.bf16.msra.mxu0 0
        %1697 = vmatprep.subr.bf16.mxu0 0
        %1698 = vmatpush2.bf16.msra.mxu0 0
        %1699 = vmatprep.subr.bf16.mxu0 0
        %1700 = vmatpush2.bf16.msra.mxu0 0
        %1701 = vmatprep.subr.bf16.mxu0 0
        %1702 = vmatpush2.bf16.msra.mxu0 0
        %1703 = vmatprep.subr.bf16.mxu0 0
        %1704 = vmatpush2.bf16.msra.mxu0 0
        %1705 = vmatprep.mubr.bf16.mxu0 0
        %1706 = vmatmul.mubr.bf16.gmra.mxu0 %v1156
        %v1707 = vpop.f32.mrf.mxu0
        %v1708 = vadd.f32 %v1562, %v1707
        %v1709 = vpop.f32.mrf.mxu0
        %v1710 = vpop.f32.mrf.mxu0
        %v1711 = vpop.f32.mrf.mxu0
        %1712 = vdwg.mxu0
        %v1714 = vsel %vm1111, %v1603, 0
        %1716 = vmatprep.subr.bf16.mxu0 0
        %1717 = vmatpush1.bf16.msra.mxu0 0
        %1718 = vmatprep.subr.bf16.mxu0 0
        %1719 = vmatpush1.bf16.msra.mxu0 0
        %1720 = vmatprep.subr.bf16.mxu0 0
        %1721 = vmatpush1.bf16.msra.mxu0 0
        %1722 = vmatprep.subr.bf16.mxu0 0
        %1723 = vmatpush1.bf16.msra.mxu0 0
        %1724 = vmatprep.subr.bf16.mxu0 0
        %1725 = vmatpush1.bf16.msra.mxu0 0
        %1726 = vmatprep.subr.bf16.mxu0 0
        %1727 = vmatpush1.bf16.msra.mxu0 0
        %1728 = vmatprep.subr.bf16.mxu0 0
        %1729 = vmatpush1.bf16.msra.mxu0 0
        %1730 = vmatprep.subr.bf16.mxu0 0
        %1731 = vmatpush1.bf16.msra.mxu0 %v1714
        %1732 = vmatprep.subr.bf16.mxu0 0
        %1733 = vmatpush2.bf16.msra.mxu0 0
        %1734 = vmatprep.subr.bf16.mxu0 0
        %1735 = vmatpush2.bf16.msra.mxu0 0
        %1736 = vmatprep.subr.bf16.mxu0 0
        %1737 = vmatpush2.bf16.msra.mxu0 0
        %1738 = vmatprep.subr.bf16.mxu0 0
        %1739 = vmatpush2.bf16.msra.mxu0 0
        %1740 = vmatprep.subr.bf16.mxu0 0
        %1741 = vmatpush2.bf16.msra.mxu0 0
        %1742 = vmatprep.subr.bf16.mxu0 0
        %1743 = vmatpush2.bf16.msra.mxu0 0
        %1744 = vmatprep.subr.bf16.mxu0 0
        %1745 = vmatpush2.bf16.msra.mxu0 0
        %1746 = vmatprep.subr.bf16.mxu0 0
        %1747 = vmatpush2.bf16.msra.mxu0 0
        %1748 = vmatprep.mubr.bf16.mxu0 0
        %1749 = vmatmul.mubr.bf16.gmra.mxu0 %v1202
        %v1750 = vpop.f32.mrf.mxu0
        %v1751 = vadd.f32 %v1562, %v1750
        %v1752 = vpop.f32.mrf.mxu0
        %v1753 = vpop.f32.mrf.mxu0
        %v1754 = vpop.f32.mrf.mxu0
        %1755 = vdwg.mxu0
        %v1757 = vsel %vm1111, %v1619, 0
        %1759 = vmatprep.subr.bf16.mxu0 0
        %1760 = vmatpush1.bf16.msra.mxu0 0
        %1761 = vmatprep.subr.bf16.mxu0 0
        %1762 = vmatpush1.bf16.msra.mxu0 0
        %1763 = vmatprep.subr.bf16.mxu0 0
        %1764 = vmatpush1.bf16.msra.mxu0 0
        %1765 = vmatprep.subr.bf16.mxu0 0
        %1766 = vmatpush1.bf16.msra.mxu0 0
        %1767 = vmatprep.subr.bf16.mxu0 0
        %1768 = vmatpush1.bf16.msra.mxu0 0
        %1769 = vmatprep.subr.bf16.mxu0 0
        %1770 = vmatpush1.bf16.msra.mxu0 0
        %1771 = vmatprep.subr.bf16.mxu0 0
        %1772 = vmatpush1.bf16.msra.mxu0 0
        %1773 = vmatprep.subr.bf16.mxu0 0
        %1774 = vmatpush1.bf16.msra.mxu0 %v1757
        %1775 = vmatprep.subr.bf16.mxu0 0
        %1776 = vmatpush2.bf16.msra.mxu0 0
        %1777 = vmatprep.subr.bf16.mxu0 0
        %1778 = vmatpush2.bf16.msra.mxu0 0
        %1779 = vmatprep.subr.bf16.mxu0 0
        %1780 = vmatpush2.bf16.msra.mxu0 0
        %1781 = vmatprep.subr.bf16.mxu0 0
        %1782 = vmatpush2.bf16.msra.mxu0 0
        %1783 = vmatprep.subr.bf16.mxu0 0
        %1784 = vmatpush2.bf16.msra.mxu0 0
        %1785 = vmatprep.subr.bf16.mxu0 0
        %1786 = vmatpush2.bf16.msra.mxu0 0
        %1787 = vmatprep.subr.bf16.mxu0 0
        %1788 = vmatpush2.bf16.msra.mxu0 0
        %1789 = vmatprep.subr.bf16.mxu0 0
        %1790 = vmatpush2.bf16.msra.mxu0 0
        %1791 = vmatprep.mubr.bf16.mxu0 0
        %1792 = vmatmul.mubr.bf16.gmra.mxu0 %v1248
        %v1793 = vpop.f32.mrf.mxu0
        %v1794 = vadd.f32 %v1562, %v1793
        %v1795 = vpop.f32.mrf.mxu0
        %v1796 = vpop.f32.mrf.mxu0
        %v1797 = vpop.f32.mrf.mxu0
        %1798 = vdwg.mxu0
        %v1799 = vsel %vm1107, %v1665, -inf
        %1800 = vmax.xlane.f32.xlu0 %v1799
        %v1801 = vpop.xlane.xlu0 %1800
        %v1802 = vsel %vm1107, %v1708, -inf
        %1803 = vmax.xlane.f32.xlu0 %v1802
        %v1804 = vpop.xlane.xlu0 %1803
        %v1805 = vsel %vm1107, %v1751, -inf
        %1806 = vmax.xlane.f32.xlu0 %v1805
        %v1807 = vpop.xlane.xlu0 %1806
        %v1808 = vsel %vm1107, %v1794, -inf
        %1809 = vmax.xlane.f32.xlu0 %v1808
        %v1810 = vpop.xlane.xlu0 %1809
        %v1811 = vmax.f32 %v1295, %v1801
        %v1812 = vmax.f32 %v1298, %v1804
        %v1813 = vmax.f32 %v1301, %v1807
        %v1814 = vmax.f32 %v1304, %v1810
        %v1815 = vsub.f32 %v1295, %v1811
        %v1816 = vsub.f32 %v1298, %v1812
        %v1817 = vsub.f32 %v1301, %v1813
        %v1818 = vsub.f32 %v1304, %v1814
        %v1819 = vmul.f32 %v1815, 1.442695
        %v1820 = vpow.pop %v1819
        %v1821 = vmul.f32 %v1816, 1.442695
        %v1822 = vpow.pop %v1821
        %v1823 = vmul.f32 %v1817, 1.442695
        %v1824 = vpow.pop %v1823
        %v1825 = vmul.f32 %v1818, 1.442695
        %v1826 = vpow.pop %v1825
        %v1827 = vsub.f32 %v1665, %v1811
        %v1828 = vsub.f32 %v1708, %v1812
        %v1829 = vsub.f32 %v1751, %v1813
        %v1830 = vsub.f32 %v1794, %v1814
        %v1831 = vmul.f32 %v1827, 1.442695
        %v1832 = vpow.pop %v1831
        %v1833 = vmul.f32 %v1828, 1.442695
        %v1834 = vpow.pop %v1833
        %v1835 = vmul.f32 %v1829, 1.442695
        %v1836 = vpow.pop %v1835
        %v1837 = vmul.f32 %v1830, 1.442695
        %v1838 = vpow.pop %v1837
        %v1839 = vmul.f32 %v1820, %v1345
        %v1840 = vmul.f32 %v1822, %v1346
        %v1841 = vmul.f32 %v1824, %v1347
        %v1842 = vmul.f32 %v1826, %v1348
        %v1843 = vsel %vm1107, %v1832, 0.0
        %1844 = vadd.xlane.f32.xlu0 %v1843
        %v1845 = vpop.xlane.xlu0 %1844
        %v1846 = vsel %vm1107, %v1834, 0.0
        %1847 = vadd.xlane.f32.xlu0 %v1846
        %v1848 = vpop.xlane.xlu0 %1847
        %v1849 = vsel %vm1107, %v1836, 0.0
        %1850 = vadd.xlane.f32.xlu0 %v1849
        %v1851 = vpop.xlane.xlu0 %1850
        %v1852 = vsel %vm1107, %v1838, 0.0
        %1853 = vadd.xlane.f32.xlu0 %v1852
        %v1854 = vpop.xlane.xlu0 %1853
        %v1855 = vadd.f32 %v1839, %v1845
        %v1856 = vadd.f32 %v1840, %v1848
        %v1857 = vadd.f32 %v1841, %v1851
        %v1858 = vadd.f32 %v1842, %v1854
        %v1859 = vmul.f32 %v1820, %v1537
        %v1860 = vmul.f32 %v1822, %v1538
        %v1861 = vmul.f32 %v1824, %v1539
        %v1862 = vmul.f32 %v1826, %v1540
        %v1863 = vpack.c.bf16 %v1832, %v1832
        %v1864 = vpack.c.bf16 %v1834, %v1834
        %v1865 = vpack.c.bf16 %v1836, %v1836
        %v1866 = vpack.c.bf16 %v1838, %v1838
        %v1868 = vsel %vm1107, %v1863, 0
        %v1871 = vsel %vm1111, %v1552, 0
        %1873 = vmatprep.subr.bf16.mxu0 0
        %1874 = vmatpush1.bf16.msra.mxu0 0
        %1875 = vmatprep.subr.bf16.mxu0 0
        %1876 = vmatpush1.bf16.msra.mxu0 0
        %1877 = vmatprep.subr.bf16.mxu0 0
        %1878 = vmatpush1.bf16.msra.mxu0 0
        %1879 = vmatprep.subr.bf16.mxu0 0
        %1880 = vmatpush1.bf16.msra.mxu0 0
        %1881 = vmatprep.subr.bf16.mxu0 0
        %1882 = vmatpush1.bf16.msra.mxu0 0
        %1883 = vmatprep.subr.bf16.mxu0 0
        %1884 = vmatpush1.bf16.msra.mxu0 0
        %1885 = vmatprep.subr.bf16.mxu0 0
        %1886 = vmatpush1.bf16.msra.mxu0 0
        %1887 = vmatprep.subr.bf16.mxu0 0
        %1888 = vmatpush1.bf16.msra.mxu0 %v1871
        %1889 = vmatprep.subr.bf16.mxu0 0
        %1890 = vmatpush2.bf16.msra.mxu0 0
        %1891 = vmatprep.subr.bf16.mxu0 0
        %1892 = vmatpush2.bf16.msra.mxu0 0
        %1893 = vmatprep.subr.bf16.mxu0 0
        %1894 = vmatpush2.bf16.msra.mxu0 0
        %1895 = vmatprep.subr.bf16.mxu0 0
        %1896 = vmatpush2.bf16.msra.mxu0 0
        %1897 = vmatprep.subr.bf16.mxu0 0
        %1898 = vmatpush2.bf16.msra.mxu0 0
        %1899 = vmatprep.subr.bf16.mxu0 0
        %1900 = vmatpush2.bf16.msra.mxu0 0
        %1901 = vmatprep.subr.bf16.mxu0 0
        %1902 = vmatpush2.bf16.msra.mxu0 0
        %1903 = vmatprep.subr.bf16.mxu0 0
        %1904 = vmatpush2.bf16.msra.mxu0 0
        %1905 = vmatprep.mubr.bf16.mxu0 0
        %1906 = vmatmul.mubr.bf16.gmra.mxu0 %v1868
        %v1907 = vpop.f32.mrf.mxu0
        %v1908 = vadd.f32 0.0, %v1907
        %v1909 = vpop.f32.mrf.mxu0
        %v1910 = vpop.f32.mrf.mxu0
        %v1911 = vpop.f32.mrf.mxu0
        %1912 = vdwg.mxu0
        %v1914 = vsel %vm1107, %v1864, 0
        %v1917 = vsel %vm1111, %v1555, 0
        %1919 = vmatprep.subr.bf16.mxu0 0
        %1920 = vmatpush1.bf16.msra.mxu0 0
        %1921 = vmatprep.subr.bf16.mxu0 0
        %1922 = vmatpush1.bf16.msra.mxu0 0
        %1923 = vmatprep.subr.bf16.mxu0 0
        %1924 = vmatpush1.bf16.msra.mxu0 0
        %1925 = vmatprep.subr.bf16.mxu0 0
        %1926 = vmatpush1.bf16.msra.mxu0 0
        %1927 = vmatprep.subr.bf16.mxu0 0
        %1928 = vmatpush1.bf16.msra.mxu0 0
        %1929 = vmatprep.subr.bf16.mxu0 0
        %1930 = vmatpush1.bf16.msra.mxu0 0
        %1931 = vmatprep.subr.bf16.mxu0 0
        %1932 = vmatpush1.bf16.msra.mxu0 0
        %1933 = vmatprep.subr.bf16.mxu0 0
        %1934 = vmatpush1.bf16.msra.mxu0 %v1917
        %1935 = vmatprep.subr.bf16.mxu0 0
        %1936 = vmatpush2.bf16.msra.mxu0 0
        %1937 = vmatprep.subr.bf16.mxu0 0
        %1938 = vmatpush2.bf16.msra.mxu0 0
        %1939 = vmatprep.subr.bf16.mxu0 0
        %1940 = vmatpush2.bf16.msra.mxu0 0
        %1941 = vmatprep.subr.bf16.mxu0 0
        %1942 = vmatpush2.bf16.msra.mxu0 0
        %1943 = vmatprep.subr.bf16.mxu0 0
        %1944 = vmatpush2.bf16.msra.mxu0 0
        %1945 = vmatprep.subr.bf16.mxu0 0
        %1946 = vmatpush2.bf16.msra.mxu0 0
        %1947 = vmatprep.subr.bf16.mxu0 0
        %1948 = vmatpush2.bf16.msra.mxu0 0
        %1949 = vmatprep.subr.bf16.mxu0 0
        %1950 = vmatpush2.bf16.msra.mxu0 0
        %1951 = vmatprep.mubr.bf16.mxu0 0
        %1952 = vmatmul.mubr.bf16.gmra.mxu0 %v1914
        %v1953 = vpop.f32.mrf.mxu0
        %v1954 = vadd.f32 0.0, %v1953
        %v1955 = vpop.f32.mrf.mxu0
        %v1956 = vpop.f32.mrf.mxu0
        %v1957 = vpop.f32.mrf.mxu0
        %1958 = vdwg.mxu0
        %v1960 = vsel %vm1107, %v1865, 0
        %v1963 = vsel %vm1111, %v1557, 0
        %1965 = vmatprep.subr.bf16.mxu0 0
        %1966 = vmatpush1.bf16.msra.mxu0 0
        %1967 = vmatprep.subr.bf16.mxu0 0
        %1968 = vmatpush1.bf16.msra.mxu0 0
        %1969 = vmatprep.subr.bf16.mxu0 0
        %1970 = vmatpush1.bf16.msra.mxu0 0
        %1971 = vmatprep.subr.bf16.mxu0 0
        %1972 = vmatpush1.bf16.msra.mxu0 0
        %1973 = vmatprep.subr.bf16.mxu0 0
        %1974 = vmatpush1.bf16.msra.mxu0 0
        %1975 = vmatprep.subr.bf16.mxu0 0
        %1976 = vmatpush1.bf16.msra.mxu0 0
        %1977 = vmatprep.subr.bf16.mxu0 0
        %1978 = vmatpush1.bf16.msra.mxu0 0
        %1979 = vmatprep.subr.bf16.mxu0 0
        %1980 = vmatpush1.bf16.msra.mxu0 %v1963
        %1981 = vmatprep.subr.bf16.mxu0 0
        %1982 = vmatpush2.bf16.msra.mxu0 0
        %1983 = vmatprep.subr.bf16.mxu0 0
        %1984 = vmatpush2.bf16.msra.mxu0 0
        %1985 = vmatprep.subr.bf16.mxu0 0
        %1986 = vmatpush2.bf16.msra.mxu0 0
        %1987 = vmatprep.subr.bf16.mxu0 0
        %1988 = vmatpush2.bf16.msra.mxu0 0
        %1989 = vmatprep.subr.bf16.mxu0 0
        %1990 = vmatpush2.bf16.msra.mxu0 0
        %1991 = vmatprep.subr.bf16.mxu0 0
        %1992 = vmatpush2.bf16.msra.mxu0 0
        %1993 = vmatprep.subr.bf16.mxu0 0
        %1994 = vmatpush2.bf16.msra.mxu0 0
        %1995 = vmatprep.subr.bf16.mxu0 0
        %1996 = vmatpush2.bf16.msra.mxu0 0
        %1997 = vmatprep.mubr.bf16.mxu0 0
        %1998 = vmatmul.mubr.bf16.gmra.mxu0 %v1960
        %v1999 = vpop.f32.mrf.mxu0
        %v2000 = vadd.f32 0.0, %v1999
        %v2001 = vpop.f32.mrf.mxu0
        %v2002 = vpop.f32.mrf.mxu0
        %v2003 = vpop.f32.mrf.mxu0
        %2004 = vdwg.mxu0
        %v2006 = vsel %vm1107, %v1866, 0
        %v2009 = vsel %vm1111, %v1559, 0
        %2011 = vmatprep.subr.bf16.mxu0 0
        %2012 = vmatpush1.bf16.msra.mxu0 0
        %2013 = vmatprep.subr.bf16.mxu0 0
        %2014 = vmatpush1.bf16.msra.mxu0 0
        %2015 = vmatprep.subr.bf16.mxu0 0
        %2016 = vmatpush1.bf16.msra.mxu0 0
        %2017 = vmatprep.subr.bf16.mxu0 0
        %2018 = vmatpush1.bf16.msra.mxu0 0
        %2019 = vmatprep.subr.bf16.mxu0 0
        %2020 = vmatpush1.bf16.msra.mxu0 0
        %2021 = vmatprep.subr.bf16.mxu0 0
        %2022 = vmatpush1.bf16.msra.mxu0 0
        %2023 = vmatprep.subr.bf16.mxu0 0
        %2024 = vmatpush1.bf16.msra.mxu0 0
        %2025 = vmatprep.subr.bf16.mxu0 0
        %2026 = vmatpush1.bf16.msra.mxu0 %v2009
        %2027 = vmatprep.subr.bf16.mxu0 0
        %2028 = vmatpush2.bf16.msra.mxu0 0
        %2029 = vmatprep.subr.bf16.mxu0 0
        %2030 = vmatpush2.bf16.msra.mxu0 0
        %2031 = vmatprep.subr.bf16.mxu0 0
        %2032 = vmatpush2.bf16.msra.mxu0 0
        %2033 = vmatprep.subr.bf16.mxu0 0
        %2034 = vmatpush2.bf16.msra.mxu0 0
        %2035 = vmatprep.subr.bf16.mxu0 0
        %2036 = vmatpush2.bf16.msra.mxu0 0
        %2037 = vmatprep.subr.bf16.mxu0 0
        %2038 = vmatpush2.bf16.msra.mxu0 0
        %2039 = vmatprep.subr.bf16.mxu0 0
        %2040 = vmatpush2.bf16.msra.mxu0 0
        %2041 = vmatprep.subr.bf16.mxu0 0
        %2042 = vmatpush2.bf16.msra.mxu0 0
        %2043 = vmatprep.mubr.bf16.mxu0 0
        %2044 = vmatmul.mubr.bf16.gmra.mxu0 %v2006
        %v2045 = vpop.f32.mrf.mxu0
        %v2046 = vadd.f32 0.0, %v2045
        %v2047 = vpop.f32.mrf.mxu0
        %v2048 = vpop.f32.mrf.mxu0
        %v2049 = vpop.f32.mrf.mxu0
        %2050 = vdwg.mxu0
        %v2051 = vadd.f32 %v1859, %v1908
        %v2052 = vadd.f32 %v1860, %v1954
        %v2053 = vadd.f32 %v1861, %v2000
        %v2054 = vadd.f32 %v1862, %v2046
        %v2055 = vrcp.pop %v1855
        %v2056 = vrcp.pop %v1856
        %v2057 = vrcp.pop %v1857
        %v2058 = vrcp.pop %v1858
        %v2059 = vmul.f32 %v2051, %v2055
        %v2060 = vmul.f32 %v2052, %v2056
        %v2061 = vmul.f32 %v2053, %v2057
        %v2062 = vmul.f32 %v2054, %v2058
        %v2063 = vcombine.low %v2059, %v2061
        %v2064 = vcombine.high %v2059, %v2061
        %v2066 = vunpack.c.l.s4 1983009808
        %v2067 = vunpack.c.0.s8 %v2066
        %v2068 = vlaneseq
        %v2069 = vshrl.u32 %v2068, 7
        %v2070 = vsub.s32 %v2067, %v2069
        %v2071 = vrot.slane %v2063, %v2070
        %v2073 = vunpack.c.l.s4 1983009808
        %v2074 = vunpack.c.0.s8 %v2073
        %v2075 = vlaneseq
        %v2076 = vshrl.u32 %v2075, 7
        %v2077 = vsub.s32 %v2074, %v2076
        %v2078 = vrot.slane %v2064, %v2077
        %v2079 = vcombine.low %v2060, %v2062
        %v2080 = vcombine.high %v2060, %v2062
        %v2082 = vunpack.c.l.s4 1983009808
        %v2083 = vunpack.c.0.s8 %v2082
        %v2084 = vlaneseq
        %v2085 = vshrl.u32 %v2084, 7
        %v2086 = vsub.s32 %v2083, %v2085
        %v2087 = vrot.slane %v2079, %v2086
        %v2089 = vunpack.c.l.s4 1983009808
        %v2090 = vunpack.c.0.s8 %v2089
        %v2091 = vlaneseq
        %v2092 = vshrl.u32 %v2091, 7
        %v2093 = vsub.s32 %v2090, %v2092
        %v2094 = vrot.slane %v2080, %v2093
        %v2095 = vcombine.low %v2071, %v2087
        %v2096 = vcombine.high %v2071, %v2087
        %v2098 = vunpack.c.l.s4 1934713408
        %v2099 = vunpack.c.0.s8 %v2098
        %v2100 = vlaneseq
        %v2101 = vshrl.u32 %v2100, 7
        %v2102 = vsub.s32 %v2099, %v2101
        %v2103 = vrot.slane %v2095, %v2102
        %v2105 = vunpack.c.l.s4 1934713408
        %v2106 = vunpack.c.0.s8 %v2105
        %v2107 = vlaneseq
        %v2108 = vshrl.u32 %v2107, 7
        %v2109 = vsub.s32 %v2106, %v2108
        %v2110 = vrot.slane %v2096, %v2109
        %v2111 = vcombine.low %v2078, %v2094
        %v2112 = vcombine.high %v2078, %v2094
        %v2114 = vunpack.c.l.s4 1934713408
        %v2115 = vunpack.c.0.s8 %v2114
        %v2116 = vlaneseq
        %v2117 = vshrl.u32 %v2116, 7
        %v2118 = vsub.s32 %v2115, %v2117
        %v2119 = vrot.slane %v2111, %v2118
        %v2121 = vunpack.c.l.s4 1934713408
        %v2122 = vunpack.c.0.s8 %v2121
        %v2123 = vlaneseq
        %v2124 = vshrl.u32 %v2123, 7
        %v2125 = vsub.s32 %v2122, %v2124
        %v2126 = vrot.slane %v2112, %v2125
        %v2127 = vcombine.high %v2103, 0.0
        %v2128 = vcombine.high %v2110, 0.0
        %v2129 = vcombine.high %v2119, 0.0
        %v2130 = vcombine.high %v2126, 0.0
        %v2131 = vcombine.low %v2103, %v2110
        %v2133 = vunpack.c.l.s4 1983009808
        %v2134 = vunpack.c.0.s8 %v2133
        %v2135 = vlaneseq
        %v2136 = vshrl.u32 %v2135, 7
        %v2137 = vsub.s32 %v2134, %v2136
        %v2138 = vrot.slane %v2131, %v2137
        %v2139 = vcombine.low %v2127, %v2128
        %v2141 = vunpack.c.l.s4 1983009808
        %v2142 = vunpack.c.0.s8 %v2141
        %v2143 = vlaneseq
        %v2144 = vshrl.u32 %v2143, 7
        %v2145 = vsub.s32 %v2142, %v2144
        %v2146 = vrot.slane %v2139, %v2145
        %v2147 = vcombine.low %v2119, %v2126
        %v2149 = vunpack.c.l.s4 1983009808
        %v2150 = vunpack.c.0.s8 %v2149
        %v2151 = vlaneseq
        %v2152 = vshrl.u32 %v2151, 7
        %v2153 = vsub.s32 %v2150, %v2152
        %v2154 = vrot.slane %v2147, %v2153
        %v2155 = vcombine.low %v2129, %v2130
        %v2157 = vunpack.c.l.s4 1983009808
        %v2158 = vunpack.c.0.s8 %v2157
        %v2159 = vlaneseq
        %v2160 = vshrl.u32 %v2159, 7
        %v2161 = vsub.s32 %v2158, %v2160
        %v2162 = vrot.slane %v2155, %v2161
        %v2163 = vcombine.low %v2138, %v2146
        %v2164 = vcombine.high %v2138, %v2146
        %v2166 = vunpack.c.l.s4 1934713408
        %v2167 = vunpack.c.0.s8 %v2166
        %v2168 = vlaneseq
        %v2169 = vshrl.u32 %v2168, 7
        %v2170 = vsub.s32 %v2167, %v2169
        %v2171 = vrot.slane %v2163, %v2170
        %v2173 = vunpack.c.l.s4 1934713408
        %v2174 = vunpack.c.0.s8 %v2173
        %v2175 = vlaneseq
        %v2176 = vshrl.u32 %v2175, 7
        %v2177 = vsub.s32 %v2174, %v2176
        %v2178 = vrot.slane %v2164, %v2177
        %v2179 = vcombine.low %v2154, %v2162
        %v2180 = vcombine.high %v2154, %v2162
        %v2182 = vunpack.c.l.s4 1934713408
        %v2183 = vunpack.c.0.s8 %v2182
        %v2184 = vlaneseq
        %v2185 = vshrl.u32 %v2184, 7
        %v2186 = vsub.s32 %v2183, %v2185
        %v2187 = vrot.slane %v2179, %v2186
        %v2189 = vunpack.c.l.s4 1934713408
        %v2190 = vunpack.c.0.s8 %v2189
        %v2191 = vlaneseq
        %v2192 = vshrl.u32 %v2191, 7
        %v2193 = vsub.s32 %v2190, %v2192
        %v2194 = vrot.slane %v2180, %v2193
        %v2195 = vcombine.low %v2171, %v2187
        %v2196 = vcombine.high %v2171, %v2187
        %v2197 = vcombine.low %v2178, %v2194
        %v2198 = vcombine.high %v2178, %v2194
        %2200 = vrot.lane.b32.xlu0 %v2196, 8
        %v2201 = vpop.permute.xlu0 %2200
        %2204 = vrot.lane.b32.xlu0 %v2197, 16
        %v2205 = vpop.permute.xlu0 %2204
        %2208 = vrot.lane.b32.xlu0 %v2198, 24
        %v2209 = vpop.permute.xlu0 %2208
        %v2211 = vsel %vm1107, %v2195, %v2201
        %vm2212 = vcmask 130048
        %v2213 = vsel %vm2212, %v2211, %v2205
        %vm2214 = vcmask 195584
        %v2215 = vsel %vm2214, %v2213, %v2209
        %v2216 = vpack.c.bf16 %v2215, %v2215
        %v2217 = vld [vmem:[#allocation9] sm:$0xf]
        %v2218 = vld [vmem:[#allocation9 + $0x4] sm:$0xf]
        %v2219 = vld [vmem:[#allocation9 + $0x8] sm:$0xf]
        %v2220 = vld [vmem:[#allocation9 + $0xc] sm:$0xf]
        %v2221 = vld [vmem:[%s7] sm:$0x1]
        %v2223 = vlaneseq
        %v2224 = vshrl.u32 %v2223, 7
        %v2225 = vsub.s32 0, %v2224
        %v2226 = vrot.slane %v2221, %v2225
        %v2232 = vunpack.c.l.b16 %v2217
        %v2233 = vunpack.c.l.b16 %v2218
        %v2234 = vunpack.c.l.b16 %v2219
        %v2235 = vunpack.c.l.b16 %v2220
        %v2236 = vpack.c.b16 %v2233, %v2232
        %v2237 = vpack.c.b16 %v2235, %v2234
        %v2241 = vsel %vm823, %v2216, 0
        %2243 = vmatprep.subr.bf16.mxu0 0
        %2244 = vmatpush1.bf16.msra.mxu0 0
        %2245 = vmatprep.subr.bf16.mxu0 0
        %2246 = vmatpush1.bf16.msra.mxu0 0
        %2247 = vmatprep.subr.bf16.mxu0 0
        %2248 = vmatpush1.bf16.msra.mxu0 0
        %2249 = vmatprep.subr.bf16.mxu0 0
        %2250 = vmatpush1.bf16.msra.mxu0 0
        %2251 = vmatprep.subr.bf16.mxu0 0
        %2252 = vmatpush1.bf16.msra.mxu0 0
        %2253 = vmatprep.subr.bf16.mxu0 0
        %2254 = vmatpush1.bf16.msra.mxu0 0
        %2255 = vmatprep.subr.bf16.mxu0 0
        %2256 = vmatpush1.bf16.msra.mxu0 %v2237
        %2257 = vmatprep.subr.bf16.mxu0 0
        %2258 = vmatpush1.bf16.msra.mxu0 %v2236
        %2259 = vmatprep.subr.bf16.mxu0 0
        %2260 = vmatpush2.bf16.msra.mxu0 0
        %2261 = vmatprep.subr.bf16.mxu0 0
        %2262 = vmatpush2.bf16.msra.mxu0 0
        %2263 = vmatprep.subr.bf16.mxu0 0
        %2264 = vmatpush2.bf16.msra.mxu0 0
        %2265 = vmatprep.subr.bf16.mxu0 0
        %2266 = vmatpush2.bf16.msra.mxu0 0
        %2267 = vmatprep.subr.bf16.mxu0 0
        %2268 = vmatpush2.bf16.msra.mxu0 0
        %2269 = vmatprep.subr.bf16.mxu0 0
        %2270 = vmatpush2.bf16.msra.mxu0 0
        %2271 = vmatprep.subr.bf16.mxu0 0
        %2272 = vmatpush2.bf16.msra.mxu0 0
        %2273 = vmatprep.subr.bf16.mxu0 0
        %2274 = vmatpush2.bf16.msra.mxu0 0
        %2275 = vmatprep.mubr.bf16.mxu0 0
        %2276 = vmatmul.mubr.bf16.gmra.mxu0 %v2241
        %v2277 = vpop.f32.mrf.mxu0
        %v2278 = vadd.f32 %v2226, %v2277
        %v2279 = vpop.f32.mrf.mxu0
        %v2280 = vpop.f32.mrf.mxu0
        %v2281 = vpop.f32.mrf.mxu0
        %2282 = vdwg.mxu0
        %v2283 = vadd.f32 %v2278, %v645
        %v2284 = vld [vmem:[%s8] sm:$0x1]
        %v2285 = vld [vmem:[%s9] sm:$0x1]
        %v2286 = vsel %vm823, %v2283, 0.0
        %2287 = vadd.xlane.f32.xlu0 %v2286
        %v2288 = vpop.xlane.xlu0 %2287
        %v2289 = vrcp.pop 32.0
        %v2290 = vmul.f32 %v2288, %v2289
        %v2291 = vsub.f32 %v2283, %v2290
        %v2292 = vmul.f32 %v2291, %v2291
        %v2293 = vsel %vm823, %v2292, 0.0
        %2294 = vadd.xlane.f32.xlu0 %v2293
        %v2295 = vpop.xlane.xlu0 %2294
        %v2296 = vmul.f32 %v2295, %v2289
        %v2297 = vadd.f32 %v2296, 1e-05
        %v2298 = vrsqrt.pop %v2297
        %v2299 = vmul.f32 %v2291, %v2298
        %v2301 = vlaneseq
        %v2302 = vshrl.u32 %v2301, 7
        %v2303 = vsub.s32 0, %v2302
        %v2304 = vrot.slane %v2284, %v2303
        %v2306 = vmul.f32 %v2299, %v2304
        %v2308 = vlaneseq
        %v2309 = vshrl.u32 %v2308, 7
        %v2310 = vsub.s32 0, %v2309
        %v2311 = vrot.slane %v2285, %v2310
        %v2313 = vadd.f32 %v2306, %v2311
        %v2314 = vpack.c.bf16 %v2313, %v2313
        %v2315 = vld [vmem:[#allocation10] sm:$0xf]
        %v2316 = vld [vmem:[#allocation10 + $0x4] sm:$0xf]
        %v2317 = vld [vmem:[#allocation10 + $0x8] sm:$0xf]
        %v2318 = vld [vmem:[#allocation10 + $0xc] sm:$0xf]
        %v2319 = vld [vmem:[%s13] sm:$0x1]
        %v2321 = vlaneseq
        %v2322 = vshrl.u32 %v2321, 7
        %v2323 = vsub.s32 0, %v2322
        %v2324 = vrot.slane %v2319, %v2323
        %v2330 = vunpack.c.l.b16 %v2315
        %v2331 = vunpack.c.l.b16 %v2316
        %v2332 = vunpack.c.l.b16 %v2317
        %v2333 = vunpack.c.l.b16 %v2318
        %v2334 = vpack.c.b16 %v2331, %v2330
        %v2335 = vpack.c.b16 %v2333, %v2332
        %v2339 = vsel %vm823, %v2314, 0
        %2341 = vmatprep.subr.bf16.mxu0 0
        %2342 = vmatpush1.bf16.msra.mxu0 0
        %2343 = vmatprep.subr.bf16.mxu0 0
        %2344 = vmatpush1.bf16.msra.mxu0 0
        %2345 = vmatprep.subr.bf16.mxu0 0
        %2346 = vmatpush1.bf16.msra.mxu0 0
        %2347 = vmatprep.subr.bf16.mxu0 0
        %2348 = vmatpush1.bf16.msra.mxu0 0
        %2349 = vmatprep.subr.bf16.mxu0 0
        %2350 = vmatpush1.bf16.msra.mxu0 0
        %2351 = vmatprep.subr.bf16.mxu0 0
        %2352 = vmatpush1.bf16.msra.mxu0 0
        %2353 = vmatprep.subr.bf16.mxu0 0
        %2354 = vmatpush1.bf16.msra.mxu0 %v2335
        %2355 = vmatprep.subr.bf16.mxu0 0
        %2356 = vmatpush1.bf16.msra.mxu0 %v2334
        %2357 = vmatprep.subr.bf16.mxu0 0
        %2358 = vmatpush2.bf16.msra.mxu0 0
        %2359 = vmatprep.subr.bf16.mxu0 0
        %2360 = vmatpush2.bf16.msra.mxu0 0
        %2361 = vmatprep.subr.bf16.mxu0 0
        %2362 = vmatpush2.bf16.msra.mxu0 0
        %2363 = vmatprep.subr.bf16.mxu0 0
        %2364 = vmatpush2.bf16.msra.mxu0 0
        %2365 = vmatprep.subr.bf16.mxu0 0
        %2366 = vmatpush2.bf16.msra.mxu0 0
        %2367 = vmatprep.subr.bf16.mxu0 0
        %2368 = vmatpush2.bf16.msra.mxu0 0
        %2369 = vmatprep.subr.bf16.mxu0 0
        %2370 = vmatpush2.bf16.msra.mxu0 0
        %2371 = vmatprep.subr.bf16.mxu0 0
        %2372 = vmatpush2.bf16.msra.mxu0 0
        %2373 = vmatprep.mubr.bf16.mxu0 0
        %2374 = vmatmul.mubr.bf16.gmra.mxu0 %v2339
        %v2375 = vpop.f32.mrf.mxu0
        %v2376 = vadd.f32 %v2324, %v2375
        %v2377 = vpop.f32.mrf.mxu0
        %v2378 = vpop.f32.mrf.mxu0
        %v2379 = vpop.f32.mrf.mxu0
        %2380 = vdwg.mxu0
        %v2381 = vmax.f32 %v2376, 0.0
        %v2382 = vpack.c.bf16 %v2381, %v2381
        %v2383 = vld [vmem:[%s14] sm:$0xf]
        %v2384 = vld [vmem:[%s14 + $0x4] sm:$0xf]
        %v2385 = vld [vmem:[%s14 + $0x8] sm:$0xf]
        %v2386 = vld [vmem:[%s14 + $0xc] sm:$0xf]
        %v2387 = vld [vmem:[%s14 + $0x10] sm:$0xf]
        %v2388 = vld [vmem:[%s14 + $0x14] sm:$0xf]
        %v2389 = vld [vmem:[%s14 + $0x18] sm:$0xf]
        %v2390 = vld [vmem:[%s14 + $0x1c] sm:$0xf]
        %v2391 = vld [vmem:[%s14 + $0x20] sm:$0xf]
        %v2392 = vld [vmem:[%s14 + $0x24] sm:$0xf]
        %v2393 = vld [vmem:[%s14 + $0x28] sm:$0xf]
        %v2394 = vld [vmem:[%s14 + $0x2c] sm:$0xf]
        %v2395 = vld [vmem:[%s14 + $0x30] sm:$0xf]
        %v2396 = vld [vmem:[%s14 + $0x34] sm:$0xf]
        %v2397 = vld [vmem:[%s14 + $0x38] sm:$0xf]
        %v2398 = vld [vmem:[%s14 + $0x3c] sm:$0xf]
        %v2399 = vld [vmem:[%s15] sm:$0x1]
        %v2401 = vlaneseq
        %v2402 = vshrl.u32 %v2401, 7
        %v2403 = vsub.s32 0, %v2402
        %v2404 = vrot.slane %v2399, %v2403
        %v2422 = vunpack.c.l.b16 %v2383
        %v2423 = vunpack.c.l.b16 %v2384
        %v2424 = vunpack.c.l.b16 %v2385
        %v2425 = vunpack.c.l.b16 %v2386
        %v2426 = vunpack.c.l.b16 %v2387
        %v2427 = vunpack.c.l.b16 %v2388
        %v2428 = vunpack.c.l.b16 %v2389
        %v2429 = vunpack.c.l.b16 %v2390
        %v2430 = vunpack.c.l.b16 %v2391
        %v2431 = vunpack.c.l.b16 %v2392
        %v2432 = vunpack.c.l.b16 %v2393
        %v2433 = vunpack.c.l.b16 %v2394
        %v2434 = vunpack.c.l.b16 %v2395
        %v2435 = vunpack.c.l.b16 %v2396
        %v2436 = vunpack.c.l.b16 %v2397
        %v2437 = vunpack.c.l.b16 %v2398
        %v2438 = vpack.c.b16 %v2423, %v2422
        %v2439 = vpack.c.b16 %v2425, %v2424
        %v2440 = vpack.c.b16 %v2427, %v2426
        %v2441 = vpack.c.b16 %v2429, %v2428
        %v2442 = vpack.c.b16 %v2431, %v2430
        %v2443 = vpack.c.b16 %v2433, %v2432
        %v2444 = vpack.c.b16 %v2435, %v2434
        %v2445 = vpack.c.b16 %v2437, %v2436
        %2454 = vmatprep.subr.bf16.mxu0 0
        %2455 = vmatpush1.bf16.msra.mxu0 %v2445
        %2456 = vmatprep.subr.bf16.mxu0 0
        %2457 = vmatpush1.bf16.msra.mxu0 %v2444
        %2458 = vmatprep.subr.bf16.mxu0 0
        %2459 = vmatpush1.bf16.msra.mxu0 %v2443
        %2460 = vmatprep.subr.bf16.mxu0 0
        %2461 = vmatpush1.bf16.msra.mxu0 %v2442
        %2462 = vmatprep.subr.bf16.mxu0 0
        %2463 = vmatpush1.bf16.msra.mxu0 %v2441
        %2464 = vmatprep.subr.bf16.mxu0 0
        %2465 = vmatpush1.bf16.msra.mxu0 %v2440
        %2466 = vmatprep.subr.bf16.mxu0 0
        %2467 = vmatpush1.bf16.msra.mxu0 %v2439
        %2468 = vmatprep.subr.bf16.mxu0 0
        %2469 = vmatpush1.bf16.msra.mxu0 %v2438
        %2470 = vmatprep.subr.bf16.mxu0 0
        %2471 = vmatpush2.bf16.msra.mxu0 0
        %2472 = vmatprep.subr.bf16.mxu0 0
        %2473 = vmatpush2.bf16.msra.mxu0 0
        %2474 = vmatprep.subr.bf16.mxu0 0
        %2475 = vmatpush2.bf16.msra.mxu0 0
        %2476 = vmatprep.subr.bf16.mxu0 0
        %2477 = vmatpush2.bf16.msra.mxu0 0
        %2478 = vmatprep.subr.bf16.mxu0 0
        %2479 = vmatpush2.bf16.msra.mxu0 0
        %2480 = vmatprep.subr.bf16.mxu0 0
        %2481 = vmatpush2.bf16.msra.mxu0 0
        %2482 = vmatprep.subr.bf16.mxu0 0
        %2483 = vmatpush2.bf16.msra.mxu0 0
        %2484 = vmatprep.subr.bf16.mxu0 0
        %2485 = vmatpush2.bf16.msra.mxu0 0
        %2486 = vmatprep.mubr.bf16.mxu0 0
        %2487 = vmatmul.mubr.bf16.gmra.mxu0 %v2382
        %v2488 = vpop.f32.mrf.mxu0
        %v2489 = vadd.f32 %v2404, %v2488
        %v2490 = vpop.f32.mrf.mxu0
        %v2491 = vpop.f32.mrf.mxu0
        %v2492 = vpop.f32.mrf.mxu0
        %2493 = vdwg.mxu0
        %v2494 = vadd.f32 %v2489, %v2313
        %v2495 = vld [vmem:[%s10] sm:$0x1]
        %v2496 = vld [vmem:[%s11] sm:$0x1]
        %v2497 = vsel %vm823, %v2494, 0.0
        %2498 = vadd.xlane.f32.xlu0 %v2497
        %v2499 = vpop.xlane.xlu0 %2498
        %v2500 = vmul.f32 %v2499, %v2289
        %v2501 = vsub.f32 %v2494, %v2500
        %v2502 = vmul.f32 %v2501, %v2501
        %v2503 = vsel %vm823, %v2502, 0.0
        %2504 = vadd.xlane.f32.xlu0 %v2503
        %v2505 = vpop.xlane.xlu0 %2504
        %v2506 = vmul.f32 %v2505, %v2289
        %v2507 = vadd.f32 %v2506, 1e-05
        %v2508 = vrsqrt.pop %v2507
        %v2509 = vmul.f32 %v2501, %v2508
        %v2511 = vlaneseq
        %v2512 = vshrl.u32 %v2511, 7
        %v2513 = vsub.s32 0, %v2512
        %v2514 = vrot.slane %v2495, %v2513
        %v2516 = vmul.f32 %v2509, %v2514
        %v2518 = vlaneseq
        %v2519 = vshrl.u32 %v2518, 7
        %v2520 = vsub.s32 0, %v2519
        %v2521 = vrot.slane %v2496, %v2520
        %v2523 = vadd.f32 %v2516, %v2521
        %v2524 = vpack.c.bf16 %v2523, %v2523
        %vm2525 = vcmask 257024
        %2526 = vst.msk [vmem:[%s625] sm:$0xf] %vm2525, %v2524
        %s2527 = sand.u32 %s408, 1
        %s2528 = scalar_lea.sflag [#allocation6], %s2527
        %s2529 = sand.u32 %s408, 1
        %s2530 = smul.addr %s2529, 4
        %s2531 = scalar_lea.vmem [#allocation12], %s2530
        // Predicated region
        $region105: #{tpu_custom_call.1} parent=83 // pred_check
          %p2532 = pneg %p418
        $region106: #{tpu_custom_call.1} parent=83 // pred_check_branch
          %2534 = sbr.rel (%p2532) target = $region108
        $region107: #{tpu_custom_call.1} parent=83 // pred_region
          %s2536 = ssub.s32 64, 64
          %2537 = vsyncadd %s2528, %s2536
          %s2538 = smul.addr %s37, 2
          %s2539 = sadd.s32 %s38, %s2538
          %s2540 = smul.addr %s2539, 64
          %s2541 = scalar_lea.hbm %s16, %s2540
          %s2543 = sshll.u32 %s2531, 4
          %s2544 = int_to_ptr.vmem [resolvable:$true] %s2543
          %2546 = dma.vmem_to_hbm [thread:$0]  %s2544, 64, %s2541, %s2528
        $region108: #{tpu_custom_call.1} parent=83 // pred_fallthru
          _
      $region84: #{tpu_custom_call.1} parent=5 // pred_fallthru
        _
      %p2547 = scmp.le.s32.totalorder 2, %s28
      // Predicated region
      $region109: #{tpu_custom_call.1} parent=5 // pred_check
        %p2548 = pneg %p2547
      $region110: #{tpu_custom_call.1} parent=5 // pred_check_branch
        %2550 = sbr.rel (%p2548) target = $region112
      $region111: #{tpu_custom_call.1} parent=5 // pred_region
        %s2551 = ssub.s32 %s28, 2
        // Predicated region
        $region113: #{tpu_custom_call.1} parent=111 // pred_check
          %p2552 = pneg %p424
        $region114: #{tpu_custom_call.1} parent=111 // pred_check_branch
          %2554 = sbr.rel (%p2552) target = $region116
        $region115: #{tpu_custom_call.1} parent=111 // pred_region
          %s2555 = sand.u32 %s409, 1
          %s2556 = scalar_lea.sflag [#allocation6], %s2555
          %s2557 = sand.u32 %s409, 1
          %s2558 = smul.addr %s2557, 4
          %s2559 = scalar_lea.vmem [#allocation12], %s2558
          %2560 = dma.done %s2556, 64
        $region116: #{tpu_custom_call.1} parent=111 // pred_fallthru
          _
      $region112: #{tpu_custom_call.1} parent=5 // pred_fallthru
        _
    $region6: #{tpu_custom_call.1} parent=1 // loop_footer
      %s32 = sadd.s32 1, %s28
    $region7: #{tpu_custom_call.1} parent=1 // loop_footer_branch
      %27 = sbr.rel target = $region3
    $region8: #{tpu_custom_call.1} parent=1 // loop_exit
      _
    %2561 = vsyncpa [#allocation5], 1
    %s2562 = scalar_lea.sflag [#allocation5], 1
    %2563 = vsyncpa %s2562, 1
    %2564 = vsyncpa [#allocation8], 1
    %2565 = vsyncpa [#allocation11], 1
    %2566 = vsyncpa [#allocation6], 1
    %s2567 = scalar_lea.sflag [#allocation6], 1
    %2568 = vsyncpa %s2567, 1

// kernel: tpu_custom_call.1
$region0: #{tpu_custom_call.1}
  #allocation0 [shape = 'u32[]', space=smem, size = 0x4, offset = 0x4, fixed_abs, tag = 'smem constant byte address 0x4 - core index']
  #allocation1 [shape = 'u32[144,128]{1,0:T(1,128)}', space=vmem, size = 0x12000, scoped, tag = 'internal scratch']
  #allocation2 [shape = 'bf16[16,32]{1,0:T(8,128)(2,1)}', space=vmem, size = 0x1000, scoped, tag = 'scratch operand']
  #allocation3 [shape = 'bf16[16,32]{1,0:T(8,128)(2,1)}', space=vmem, size = 0x1000, scoped, tag = 'scratch operand']
  %s0 = inlined_call_operand.vmem [shape: f32[2,16,32], index: 0, kind: input, shape index: {}]
  %s1 = inlined_call_operand.vmem [shape: bf16[2,16,32], index: 1, kind: input, shape index: {}]
  %s2 = inlined_call_operand.vmem [shape: bf16[2,16,32], index: 2, kind: input, shape index: {}]
  %s3 = inlined_call_operand.vmem [shape: bf16[32,32], index: 3, kind: input, shape index: {}]
  %s4 = inlined_call_operand.hbm [shape: bf16[32,32], index: 4, kind: input, shape index: {}]
  %s5 = inlined_call_operand.hbm [shape: bf16[32,32], index: 5, kind: input, shape index: {}]
  %s6 = inlined_call_operand.hbm [shape: bf16[32,32], index: 6, kind: input, shape index: {}]
  %s7 = inlined_call_operand.vmem [shape: f32[1,32], index: 7, kind: input, shape index: {}]
  %s8 = inlined_call_operand.vmem [shape: f32[1,32], index: 8, kind: input, shape index: {}]
  %s9 = inlined_call_operand.vmem [shape: f32[1,32], index: 9, kind: input, shape index: {}]
  %s10 = inlined_call_operand.vmem [shape: f32[1,32], index: 10, kind: input, shape index: {}]
  %s11 = inlined_call_operand.vmem [shape: f32[1,32], index: 11, kind: input, shape index: {}]
  %s12 = inlined_call_operand.hbm [shape: bf16[32,128], index: 12, kind: input, shape index: {}]
  %s13 = inlined_call_operand.vmem [shape: f32[1,128], index: 13, kind: input, shape index: {}]
  %s14 = inlined_call_operand.vmem [shape: bf16[128,32], index: 14, kind: input, shape index: {}]
  %s15 = inlined_call_operand.vmem [shape: f32[1,32], index: 15, kind: input, shape index: {}]
  %s16 = inlined_call_operand.hbm [shape: bf16[2,16,32], index: 16, kind: output, shape index: {}]
  %s17 = sld [smem:[#allocation0]]
  $region117: #{tpu_custom_call.1} parent=0
    _
  %s19 = ssub.s32 1, %s17
  %s20 = scalar_select 0, %s19, %s17
  $region1: #{tpu_custom_call.1} parent=0
    #allocation4 [shape = 'u8[8192]{0}', space=vmem, size = 0x2000, scoped, tag = 'input window, operand 4, single buffered']
    #allocation5 [shape = 's32[2]{0}', space=sflag, size = 0x8, scoped, tag = 'scoped memory for tpu_custom_call.1']
    #allocation6 [shape = 's32[2]{0}', space=sflag, size = 0x8, scoped, tag = 'scoped memory for tpu_custom_call.1']
    #allocation7 [shape = 'u8[8192]{0}', space=vmem, size = 0x2000, scoped, tag = 'input window, operand 5, single buffered']
    #allocation8 [shape = 's32[1]{0}', space=sflag, size = 0x4, scoped, tag = 'scoped memory for tpu_custom_call.1']
    #allocation9 [shape = 'u8[8192]{0}', space=vmem, size = 0x2000, scoped, tag = 'input window, operand 6, single buffered']
    #allocation10 [shape = 'u8[8192]{0}', space=vmem, size = 0x2000, scoped, tag = 'input window, operand 12, single buffered']
    #allocation11 [shape = 's32[1]{0}', space=sflag, size = 0x4, scoped, tag = 'scoped memory for tpu_custom_call.1']
    #allocation12 [shape = 'u8[4096]{0}', space=vmem, size = 0x1000, scoped, tag = 'output window, operand 0']
    %21 = vsyncpa [#allocation5], 0
    %22 = vsyncpa [#allocation8], 0
    %23 = vsyncpa [#allocation11], 0
    %24 = vsyncpa [#allocation6], 0
    %s25 = scalar_lea.sflag [#allocation6], 1
    %26 = vsyncpa %s25, 0
    loop: start=0, step=1, limit=6
    $region2: #{tpu_custom_call.1} parent=1 // loop_pre_header
      _
    $region3: #{tpu_custom_call.1} parent=1 // loop_header
      %s28 = sphi 0, %s32
      %p29 = scmp.ge.s32.totalorder %s28, 6
      %s35 = sphi 0, %s47
      %s36 = sphi 0, %s43
      %s37 = sphi 0, %s35
      %s38 = sphi 0, %s36
      %s39 = sphi 0, %s37
      %s40 = sphi 0, %s38
      %s52 = sphi 0, %s54
      %s55 = sphi 0, %s52
      %s56 = sphi 0, %s55
      %s72 = sphi 0, %s56
      %s78 = sphi 0, %s80
      %s81 = sphi 0, %s78
      %s82 = sphi 0, %s81
      %s98 = sphi 0, %s82
      %s104 = sphi 0, %s106
      %s107 = sphi 0, %s104
      %s108 = sphi 0, %s107
      %s124 = sphi 0, %s108
      %s128 = sphi 0, %s128
      %s130 = sphi 0, %s128
      %s131 = sphi 0, %s130
      %s145 = sphi 0, %s131
      %s149 = sphi 0, %s149
      %s151 = sphi 0, %s149
      %s152 = sphi 0, %s151
      %s166 = sphi 0, %s152
      %s170 = sphi 0, %s170
      %s172 = sphi 0, %s170
      %s173 = sphi 0, %s172
      %s187 = sphi 0, %s173
      %s191 = sphi 0, %s191
      %s193 = sphi 0, %s191
      %s194 = sphi 0, %s193
      %s208 = sphi 0, %s194
      %s212 = sphi 0, %s212
      %s214 = sphi 0, %s212
      %s215 = sphi 0, %s214
      %s229 = sphi 0, %s215
      %s233 = sphi 0, %s233
      %s235 = sphi 0, %s233
      %s236 = sphi 0, %s235
      %s250 = sphi 0, %s236
      %s254 = sphi 0, %s254
      %s256 = sphi 0, %s254
      %s257 = sphi 0, %s256
      %s271 = sphi 0, %s257
      %s275 = sphi 0, %s275
      %s277 = sphi 0, %s275
      %s278 = sphi 0, %s277
      %s292 = sphi 0, %s278
      %s296 = sphi 0, %s296
      %s298 = sphi 0, %s296
      %s299 = sphi 0, %s298
      %s313 = sphi 0, %s299
      %s317 = sphi 0, %s317
      %s319 = sphi 0, %s317
      %s320 = sphi 0, %s319
      %s334 = sphi 0, %s320
      %s338 = sphi 0, %s338
      %s340 = sphi 0, %s338
      %s341 = sphi 0, %s340
      %s355 = sphi 0, %s341
      %s359 = sphi 0, %s359
      %s361 = sphi 0, %s359
      %s362 = sphi 0, %s361
      %s376 = sphi 0, %s362
      %s380 = sphi 0, %s380
      %s382 = sphi 0, %s380
      %s383 = sphi 0, %s382
      %s397 = sphi 0, %s383
      %s405 = sphi 0, %s407
      %s408 = sphi 0, %s405
      %s409 = sphi 0, %s408
      %s425 = sphi 0, %s409
    $region4: #{tpu_custom_call.1} parent=1 // loop_header_branch
      %31 = sbr.rel (%p29) target = $region8
    $region5: #{tpu_custom_call.1} parent=1 // loop_body
      %s33 = ssub.s32 %s28, 1
      %s34 = ssub.s32 %s28, 2
      %s41 = sadd.s32 1, %s36
      %p42 = scmp.ge.s32.totalorder %s41, 2
      %s43 = scalar_select %p42, 0, %s41
      %s44 = sadd.s32 1, %s35
      %s45 = scalar_select %p42, %s44, %s35
      %p46 = scmp.ge.s32.totalorder %s45, 2
      %s47 = scalar_select %p46, 0, %s45
      %s48 = ssub.s32 %s35, %s47
      %s49 = ssub.s32 %s36, %s43
      %s50 = sor.u32 %s48, %s49
      %p51 = scmp.eq.s32.totalorder %s50, 0
      %s53 = sadd.s32 %s52, 1
      %s54 = scalar_select %p51, %s52, %s53
      %p57 = pneg %p51
      %p58 = scmp.eq.s32.totalorder %s28, 3
      %p59 = por %p57, %p58
      %p60 = scmp.ne.s32.totalorder %s52, %s55
      %p61 = scmp.eq.s32.totalorder %s28, 0
      %p62 = por %p60, %p61
      %p63 = scmp.ne.s32.totalorder %s52, %s55
      %p64 = scmp.eq.s32.totalorder %s33, 3
      %p65 = por %p63, %p64
      %p66 = scmp.ne.s32.totalorder %s55, %s56
      %p67 = scmp.eq.s32.totalorder %s33, 0
      %p68 = por %p66, %p67
      %p69 = scmp.ne.s32.totalorder %s55, %s56
      %p70 = scmp.eq.s32.totalorder %s34, 3
      %p71 = por %p69, %p70
      %p73 = scmp.ne.s32.totalorder %s56, %s72
      %p74 = scmp.eq.s32.totalorder %s34, 0
      %p75 = por %p73, %p74
      %s76 = ssub.s32 %s35, %s47
      %p77 = scmp.eq.s32.totalorder %s76, 0
      %s79 = sadd.s32 %s78, 1
      %s80 = scalar_select %p77, %s78, %s79
      %p83 = pneg %p77
      %p84 = scmp.eq.s32.totalorder %s28, 3
      %p85 = por %p83, %p84
      %p86 = scmp.ne.s32.totalorder %s78, %s81
      %p87 = scmp.eq.s32.totalorder %s28, 0
      %p88 = por %p86, %p87
      %p89 = scmp.ne.s32.totalorder %s78, %s81
      %p90 = scmp.eq.s32.totalorder %s33, 3
      %p91 = por %p89, %p90
      %p92 = scmp.ne.s32.totalorder %s81, %s82
      %p93 = scmp.eq.s32.totalorder %s33, 0
      %p94 = por %p92, %p93
      %p95 = scmp.ne.s32.totalorder %s81, %s82
      %p96 = scmp.eq.s32.totalorder %s34, 3
      %p97 = por %p95, %p96
      %p99 = scmp.ne.s32.totalorder %s82, %s98
      %p100 = scmp.eq.s32.totalorder %s34, 0
      %p101 = por %p99, %p100
      %s102 = ssub.s32 %s35, %s47
      %p103 = scmp.eq.s32.totalorder %s102, 0
      %s105 = sadd.s32 %s104, 1
      %s106 = scalar_select %p103, %s104, %s105
      %p109 = pneg %p103
      %p110 = scmp.eq.s32.totalorder %s28, 3
      %p111 = por %p109, %p110
      %p112 = scmp.ne.s32.totalorder %s104, %s107
      %p113 = scmp.eq.s32.totalorder %s28, 0
      %p114 = por %p112, %p113
      %p115 = scmp.ne.s32.totalorder %s104, %s107
      %p116 = scmp.eq.s32.totalorder %s33, 3
      %p117 = por %p115, %p116
      %p118 = scmp.ne.s32.totalorder %s107, %s108
      %p119 = scmp.eq.s32.totalorder %s33, 0
      %p120 = por %p118, %p119
      %p121 = scmp.ne.s32.totalorder %s107, %s108
      %p122 = scmp.eq.s32.totalorder %s34, 3
      %p123 = por %p121, %p122
      %p125 = scmp.ne.s32.totalorder %s108, %s124
      %p126 = scmp.eq.s32.totalorder %s34, 0
      %p127 = por %p125, %p126
      %s129 = sadd.s32 %s128, 1
      %p132 = scmp.eq.s32.totalorder %s28, 3
      %p133 = scmp.ne.s32.totalorder %s128, %s130
      %p134 = scmp.eq.s32.totalorder %s28, 0
      %p135 = por %p133, %p134
      %p136 = scmp.ne.s32.totalorder %s128, %s130
      %p137 = scmp.eq.s32.totalorder %s33, 3
      %p138 = por %p136, %p137
      %p139 = scmp.ne.s32.totalorder %s130, %s131
      %p140 = scmp.eq.s32.totalorder %s33, 0
      %p141 = por %p139, %p140
      %p142 = scmp.ne.s32.totalorder %s130, %s131
      %p143 = scmp.eq.s32.totalorder %s34, 3
      %p144 = por %p142, %p143
      %p146 = scmp.ne.s32.totalorder %s131, %s145
      %p147 = scmp.eq.s32.totalorder %s34, 0
      %p148 = por %p146, %p147
      %s150 = sadd.s32 %s149, 1
      %p153 = scmp.eq.s32.totalorder %s28, 3
      %p154 = scmp.ne.s32.totalorder %s149, %s151
      %p155 = scmp.eq.s32.totalorder %s28, 0
      %p156 = por %p154, %p155
      %p157 = scmp.ne.s32.totalorder %s149, %s151
      %p158 = scmp.eq.s32.totalorder %s33, 3
      %p159 = por %p157, %p158
      %p160 = scmp.ne.s32.totalorder %s151, %s152
      %p161 = scmp.eq.s32.totalorder %s33, 0
      %p162 = por %p160, %p161
      %p163 = scmp.ne.s32.totalorder %s151, %s152
      %p164 = scmp.eq.s32.totalorder %s34, 3
      %p165 = por %p163, %p164
      %p167 = scmp.ne.s32.totalorder %s152, %s166
      %p168 = scmp.eq.s32.totalorder %s34, 0
      %p169 = por %p167, %p168
      %s171 = sadd.s32 %s170, 1
      %p174 = scmp.eq.s32.totalorder %s28, 3
      %p175 = scmp.ne.s32.totalorder %s170, %s172
      %p176 = scmp.eq.s32.totalorder %s28, 0
      %p177 = por %p175, %p176
      %p178 = scmp.ne.s32.totalorder %s170, %s172
      %p179 = scmp.eq.s32.totalorder %s33, 3
      %p180 = por %p178, %p179
      %p181 = scmp.ne.s32.totalorder %s172, %s173
      %p182 = scmp.eq.s32.totalorder %s33, 0
      %p183 = por %p181, %p182
      %p184 = scmp.ne.s32.totalorder %s172, %s173
      %p185 = scmp.eq.s32.totalorder %s34, 3
      %p186 = por %p184, %p185
      %p188 = scmp.ne.s32.totalorder %s173, %s187
      %p189 = scmp.eq.s32.totalorder %s34, 0
      %p190 = por %p188, %p189
      %s192 = sadd.s32 %s191, 1
      %p195 = scmp.eq.s32.totalorder %s28, 3
      %p196 = scmp.ne.s32.totalorder %s191, %s193
      %p197 = scmp.eq.s32.totalorder %s28, 0
      %p198 = por %p196, %p197
      %p199 = scmp.ne.s32.totalorder %s191, %s193
      %p200 = scmp.eq.s32.totalorder %s33, 3
      %p201 = por %p199, %p200
      %p202 = scmp.ne.s32.totalorder %s193, %s194
      %p203 = scmp.eq.s32.totalorder %s33, 0
      %p204 = por %p202, %p203
      %p205 = scmp.ne.s32.totalorder %s193, %s194
      %p206 = scmp.eq.s32.totalorder %s34, 3
      %p207 = por %p205, %p206
      %p209 = scmp.ne.s32.totalorder %s194, %s208
      %p210 = scmp.eq.s32.totalorder %s34, 0
      %p211 = por %p209, %p210
      %s213 = sadd.s32 %s212, 1
      %p216 = scmp.eq.s32.totalorder %s28, 3
      %p217 = scmp.ne.s32.totalorder %s212, %s214
      %p218 = scmp.eq.s32.totalorder %s28, 0
      %p219 = por %p217, %p218
      %p220 = scmp.ne.s32.totalorder %s212, %s214
      %p221 = scmp.eq.s32.totalorder %s33, 3
      %p222 = por %p220, %p221
      %p223 = scmp.ne.s32.totalorder %s214, %s215
      %p224 = scmp.eq.s32.totalorder %s33, 0
      %p225 = por %p223, %p224
      %p226 = scmp.ne.s32.totalorder %s214, %s215
      %p227 = scmp.eq.s32.totalorder %s34, 3
      %p228 = por %p226, %p227
      %p230 = scmp.ne.s32.totalorder %s215, %s229
      %p231 = scmp.eq.s32.totalorder %s34, 0
      %p232 = por %p230, %p231
      %s234 = sadd.s32 %s233, 1
      %p237 = scmp.eq.s32.totalorder %s28, 3
      %p238 = scmp.ne.s32.totalorder %s233, %s235
      %p239 = scmp.eq.s32.totalorder %s28, 0
      %p240 = por %p238, %p239
      %p241 = scmp.ne.s32.totalorder %s233, %s235
      %p242 = scmp.eq.s32.totalorder %s33, 3
      %p243 = por %p241, %p242
      %p244 = scmp.ne.s32.totalorder %s235, %s236
      %p245 = scmp.eq.s32.totalorder %s33, 0
      %p246 = por %p244, %p245
      %p247 = scmp.ne.s32.totalorder %s235, %s236
      %p248 = scmp.eq.s32.totalorder %s34, 3
      %p249 = por %p247, %p248
      %p251 = scmp.ne.s32.totalorder %s236, %s250
      %p252 = scmp.eq.s32.totalorder %s34, 0
      %p253 = por %p251, %p252
      %s255 = sadd.s32 %s254, 1
      %p258 = scmp.eq.s32.totalorder %s28, 3
      %p259 = scmp.ne.s32.totalorder %s254, %s256
      %p260 = scmp.eq.s32.totalorder %s28, 0
      %p261 = por %p259, %p260
      %p262 = scmp.ne.s32.totalorder %s254, %s256
      %p263 = scmp.eq.s32.totalorder %s33, 3
      %p264 = por %p262, %p263
      %p265 = scmp.ne.s32.totalorder %s256, %s257
      %p266 = scmp.eq.s32.totalorder %s33, 0
      %p267 = por %p265, %p266
      %p268 = scmp.ne.s32.totalorder %s256, %s257
      %p269 = scmp.eq.s32.totalorder %s34, 3
      %p270 = por %p268, %p269
      %p272 = scmp.ne.s32.totalorder %s257, %s271
      %p273 = scmp.eq.s32.totalorder %s34, 0
      %p274 = por %p272, %p273
      %s276 = sadd.s32 %s275, 1
      %p279 = scmp.eq.s32.totalorder %s28, 3
      %p280 = scmp.ne.s32.totalorder %s275, %s277
      %p281 = scmp.eq.s32.totalorder %s28, 0
      %p282 = por %p280, %p281
      %p283 = scmp.ne.s32.totalorder %s275, %s277
      %p284 = scmp.eq.s32.totalorder %s33, 3
      %p285 = por %p283, %p284
      %p286 = scmp.ne.s32.totalorder %s277, %s278
      %p287 = scmp.eq.s32.totalorder %s33, 0
      %p288 = por %p286, %p287
      %p289 = scmp.ne.s32.totalorder %s277, %s278
      %p290 = scmp.eq.s32.totalorder %s34, 3
      %p291 = por %p289, %p290
      %p293 = scmp.ne.s32.totalorder %s278, %s292
      %p294 = scmp.eq.s32.totalorder %s34, 0
      %p295 = por %p293, %p294
      %s297 = sadd.s32 %s296, 1
      %p300 = scmp.eq.s32.totalorder %s28, 3
      %p301 = scmp.ne.s32.totalorder %s296, %s298
      %p302 = scmp.eq.s32.totalorder %s28, 0
      %p303 = por %p301, %p302
      %p304 = scmp.ne.s32.totalorder %s296, %s298
      %p305 = scmp.eq.s32.totalorder %s33, 3
      %p306 = por %p304, %p305
      %p307 = scmp.ne.s32.totalorder %s298, %s299
      %p308 = scmp.eq.s32.totalorder %s33, 0
      %p309 = por %p307, %p308
      %p310 = scmp.ne.s32.totalorder %s298, %s299
      %p311 = scmp.eq.s32.totalorder %s34, 3
      %p312 = por %p310, %p311
      %p314 = scmp.ne.s32.totalorder %s299, %s313
      %p315 = scmp.eq.s32.totalorder %s34, 0
      %p316 = por %p314, %p315
      %s318 = sadd.s32 %s317, 1
      %p321 = scmp.eq.s32.totalorder %s28, 3
      %p322 = scmp.ne.s32.totalorder %s317, %s319
      %p323 = scmp.eq.s32.totalorder %s28, 0
      %p324 = por %p322, %p323
      %p325 = scmp.ne.s32.totalorder %s317, %s319
      %p326 = scmp.eq.s32.totalorder %s33, 3
      %p327 = por %p325, %p326
      %p328 = scmp.ne.s32.totalorder %s319, %s320
      %p329 = scmp.eq.s32.totalorder %s33, 0
      %p330 = por %p328, %p329
      %p331 = scmp.ne.s32.totalorder %s319, %s320
      %p332 = scmp.eq.s32.totalorder %s34, 3
      %p333 = por %p331, %p332
      %p335 = scmp.ne.s32.totalorder %s320, %s334
      %p336 = scmp.eq.s32.totalorder %s34, 0
      %p337 = por %p335, %p336
      %s339 = sadd.s32 %s338, 1
      %p342 = scmp.eq.s32.totalorder %s28, 3
      %p343 = scmp.ne.s32.totalorder %s338, %s340
      %p344 = scmp.eq.s32.totalorder %s28, 0
      %p345 = por %p343, %p344
      %p346 = scmp.ne.s32.totalorder %s338, %s340
      %p347 = scmp.eq.s32.totalorder %s33, 3
      %p348 = por %p346, %p347
      %p349 = scmp.ne.s32.totalorder %s340, %s341
      %p350 = scmp.eq.s32.totalorder %s33, 0
      %p351 = por %p349, %p350
      %p352 = scmp.ne.s32.totalorder %s340, %s341
      %p353 = scmp.eq.s32.totalorder %s34, 3
      %p354 = por %p352, %p353
      %p356 = scmp.ne.s32.totalorder %s341, %s355
      %p357 = scmp.eq.s32.totalorder %s34, 0
      %p358 = por %p356, %p357
      %s360 = sadd.s32 %s359, 1
      %p363 = scmp.eq.s32.totalorder %s28, 3
      %p364 = scmp.ne.s32.totalorder %s359, %s361
      %p365 = scmp.eq.s32.totalorder %s28, 0
      %p366 = por %p364, %p365
      %p367 = scmp.ne.s32.totalorder %s359, %s361
      %p368 = scmp.eq.s32.totalorder %s33, 3
      %p369 = por %p367, %p368
      %p370 = scmp.ne.s32.totalorder %s361, %s362
      %p371 = scmp.eq.s32.totalorder %s33, 0
      %p372 = por %p370, %p371
      %p373 = scmp.ne.s32.totalorder %s361, %s362
      %p374 = scmp.eq.s32.totalorder %s34, 3
      %p375 = por %p373, %p374
      %p377 = scmp.ne.s32.totalorder %s362, %s376
      %p378 = scmp.eq.s32.totalorder %s34, 0
      %p379 = por %p377, %p378
      %s381 = sadd.s32 %s380, 1
      %p384 = scmp.eq.s32.totalorder %s28, 3
      %p385 = scmp.ne.s32.totalorder %s380, %s382
      %p386 = scmp.eq.s32.totalorder %s28, 0
      %p387 = por %p385, %p386
      %p388 = scmp.ne.s32.totalorder %s380, %s382
      %p389 = scmp.eq.s32.totalorder %s33, 3
      %p390 = por %p388, %p389
      %p391 = scmp.ne.s32.totalorder %s382, %s383
      %p392 = scmp.eq.s32.totalorder %s33, 0
      %p393 = por %p391, %p392
      %p394 = scmp.ne.s32.totalorder %s382, %s383
      %p395 = scmp.eq.s32.totalorder %s34, 3
      %p396 = por %p394, %p395
      %p398 = scmp.ne.s32.totalorder %s383, %s397
      %p399 = scmp.eq.s32.totalorder %s34, 0
      %p400 = por %p398, %p399
      %s401 = ssub.s32 %s35, %s47
      %s402 = ssub.s32 %s36, %s43
      %s403 = sor.u32 %s401, %s402
      %p404 = scmp.eq.s32.totalorder %s403, 0
      %s406 = sadd.s32 %s405, 1
      %s407 = scalar_select %p404, %s405, %s406
      %p410 = pneg %p404
      %p411 = scmp.eq.s32.totalorder %s28, 3
      %p412 = por %p410, %p411
      %p413 = scmp.ne.s32.totalorder %s405, %s408
      %p414 = scmp.eq.s32.totalorder %s28, 0
      %p415 = por %p413, %p414
      %p416 = scmp.ne.s32.totalorder %s405, %s408
      %p417 = scmp.eq.s32.totalorder %s33, 3
      %p418 = por %p416, %p417
      %p419 = scmp.ne.s32.totalorder %s408, %s409
      %p420 = scmp.eq.s32.totalorder %s33, 0
      %p421 = por %p419, %p420
      %p422 = scmp.ne.s32.totalorder %s408, %s409
      %p423 = scmp.eq.s32.totalorder %s34, 3
      %p424 = por %p422, %p423
      %p426 = scmp.ne.s32.totalorder %s409, %s425
      %p427 = scmp.eq.s32.totalorder %s34, 0
      %p428 = por %p426, %p427
      %p429 = scmp.le.s32.totalorder 1, %s28
      %p430 = scmp.lt.s32.totalorder %s28, 5
      %p431 = pnand %p429, %p430
      %p432 = pneg %p431
      // Predicated region
      $region9: #{tpu_custom_call.1} parent=5 // pred_check
        _
      $region10: #{tpu_custom_call.1} parent=5 // pred_check_branch
        %434 = sbr.rel (%p431) target = $region12
      $region11: #{tpu_custom_call.1} parent=5 // pred_region
        %s435 = ssub.s32 %s28, 1
        // Predicated region
        $region13: #{tpu_custom_call.1} parent=11 // pred_check
          %p436 = pneg %p141
        $region14: #{tpu_custom_call.1} parent=11 // pred_check_branch
          %438 = sbr.rel (%p436) target = $region16
        $region15: #{tpu_custom_call.1} parent=11 // pred_region
          _
        $region16: #{tpu_custom_call.1} parent=11 // pred_fallthru
          _
        // Predicated region
        $region17: #{tpu_custom_call.1} parent=11 // pred_check
          %p439 = pneg %p162
        $region18: #{tpu_custom_call.1} parent=11 // pred_check_branch
          %441 = sbr.rel (%p439) target = $region20
        $region19: #{tpu_custom_call.1} parent=11 // pred_region
          %s443 = ssub.s32 256, 256
          %444 = vsyncadd [#allocation5], %s443
          %s445 = sshll.u32 [#allocation4], 4
          %s446 = int_to_ptr.vmem [resolvable:$true] %s445
          %451 = dma.hbm_to_vmem [thread:$0]  %s4, 256, %s446, [#allocation5], 64, 64, 4
        $region20: #{tpu_custom_call.1} parent=11 // pred_fallthru
          _
        // Predicated region
        $region21: #{tpu_custom_call.1} parent=11 // pred_check
          %p452 = pneg %p183
        $region22: #{tpu_custom_call.1} parent=11 // pred_check_branch
          %454 = sbr.rel (%p452) target = $region24
        $region23: #{tpu_custom_call.1} parent=11 // pred_region
          %s456 = ssub.s32 256, 256
          %457 = vsyncadd [#allocation8], %s456
          %s458 = sshll.u32 [#allocation7], 4
          %s459 = int_to_ptr.vmem [resolvable:$true] %s458
          %464 = dma.hbm_to_vmem [thread:$0]  %s5, 256, %s459, [#allocation8], 64, 64, 4
        $region24: #{tpu_custom_call.1} parent=11 // pred_fallthru
          _
        // Predicated region
        $region25: #{tpu_custom_call.1} parent=11 // pred_check
          %p465 = pneg %p204
        $region26: #{tpu_custom_call.1} parent=11 // pred_check_branch
          %467 = sbr.rel (%p465) target = $region28
        $region27: #{tpu_custom_call.1} parent=11 // pred_region
          %s469 = ssub.s32 256, 256
          %470 = vsyncadd [#allocation8], %s469
          %s471 = sshll.u32 [#allocation9], 4
          %s472 = int_to_ptr.vmem [resolvable:$true] %s471
          %477 = dma.hbm_to_vmem [thread:$0]  %s6, 256, %s472, [#allocation8], 64, 64, 4
        $region28: #{tpu_custom_call.1} parent=11 // pred_fallthru
          _
        // Predicated region
        $region29: #{tpu_custom_call.1} parent=11 // pred_check
          %p478 = pneg %p225
        $region30: #{tpu_custom_call.1} parent=11 // pred_check_branch
          %480 = sbr.rel (%p478) target = $region32
        $region31: #{tpu_custom_call.1} parent=11 // pred_region
          _
        $region32: #{tpu_custom_call.1} parent=11 // pred_fallthru
          _
        // Predicated region
        $region33: #{tpu_custom_call.1} parent=11 // pred_check
          %p481 = pneg %p246
        $region34: #{tpu_custom_call.1} parent=11 // pred_check_branch
          %483 = sbr.rel (%p481) target = $region36
        $region35: #{tpu_custom_call.1} parent=11 // pred_region
          _
        $region36: #{tpu_custom_call.1} parent=11 // pred_fallthru
          _
        // Predicated region
        $region37: #{tpu_custom_call.1} parent=11 // pred_check
          %p484 = pneg %p267
        $region38: #{tpu_custom_call.1} parent=11 // pred_check_branch
          %486 = sbr.rel (%p484) target = $region40
        $region39: #{tpu_custom_call.1} parent=11 // pred_region
          _
        $region40: #{tpu_custom_call.1} parent=11 // pred_fallthru
          _
        // Predicated region
        $region41: #{tpu_custom_call.1} parent=11 // pred_check
          %p487 = pneg %p288
        $region42: #{tpu_custom_call.1} parent=11 // pred_check_branch
          %489 = sbr.rel (%p487) target = $region44
        $region43: #{tpu_custom_call.1} parent=11 // pred_region
          _
        $region44: #{tpu_custom_call.1} parent=11 // pred_fallthru
          _
        // Predicated region
        $region45: #{tpu_custom_call.1} parent=11 // pred_check
          %p490 = pneg %p309
        $region46: #{tpu_custom_call.1} parent=11 // pred_check_branch
          %492 = sbr.rel (%p490) target = $region48
        $region47: #{tpu_custom_call.1} parent=11 // pred_region
          _
        $region48: #{tpu_custom_call.1} parent=11 // pred_fallthru
          _
        // Predicated region
        $region49: #{tpu_custom_call.1} parent=11 // pred_check
          %p493 = pneg %p330
        $region50: #{tpu_custom_call.1} parent=11 // pred_check_branch
          %495 = sbr.rel (%p493) target = $region52
        $region51: #{tpu_custom_call.1} parent=11 // pred_region
          %s497 = ssub.s32 256, 256
          %498 = vsyncadd [#allocation11], %s497
          %s499 = sshll.u32 [#allocation10], 4
          %s500 = int_to_ptr.vmem [resolvable:$true] %s499
          %505 = dma.hbm_to_vmem [thread:$0]  %s12, 256, %s500, [#allocation11], 64, 64, 4
        $region52: #{tpu_custom_call.1} parent=11 // pred_fallthru
          _
        // Predicated region
        $region53: #{tpu_custom_call.1} parent=11 // pred_check
          %p506 = pneg %p351
        $region54: #{tpu_custom_call.1} parent=11 // pred_check_branch
          %508 = sbr.rel (%p506) target = $region56
        $region55: #{tpu_custom_call.1} parent=11 // pred_region
          _
        $region56: #{tpu_custom_call.1} parent=11 // pred_fallthru
          _
        // Predicated region
        $region57: #{tpu_custom_call.1} parent=11 // pred_check
          %p509 = pneg %p372
        $region58: #{tpu_custom_call.1} parent=11 // pred_check_branch
          %511 = sbr.rel (%p509) target = $region60
        $region59: #{tpu_custom_call.1} parent=11 // pred_region
          _
        $region60: #{tpu_custom_call.1} parent=11 // pred_fallthru
          _
        // Predicated region
        $region61: #{tpu_custom_call.1} parent=11 // pred_check
          %p512 = pneg %p393
        $region62: #{tpu_custom_call.1} parent=11 // pred_check_branch
          %514 = sbr.rel (%p512) target = $region64
        $region63: #{tpu_custom_call.1} parent=11 // pred_region
          _
        $region64: #{tpu_custom_call.1} parent=11 // pred_fallthru
          _
      $region12: #{tpu_custom_call.1} parent=5 // pred_fallthru
        _
      %p515 = scmp.lt.s32.totalorder %s28, 4
      // Predicated region
      $region65: #{tpu_custom_call.1} parent=5 // pred_check
        %p516 = pneg %p515
      $region66: #{tpu_custom_call.1} parent=5 // pred_check_branch
        %518 = sbr.rel (%p516) target = $region68
      $region67: #{tpu_custom_call.1} parent=5 // pred_region
        // Predicated region
        $region69: #{tpu_custom_call.1} parent=67 // pred_check
          %p519 = pneg %p62
        $region70: #{tpu_custom_call.1} parent=67 // pred_check_branch
          %521 = sbr.rel (%p519) target = $region72
        $region71: #{tpu_custom_call.1} parent=67 // pred_region
          %p522 = scmp.lt.s32.totalorder %s35, 1
          %s523 = scalar_select %p522, %s35, 1
          %p524 = scmp.lt.s32.totalorder %s36, 1
          %s525 = scalar_select %p524, %s36, 1
          %s526 = smul.addr %s523, 2
          %s527 = sadd.s32 %s525, %s526
          %s528 = smul.addr %s527, 8
          %s529 = scalar_lea.vmem %s0, %s528
        $region72: #{tpu_custom_call.1} parent=67 // pred_fallthru
          _
        // Predicated region
        $region73: #{tpu_custom_call.1} parent=67 // pred_check
          %p530 = pneg %p88
        $region74: #{tpu_custom_call.1} parent=67 // pred_check_branch
          %532 = sbr.rel (%p530) target = $region76
        $region75: #{tpu_custom_call.1} parent=67 // pred_region
          %p533 = scmp.lt.s32.totalorder %s35, 1
          %s534 = scalar_select %p533, %s35, 1
          %s535 = smul.addr %s534, 2
          %s536 = smul.addr %s535, 4
          %s537 = scalar_lea.vmem %s1, %s536
        $region76: #{tpu_custom_call.1} parent=67 // pred_fallthru
          _
        // Predicated region
        $region77: #{tpu_custom_call.1} parent=67 // pred_check
          %p538 = pneg %p114
        $region78: #{tpu_custom_call.1} parent=67 // pred_check_branch
          %540 = sbr.rel (%p538) target = $region80
        $region79: #{tpu_custom_call.1} parent=67 // pred_region
          %p541 = scmp.lt.s32.totalorder %s35, 1
          %s542 = scalar_select %p541, %s35, 1
          %s543 = smul.addr %s542, 2
          %s544 = smul.addr %s543, 4
          %s545 = scalar_lea.vmem %s2, %s544
        $region80: #{tpu_custom_call.1} parent=67 // pred_fallthru
          _
      $region68: #{tpu_custom_call.1} parent=5 // pred_fallthru
        _
      %p546 = scmp.le.s32.totalorder 1, %s28
      %p547 = scmp.lt.s32.totalorder %s28, 5
      %p548 = pnand %p546, %p547
      %p549 = pneg %p548
      // Predicated region
      $region81: #{tpu_custom_call.1} parent=5 // pred_check
        _
      $region82: #{tpu_custom_call.1} parent=5 // pred_check_branch
        %551 = sbr.rel (%p548) target = $region84
      $region83: #{tpu_custom_call.1} parent=5 // pred_region
        %s552 = ssub.s32 %s28, 1
        // Predicated region
        $region85: #{tpu_custom_call.1} parent=83 // pred_check
          %p553 = pneg %p162
        $region86: #{tpu_custom_call.1} parent=83 // pred_check_branch
          %555 = sbr.rel (%p553) target = $region88
        $region87: #{tpu_custom_call.1} parent=83 // pred_region
          %556 = dma.done [#allocation5], 256
        $region88: #{tpu_custom_call.1} parent=83 // pred_fallthru
          _
        // Predicated region
        $region89: #{tpu_custom_call.1} parent=83 // pred_check
          %p557 = pneg %p183
        $region90: #{tpu_custom_call.1} parent=83 // pred_check_branch
          %559 = sbr.rel (%p557) target = $region92
        $region91: #{tpu_custom_call.1} parent=83 // pred_region
          %560 = dma.done [#allocation8], 256
        $region92: #{tpu_custom_call.1} parent=83 // pred_fallthru
          _
        // Predicated region
        $region93: #{tpu_custom_call.1} parent=83 // pred_check
          %p561 = pneg %p204
        $region94: #{tpu_custom_call.1} parent=83 // pred_check_branch
          %563 = sbr.rel (%p561) target = $region96
        $region95: #{tpu_custom_call.1} parent=83 // pred_region
          %564 = dma.done [#allocation8], 256
        $region96: #{tpu_custom_call.1} parent=83 // pred_fallthru
          _
        // Predicated region
        $region97: #{tpu_custom_call.1} parent=83 // pred_check
          %p565 = pneg %p330
        $region98: #{tpu_custom_call.1} parent=83 // pred_check_branch
          %567 = sbr.rel (%p565) target = $region100
        $region99: #{tpu_custom_call.1} parent=83 // pred_region
          %568 = dma.done [#allocation11], 256
        $region100: #{tpu_custom_call.1} parent=83 // pred_fallthru
          _
        %p569 = scmp.lt.s32.totalorder %s37, 1
        %s570 = scalar_select %p569, %s37, 1
        %p571 = scmp.lt.s32.totalorder %s38, 1
        %s572 = scalar_select %p571, %s38, 1
        %s573 = smul.addr %s570, 2
        %s574 = sadd.s32 %s572, %s573
        %s575 = smul.addr %s574, 8
        %s576 = scalar_lea.vmem %s0, %s575
        %p577 = pneg %p68
        %p578 = pneg %p65
        %p579 = scmp.lt.s32.totalorder %s37, 1
        %s580 = scalar_select %p579, %s37, 1
        %s581 = smul.addr %s580, 2
        %s582 = smul.addr %s581, 4
        %s583 = scalar_lea.vmem %s1, %s582
        %p584 = pneg %p94
        %p585 = pneg %p91
        %p586 = scmp.lt.s32.totalorder %s37, 1
        %s587 = scalar_select %p586, %s37, 1
        %s588 = smul.addr %s587, 2
        %s589 = smul.addr %s588, 4
        %s590 = scalar_lea.vmem %s2, %s589
        %p591 = pneg %p120
        %p592 = pneg %p117
        %p593 = pneg %p141
        %p594 = pneg %p138
        %p595 = pneg %p162
        %p596 = pneg %p159
        %p597 = pneg %p183
        %p598 = pneg %p180
        %p599 = pneg %p204
        %p600 = pneg %p201
        %p601 = pneg %p225
        %p602 = pneg %p222
        %p603 = pneg %p246
        %p604 = pneg %p243
        %p605 = pneg %p267
        %p606 = pneg %p264
        %p607 = pneg %p288
        %p608 = pneg %p285
        %p609 = pneg %p309
        %p610 = pneg %p306
        %p611 = pneg %p330
        %p612 = pneg %p327
        %p613 = pneg %p351
        %p614 = pneg %p348
        %p615 = pneg %p372
        %p616 = pneg %p369
        %p617 = pneg %p393
        %p618 = pneg %p390
        %p619 = pneg %p421
        %p620 = pneg %p418
        %s621 = sand.u32 %s408, 1
        %s622 = scalar_lea.sflag [#allocation6], %s621
        %s623 = sand.u32 %s408, 1
        %s624 = smul.addr %s623, 4
        %s625 = scalar_lea.vmem [#allocation12], %s624
        %p626 = scmp.lt.s32.totalorder %s37, 1
        %s627 = scalar_select %p626, %s37, 1
        %p628 = scmp.lt.s32.totalorder %s38, 1
        %s629 = scalar_select %p628, %s38, 1
        %s630 = smul.addr %s627, 2
        %s631 = sadd.s32 %s629, %s630
        %s632 = smul.addr %s631, 8
        %s633 = scalar_lea.vmem %s0, %s632
        %p634 = scmp.lt.s32.totalorder %s37, 1
        %s635 = scalar_select %p634, %s37, 1
        %s636 = smul.addr %s635, 2
        %s637 = smul.addr %s636, 4
        %s638 = scalar_lea.vmem %s1, %s637
        %p639 = scmp.lt.s32.totalorder %s37, 1
        %s640 = scalar_select %p639, %s37, 1
        %s641 = smul.addr %s640, 2
        %s642 = smul.addr %s641, 4
        %s643 = scalar_lea.vmem %s2, %s642
        %v645 = vld [vmem:[%s633] sm:$0xff]
        %p646 = scmp.eq.s32.totalorder %s38, 0
        // Predicated region
        $region101: #{tpu_custom_call.1} parent=83 // pred_check
          %p647 = pneg %p646
        $region102: #{tpu_custom_call.1} parent=83 // pred_check_branch
          %649 = sbr.rel (%p647) target = $region104
        $region103: #{tpu_custom_call.1} parent=83 // pred_region
          %v650 = vld [vmem:[%s638] sm:$0xf]
          %v651 = vld [vmem:[%s638 + $0x4] sm:$0xf]
          %v652 = vld [vmem:[#allocation4] sm:$0xf]
          %v653 = vld [vmem:[#allocation4 + $0x4] sm:$0xf]
          %v654 = vld [vmem:[#allocation4 + $0x8] sm:$0xf]
          %v655 = vld [vmem:[#allocation4 + $0xc] sm:$0xf]
          %v658 = vunpack.c.l.b16 %v650
          %v659 = vunpack.c.l.b16 %v651
          %v660 = vpack.c.b16 %v659, %v658
          %v665 = vunpack.c.l.b16 %v652
          %v666 = vunpack.c.l.b16 %v653
          %v667 = vunpack.c.l.b16 %v654
          %v668 = vunpack.c.l.b16 %v655
          %v669 = vpack.c.b16 %v666, %v665
          %v670 = vpack.c.b16 %v668, %v667
          %vm673 = vcmask 261120
          %v675 = vsel %vm673, %v660, 0
          %677 = vmatprep.subr.bf16.mxu0 0
          %678 = vmatpush1.bf16.msra.mxu0 0
          %679 = vmatprep.subr.bf16.mxu0 0
          %680 = vmatpush1.bf16.msra.mxu0 0
          %681 = vmatprep.subr.bf16.mxu0 0
          %682 = vmatpush1.bf16.msra.mxu0 0
          %683 = vmatprep.subr.bf16.mxu0 0
          %684 = vmatpush1.bf16.msra.mxu0 0
          %685 = vmatprep.subr.bf16.mxu0 0
          %686 = vmatpush1.bf16.msra.mxu0 0
          %687 = vmatprep.subr.bf16.mxu0 0
          %688 = vmatpush1.bf16.msra.mxu0 0
          %689 = vmatprep.subr.bf16.mxu0 0
          %690 = vmatpush1.bf16.msra.mxu0 %v670
          %691 = vmatprep.subr.bf16.mxu0 0
          %692 = vmatpush1.bf16.msra.mxu0 %v669
          %693 = vmatprep.subr.bf16.mxu0 0
          %694 = vmatpush2.bf16.msra.mxu0 0
          %695 = vmatprep.subr.bf16.mxu0 0
          %696 = vmatpush2.bf16.msra.mxu0 0
          %697 = vmatprep.subr.bf16.mxu0 0
          %698 = vmatpush2.bf16.msra.mxu0 0
          %699 = vmatprep.subr.bf16.mxu0 0
          %700 = vmatpush2.bf16.msra.mxu0 0
          %701 = vmatprep.subr.bf16.mxu0 0
          %702 = vmatpush2.bf16.msra.mxu0 0
          %703 = vmatprep.subr.bf16.mxu0 0
          %704 = vmatpush2.bf16.msra.mxu0 0
          %705 = vmatprep.subr.bf16.mxu0 0
          %706 = vmatpush2.bf16.msra.mxu0 0
          %707 = vmatprep.subr.bf16.mxu0 0
          %708 = vmatpush2.bf16.msra.mxu0 0
          %709 = vmatprep.mubr.bf16.mxu0 0
          %710 = vmatmul.mubr.bf16.gmra.mxu0 %v675
          %v711 = vpop.f32.mrf.mxu0
          %v712 = vadd.f32 0.0, %v711
          %v713 = vpop.f32.mrf.mxu0
          %v714 = vpop.f32.mrf.mxu0
          %v715 = vadd.f32 0.0, %v714
          %v716 = vpop.f32.mrf.mxu0
          %717 = vdwg.mxu0
          %v718 = vpack.c.bf16 %v715, %v712
          %v720 = vunpack.c.l.b16 %v718
          %v721 = vunpack.c.h.b16 %v718
          %v722 = vpack.c.b16 %v720, %v720
          %v723 = vpack.c.b16 %v721, %v721
          %vm726 = vcmask 257024
          %727 = vst.msk [vmem:[#allocation2] sm:$0xf] %vm726, %v722
          %728 = vst.msk [vmem:[#allocation2 + $0x4] sm:$0xf] %vm726, %v723
          %v729 = vld [vmem:[%s643] sm:$0xf]
          %v730 = vld [vmem:[%s643 + $0x4] sm:$0xf]
          %v731 = vld [vmem:[#allocation7] sm:$0xf]
          %v732 = vld [vmem:[#allocation7 + $0x4] sm:$0xf]
          %v733 = vld [vmem:[#allocation7 + $0x8] sm:$0xf]
          %v734 = vld [vmem:[#allocation7 + $0xc] sm:$0xf]
          %v737 = vunpack.c.l.b16 %v729
          %v738 = vunpack.c.l.b16 %v730
          %v739 = vpack.c.b16 %v738, %v737
          %v744 = vunpack.c.l.b16 %v731
          %v745 = vunpack.c.l.b16 %v732
          %v746 = vunpack.c.l.b16 %v733
          %v747 = vunpack.c.l.b16 %v734
          %v748 = vpack.c.b16 %v745, %v744
          %v749 = vpack.c.b16 %v747, %v746
          %v753 = vsel %vm673, %v739, 0
          %755 = vmatprep.subr.bf16.mxu0 0
          %756 = vmatpush1.bf16.msra.mxu0 0
          %757 = vmatprep.subr.bf16.mxu0 0
          %758 = vmatpush1.bf16.msra.mxu0 0
          %759 = vmatprep.subr.bf16.mxu0 0
          %760 = vmatpush1.bf16.msra.mxu0 0
          %761 = vmatprep.subr.bf16.mxu0 0
          %762 = vmatpush1.bf16.msra.mxu0 0
          %763 = vmatprep.subr.bf16.mxu0 0
          %764 = vmatpush1.bf16.msra.mxu0 0
          %765 = vmatprep.subr.bf16.mxu0 0
          %766 = vmatpush1.bf16.msra.mxu0 0
          %767 = vmatprep.subr.bf16.mxu0 0
          %768 = vmatpush1.bf16.msra.mxu0 %v749
          %769 = vmatprep.subr.bf16.mxu0 0
          %770 = vmatpush1.bf16.msra.mxu0 %v748
          %771 = vmatprep.subr.bf16.mxu0 0
          %772 = vmatpush2.bf16.msra.mxu0 0
          %773 = vmatprep.subr.bf16.mxu0 0
          %774 = vmatpush2.bf16.msra.mxu0 0
          %775 = vmatprep.subr.bf16.mxu0 0
          %776 = vmatpush2.bf16.msra.mxu0 0
          %777 = vmatprep.subr.bf16.mxu0 0
          %778 = vmatpush2.bf16.msra.mxu0 0
          %779 = vmatprep.subr.bf16.mxu0 0
          %780 = vmatpush2.bf16.msra.mxu0 0
          %781 = vmatprep.subr.bf16.mxu0 0
          %782 = vmatpush2.bf16.msra.mxu0 0
          %783 = vmatprep.subr.bf16.mxu0 0
          %784 = vmatpush2.bf16.msra.mxu0 0
          %785 = vmatprep.subr.bf16.mxu0 0
          %786 = vmatpush2.bf16.msra.mxu0 0
          %787 = vmatprep.mubr.bf16.mxu0 0
          %788 = vmatmul.mubr.bf16.gmra.mxu0 %v753
          %v789 = vpop.f32.mrf.mxu0
          %v790 = vadd.f32 0.0, %v789
          %v791 = vpop.f32.mrf.mxu0
          %v792 = vpop.f32.mrf.mxu0
          %v793 = vadd.f32 0.0, %v792
          %v794 = vpop.f32.mrf.mxu0
          %795 = vdwg.mxu0
          %v796 = vpack.c.bf16 %v793, %v790
          %v798 = vunpack.c.l.b16 %v796
          %v799 = vunpack.c.h.b16 %v796
          %v800 = vpack.c.b16 %v798, %v798
          %v801 = vpack.c.b16 %v799, %v799
          %804 = vst.msk [vmem:[#allocation3] sm:$0xf] %vm726, %v800
          %805 = vst.msk [vmem:[#allocation3 + $0x4] sm:$0xf] %vm726, %v801
        $region104: #{tpu_custom_call.1} parent=83 // pred_fallthru
          _
        %v806 = vpack.c.bf16 %v645, %v645
        %v807 = vld [vmem:[%s3] sm:$0xf]
        %v808 = vld [vmem:[%s3 + $0x4] sm:$0xf]
        %v809 = vld [vmem:[%s3 + $0x8] sm:$0xf]
        %v810 = vld [vmem:[%s3 + $0xc] sm:$0xf]
        %v815 = vunpack.c.l.b16 %v807
        %v816 = vunpack.c.l.b16 %v808
        %v817 = vunpack.c.l.b16 %v809
        %v818 = vunpack.c.l.b16 %v810
        %v819 = vpack.c.b16 %v816, %v815
        %v820 = vpack.c.b16 %v818, %v817
        %vm823 = vcmask 261120
        %v825 = vsel %vm823, %v806, 0
        %827 = vmatprep.subr.bf16.mxu0 0
        %828 = vmatpush1.bf16.msra.mxu0 0
        %829 = vmatprep.subr.bf16.mxu0 0
        %830 = vmatpush1.bf16.msra.mxu0 0
        %831 = vmatprep.subr.bf16.mxu0 0
        %832 = vmatpush1.bf16.msra.mxu0 0
        %833 = vmatprep.subr.bf16.mxu0 0
        %834 = vmatpush1.bf16.msra.mxu0 0
        %835 = vmatprep.subr.bf16.mxu0 0
        %836 = vmatpush1.bf16.msra.mxu0 0
        %837 = vmatprep.subr.bf16.mxu0 0
        %838 = vmatpush1.bf16.msra.mxu0 0
        %839 = vmatprep.subr.bf16.mxu0 0
        %840 = vmatpush1.bf16.msra.mxu0 %v820
        %841 = vmatprep.subr.bf16.mxu0 0
        %842 = vmatpush1.bf16.msra.mxu0 %v819
        %843 = vmatprep.subr.bf16.mxu0 0
        %844 = vmatpush2.bf16.msra.mxu0 0
        %845 = vmatprep.subr.bf16.mxu0 0
        %846 = vmatpush2.bf16.msra.mxu0 0
        %847 = vmatprep.subr.bf16.mxu0 0
        %848 = vmatpush2.bf16.msra.mxu0 0
        %849 = vmatprep.subr.bf16.mxu0 0
        %850 = vmatpush2.bf16.msra.mxu0 0
        %851 = vmatprep.subr.bf16.mxu0 0
        %852 = vmatpush2.bf16.msra.mxu0 0
        %853 = vmatprep.subr.bf16.mxu0 0
        %854 = vmatpush2.bf16.msra.mxu0 0
        %855 = vmatprep.subr.bf16.mxu0 0
        %856 = vmatpush2.bf16.msra.mxu0 0
        %857 = vmatprep.subr.bf16.mxu0 0
        %858 = vmatpush2.bf16.msra.mxu0 0
        %859 = vmatprep.mubr.bf16.mxu0 0
        %860 = vmatmul.mubr.bf16.gmra.mxu0 %v825
        %v861 = vpop.f32.mrf.mxu0
        %v862 = vadd.f32 0.0, %v861
        %v863 = vpop.f32.mrf.mxu0
        %v864 = vpop.f32.mrf.mxu0
        %v865 = vpop.f32.mrf.mxu0
        %866 = vdwg.mxu0
        %868 = vrot.lane.b32.xlu0 %v862, 120
        %v869 = vpop.permute.xlu0 %868
        %871 = vrot.lane.b32.xlu0 %v862, 112
        %v872 = vpop.permute.xlu0 %871
        %874 = vrot.lane.b32.xlu0 %v862, 104
        %v875 = vpop.permute.xlu0 %874
        %v877 = vcombine.low %v862, %v872
        %v878 = vcombine.high %v862, %v872
        %v880 = vunpack.c.l.s4 1983009808
        %v881 = vunpack.c.0.s8 %v880
        %v882 = vlaneseq
        %v883 = vshrl.u32 %v882, 7
        %v884 = vsub.s32 %v881, %v883
        %v885 = vrot.slane %v877, %v884
        %v887 = vunpack.c.l.s4 1983009808
        %v888 = vunpack.c.0.s8 %v887
        %v889 = vlaneseq
        %v890 = vshrl.u32 %v889, 7
        %v891 = vsub.s32 %v888, %v890
        %v892 = vrot.slane %v878, %v891
        %v893 = vcombine.low %v869, %v875
        %v894 = vcombine.high %v869, %v875
        %v896 = vunpack.c.l.s4 1983009808
        %v897 = vunpack.c.0.s8 %v896
        %v898 = vlaneseq
        %v899 = vshrl.u32 %v898, 7
        %v900 = vsub.s32 %v897, %v899
        %v901 = vrot.slane %v893, %v900
        %v903 = vunpack.c.l.s4 1983009808
        %v904 = vunpack.c.0.s8 %v903
        %v905 = vlaneseq
        %v906 = vshrl.u32 %v905, 7
        %v907 = vsub.s32 %v904, %v906
        %v908 = vrot.slane %v894, %v907
        %v909 = vcombine.low %v885, %v901
        %v910 = vcombine.high %v885, %v901
        %v912 = vunpack.c.l.s4 1934713408
        %v913 = vunpack.c.0.s8 %v912
        %v914 = vlaneseq
        %v915 = vshrl.u32 %v914, 7
        %v916 = vsub.s32 %v913, %v915
        %v917 = vrot.slane %v909, %v916
        %v919 = vunpack.c.l.s4 1934713408
        %v920 = vunpack.c.0.s8 %v919
        %v921 = vlaneseq
        %v922 = vshrl.u32 %v921, 7
        %v923 = vsub.s32 %v920, %v922
        %v924 = vrot.slane %v910, %v923
        %v925 = vcombine.low %v892, %v908
        %v926 = vcombine.high %v892, %v908
        %v928 = vunpack.c.l.s4 1934713408
        %v929 = vunpack.c.0.s8 %v928
        %v930 = vlaneseq
        %v931 = vshrl.u32 %v930, 7
        %v932 = vsub.s32 %v929, %v931
        %v933 = vrot.slane %v925, %v932
        %v935 = vunpack.c.l.s4 1934713408
        %v936 = vunpack.c.0.s8 %v935
        %v937 = vlaneseq
        %v938 = vshrl.u32 %v937, 7
        %v939 = vsub.s32 %v936, %v938
        %v940 = vrot.slane %v926, %v939
        %v941 = vcombine.high %v917, 0.0
        %v942 = vcombine.high %v924, 0.0
        %v943 = vcombine.high %v933, 0.0
        %v944 = vcombine.high %v940, 0.0
        %v945 = vpack.c.bf16 %v917, %v917
        %v946 = vpack.c.bf16 %v941, %v941
        %v947 = vpack.c.bf16 %v924, %v924
        %v948 = vpack.c.bf16 %v942, %v942
        %v949 = vpack.c.bf16 %v933, %v933
        %v950 = vpack.c.bf16 %v943, %v943
        %v951 = vpack.c.bf16 %v940, %v940
        %v952 = vpack.c.bf16 %v944, %v944
        %s953 = smul.u32 %s38, 8
        %v954 = vld [vmem:[#allocation2] sm:$0xf]
        %956 = vrot.lane.b32.xlu0 %v954, 120
        %v957 = vpop.permute.xlu0 %956
        %959 = vrot.lane.b32.xlu0 %v954, 112
        %v960 = vpop.permute.xlu0 %959
        %962 = vrot.lane.b32.xlu0 %v954, 104
        %v963 = vpop.permute.xlu0 %962
        %v965 = vld [vmem:[#allocation3] sm:$0xf]
        %967 = vrot.lane.b32.xlu0 %v965, 120
        %v968 = vpop.permute.xlu0 %967
        %969 = vrot.lane.b32.xlu0 %v965, 112
        %v970 = vpop.permute.xlu0 %969
        %971 = vrot.lane.b32.xlu0 %v965, 104
        %v972 = vpop.permute.xlu0 %971
        %v973 = vlaneseq
        %v974 = vshrl.u32 %v973, 7
        %v975 = vstv %s953
        %v976 = vadd.s32 %v975, %v974
        %v977 = vlaneseq
        %v978 = vand.u32 %v977, 127
        %vm979 = vcmp.ge.s32.totalorder %v976, %v978
        %v980 = vsel %vm979, 0.0, -1e+20
        %v981 = vcombine.low %v945, %v949
        %v983 = vunpack.c.l.s4 1983009808
        %v984 = vunpack.c.0.s8 %v983
        %v985 = vlaneseq
        %v986 = vshrl.u32 %v985, 7
        %v987 = vsub.s32 %v984, %v986
        %v988 = vrot.slane %v981, %v987
        %v989 = vcombine.low %v947, %v951
        %v991 = vunpack.c.l.s4 1983009808
        %v992 = vunpack.c.0.s8 %v991
        %v993 = vlaneseq
        %v994 = vshrl.u32 %v993, 7
        %v995 = vsub.s32 %v992, %v994
        %v996 = vrot.slane %v989, %v995
        %v997 = vcombine.low %v988, %v996
        %v999 = vunpack.c.l.s4 1934713408
        %v1000 = vunpack.c.0.s8 %v999
        %v1001 = vlaneseq
        %v1002 = vshrl.u32 %v1001, 7
        %v1003 = vsub.s32 %v1000, %v1002
        %v1004 = vrot.slane %v997, %v1003
        %v1005 = vcombine.high %v1004, 0
        %v1006 = vcombine.low %v946, %v950
        %v1008 = vunpack.c.l.s4 1983009808
        %v1009 = vunpack.c.0.s8 %v1008
        %v1010 = vlaneseq
        %v1011 = vshrl.u32 %v1010, 7
        %v1012 = vsub.s32 %v1009, %v1011
        %v1013 = vrot.slane %v1006, %v1012
        %v1014 = vcombine.low %v948, %v952
        %v1016 = vunpack.c.l.s4 1983009808
        %v1017 = vunpack.c.0.s8 %v1016
        %v1018 = vlaneseq
        %v1019 = vshrl.u32 %v1018, 7
        %v1020 = vsub.s32 %v1017, %v1019
        %v1021 = vrot.slane %v1014, %v1020
        %v1022 = vcombine.low %v1013, %v1021
        %v1024 = vunpack.c.l.s4 1934713408
        %v1025 = vunpack.c.0.s8 %v1024
        %v1026 = vlaneseq
        %v1027 = vshrl.u32 %v1026, 7
        %v1028 = vsub.s32 %v1025, %v1027
        %v1029 = vrot.slane %v1022, %v1028
        %v1030 = vcombine.high %v1029, 0
        %v1033 = vpack.i.b16 %v1029, %v1004
        %v1034 = vshrl.u32 %v1004, 16
        %v1035 = vshrl.u32 %v1029, 16
        %v1036 = vpack.i.b16 %v1035, %v1034
        %v1039 = vpack.i.b16 %v1030, %v1005
        %v1040 = vshrl.u32 %v1005, 16
        %v1041 = vshrl.u32 %v1030, 16
        %v1042 = vpack.i.b16 %v1041, %v1040
        %1043 = vxpose.xlu0.c.b16.start [1/8] %v954, 128
        %1044 = vxpose.xlu0.c.b16.cont [2/8] 0, 128
        %1045 = vxpose.xlu0.c.b16.cont [3/8] 0, 128
        %1046 = vxpose.xlu0.c.b16.cont [4/8] 0, 128
        %1047 = vxpose.xlu0.c.b16.cont [5/8] 0, 128
        %1048 = vxpose.xlu0.c.b16.cont [6/8] 0, 128
        %1049 = vxpose.xlu0.c.b16.cont [7/8] 0, 128
        %1050 = vxpose.xlu0.c.b16.end [8/8] 0, 128
        %v1051 = vpop.trf.xlu0
        %v1052 = vpop.trf.xlu0
        %v1053 = vpop.trf.xlu0
        %v1054 = vpop.trf.xlu0
        %v1055 = vpop.trf.xlu0
        %v1056 = vpop.trf.xlu0
        %v1057 = vpop.trf.xlu0
        %v1058 = vpop.trf.xlu0
        %1059 = vxpose.xlu0.c.b16.start [1/8] %v957, 128
        %1060 = vxpose.xlu0.c.b16.cont [2/8] 0, 128
        %1061 = vxpose.xlu0.c.b16.cont [3/8] 0, 128
        %1062 = vxpose.xlu0.c.b16.cont [4/8] 0, 128
        %1063 = vxpose.xlu0.c.b16.cont [5/8] 0, 128
        %1064 = vxpose.xlu0.c.b16.cont [6/8] 0, 128
        %1065 = vxpose.xlu0.c.b16.cont [7/8] 0, 128
        %1066 = vxpose.xlu0.c.b16.end [8/8] 0, 128
        %v1067 = vpop.trf.xlu0
        %v1068 = vpop.trf.xlu0
        %v1069 = vpop.trf.xlu0
        %v1070 = vpop.trf.xlu0
        %v1071 = vpop.trf.xlu0
        %v1072 = vpop.trf.xlu0
        %v1073 = vpop.trf.xlu0
        %v1074 = vpop.trf.xlu0
        %1075 = vxpose.xlu0.c.b16.start [1/8] %v960, 128
        %1076 = vxpose.xlu0.c.b16.cont [2/8] 0, 128
        %1077 = vxpose.xlu0.c.b16.cont [3/8] 0, 128
        %1078 = vxpose.xlu0.c.b16.cont [4/8] 0, 128
        %1079 = vxpose.xlu0.c.b16.cont [5/8] 0, 128
        %1080 = vxpose.xlu0.c.b16.cont [6/8] 0, 128
        %1081 = vxpose.xlu0.c.b16.cont [7/8] 0, 128
        %1082 = vxpose.xlu0.c.b16.end [8/8] 0, 128
        %v1083 = vpop.trf.xlu0
        %v1084 = vpop.trf.xlu0
        %v1085 = vpop.trf.xlu0
        %v1086 = vpop.trf.xlu0
        %v1087 = vpop.trf.xlu0
        %v1088 = vpop.trf.xlu0
        %v1089 = vpop.trf.xlu0
        %v1090 = vpop.trf.xlu0
        %1091 = vxpose.xlu0.c.b16.start [1/8] %v963, 128
        %1092 = vxpose.xlu0.c.b16.cont [2/8] 0, 128
        %1093 = vxpose.xlu0.c.b16.cont [3/8] 0, 128
        %1094 = vxpose.xlu0.c.b16.cont [4/8] 0, 128
        %1095 = vxpose.xlu0.c.b16.cont [5/8] 0, 128
        %1096 = vxpose.xlu0.c.b16.cont [6/8] 0, 128
        %1097 = vxpose.xlu0.c.b16.cont [7/8] 0, 128
        %1098 = vxpose.xlu0.c.b16.end [8/8] 0, 128
        %v1099 = vpop.trf.xlu0
        %v1100 = vpop.trf.xlu0
        %v1101 = vpop.trf.xlu0
        %v1102 = vpop.trf.xlu0
        %v1103 = vpop.trf.xlu0
        %v1104 = vpop.trf.xlu0
        %v1105 = vpop.trf.xlu0
        %v1106 = vpop.trf.xlu0
        %vm1107 = vcmask 64512
        %v1109 = vsel %vm1107, %v1033, 0
        %vm1111 = vcmask 1043456
        %v1113 = vsel %vm1111, %v1051, 0
        %1115 = vmatprep.subr.bf16.mxu0 0
        %1116 = vmatpush1.bf16.msra.mxu0 0
        %1117 = vmatprep.subr.bf16.mxu0 0
        %1118 = vmatpush1.bf16.msra.mxu0 0
        %1119 = vmatprep.subr.bf16.mxu0 0
        %1120 = vmatpush1.bf16.msra.mxu0 0
        %1121 = vmatprep.subr.bf16.mxu0 0
        %1122 = vmatpush1.bf16.msra.mxu0 0
        %1123 = vmatprep.subr.bf16.mxu0 0
        %1124 = vmatpush1.bf16.msra.mxu0 0
        %1125 = vmatprep.subr.bf16.mxu0 0
        %1126 = vmatpush1.bf16.msra.mxu0 0
        %1127 = vmatprep.subr.bf16.mxu0 0
        %1128 = vmatpush1.bf16.msra.mxu0 0
        %1129 = vmatprep.subr.bf16.mxu0 0
        %1130 = vmatpush1.bf16.msra.mxu0 %v1113
        %1131 = vmatprep.subr.bf16.mxu0 0
        %1132 = vmatpush2.bf16.msra.mxu0 0
        %1133 = vmatprep.subr.bf16.mxu0 0
        %1134 = vmatpush2.bf16.msra.mxu0 0
        %1135 = vmatprep.subr.bf16.mxu0 0
        %1136 = vmatpush2.bf16.msra.mxu0 0
        %1137 = vmatprep.subr.bf16.mxu0 0
        %1138 = vmatpush2.bf16.msra.mxu0 0
        %1139 = vmatprep.subr.bf16.mxu0 0
        %1140 = vmatpush2.bf16.msra.mxu0 0
        %1141 = vmatprep.subr.bf16.mxu0 0
        %1142 = vmatpush2.bf16.msra.mxu0 0
        %1143 = vmatprep.subr.bf16.mxu0 0
        %1144 = vmatpush2.bf16.msra.mxu0 0
        %1145 = vmatprep.subr.bf16.mxu0 0
        %1146 = vmatpush2.bf16.msra.mxu0 0
        %1147 = vmatprep.mubr.bf16.mxu0 0
        %1148 = vmatmul.mubr.bf16.gmra.mxu0 %v1109
        %v1149 = vpop.f32.mrf.mxu0
        %v1150 = vadd.f32 %v980, %v1149
        %v1151 = vpop.f32.mrf.mxu0
        %v1152 = vpop.f32.mrf.mxu0
        %v1153 = vpop.f32.mrf.mxu0
        %1154 = vdwg.mxu0
        %v1156 = vsel %vm1107, %v1036, 0
        %v1159 = vsel %vm1111, %v1067, 0
        %1161 = vmatprep.subr.bf16.mxu0 0
        %1162 = vmatpush1.bf16.msra.mxu0 0
        %1163 = vmatprep.subr.bf16.mxu0 0
        %1164 = vmatpush1.bf16.msra.mxu0 0
        %1165 = vmatprep.subr.bf16.mxu0 0
        %1166 = vmatpush1.bf16.msra.mxu0 0
        %1167 = vmatprep.subr.bf16.mxu0 0
        %1168 = vmatpush1.bf16.msra.mxu0 0
        %1169 = vmatprep.subr.bf16.mxu0 0
        %1170 = vmatpush1.bf16.msra.mxu0 0
        %1171 = vmatprep.subr.bf16.mxu0 0
        %1172 = vmatpush1.bf16.msra.mxu0 0
        %1173 = vmatprep.subr.bf16.mxu0 0
        %1174 = vmatpush1.bf16.msra.mxu0 0
        %1175 = vmatprep.subr.bf16.mxu0 0
        %1176 = vmatpush1.bf16.msra.mxu0 %v1159
        %1177 = vmatprep.subr.bf16.mxu0 0
        %1178 = vmatpush2.bf16.msra.mxu0 0
        %1179 = vmatprep.subr.bf16.mxu0 0
        %1180 = vmatpush2.bf16.msra.mxu0 0
        %1181 = vmatprep.subr.bf16.mxu0 0
        %1182 = vmatpush2.bf16.msra.mxu0 0
        %1183 = vmatprep.subr.bf16.mxu0 0
        %1184 = vmatpush2.bf16.msra.mxu0 0
        %1185 = vmatprep.subr.bf16.mxu0 0
        %1186 = vmatpush2.bf16.msra.mxu0 0
        %1187 = vmatprep.subr.bf16.mxu0 0
        %1188 = vmatpush2.bf16.msra.mxu0 0
        %1189 = vmatprep.subr.bf16.mxu0 0
        %1190 = vmatpush2.bf16.msra.mxu0 0
        %1191 = vmatprep.subr.bf16.mxu0 0
        %1192 = vmatpush2.bf16.msra.mxu0 0
        %1193 = vmatprep.mubr.bf16.mxu0 0
        %1194 = vmatmul.mubr.bf16.gmra.mxu0 %v1156
        %v1195 = vpop.f32.mrf.mxu0
        %v1196 = vadd.f32 %v980, %v1195
        %v1197 = vpop.f32.mrf.mxu0
        %v1198 = vpop.f32.mrf.mxu0
        %v1199 = vpop.f32.mrf.mxu0
        %1200 = vdwg.mxu0
        %v1202 = vsel %vm1107, %v1039, 0
        %v1205 = vsel %vm1111, %v1083, 0
        %1207 = vmatprep.subr.bf16.mxu0 0
        %1208 = vmatpush1.bf16.msra.mxu0 0
        %1209 = vmatprep.subr.bf16.mxu0 0
        %1210 = vmatpush1.bf16.msra.mxu0 0
        %1211 = vmatprep.subr.bf16.mxu0 0
        %1212 = vmatpush1.bf16.msra.mxu0 0
        %1213 = vmatprep.subr.bf16.mxu0 0
        %1214 = vmatpush1.bf16.msra.mxu0 0
        %1215 = vmatprep.subr.bf16.mxu0 0
        %1216 = vmatpush1.bf16.msra.mxu0 0
        %1217 = vmatprep.subr.bf16.mxu0 0
        %1218 = vmatpush1.bf16.msra.mxu0 0
        %1219 = vmatprep.subr.bf16.mxu0 0
        %1220 = vmatpush1.bf16.msra.mxu0 0
        %1221 = vmatprep.subr.bf16.mxu0 0
        %1222 = vmatpush1.bf16.msra.mxu0 %v1205
        %1223 = vmatprep.subr.bf16.mxu0 0
        %1224 = vmatpush2.bf16.msra.mxu0 0
        %1225 = vmatprep.subr.bf16.mxu0 0
        %1226 = vmatpush2.bf16.msra.mxu0 0
        %1227 = vmatprep.subr.bf16.mxu0 0
        %1228 = vmatpush2.bf16.msra.mxu0 0
        %1229 = vmatprep.subr.bf16.mxu0 0
        %1230 = vmatpush2.bf16.msra.mxu0 0
        %1231 = vmatprep.subr.bf16.mxu0 0
        %1232 = vmatpush2.bf16.msra.mxu0 0
        %1233 = vmatprep.subr.bf16.mxu0 0
        %1234 = vmatpush2.bf16.msra.mxu0 0
        %1235 = vmatprep.subr.bf16.mxu0 0
        %1236 = vmatpush2.bf16.msra.mxu0 0
        %1237 = vmatprep.subr.bf16.mxu0 0
        %1238 = vmatpush2.bf16.msra.mxu0 0
        %1239 = vmatprep.mubr.bf16.mxu0 0
        %1240 = vmatmul.mubr.bf16.gmra.mxu0 %v1202
        %v1241 = vpop.f32.mrf.mxu0
        %v1242 = vadd.f32 %v980, %v1241
        %v1243 = vpop.f32.mrf.mxu0
        %v1244 = vpop.f32.mrf.mxu0
        %v1245 = vpop.f32.mrf.mxu0
        %1246 = vdwg.mxu0
        %v1248 = vsel %vm1107, %v1042, 0
        %v1251 = vsel %vm1111, %v1099, 0
        %1253 = vmatprep.subr.bf16.mxu0 0
        %1254 = vmatpush1.bf16.msra.mxu0 0
        %1255 = vmatprep.subr.bf16.mxu0 0
        %1256 = vmatpush1.bf16.msra.mxu0 0
        %1257 = vmatprep.subr.bf16.mxu0 0
        %1258 = vmatpush1.bf16.msra.mxu0 0
        %1259 = vmatprep.subr.bf16.mxu0 0
        %1260 = vmatpush1.bf16.msra.mxu0 0
        %1261 = vmatprep.subr.bf16.mxu0 0
        %1262 = vmatpush1.bf16.msra.mxu0 0
        %1263 = vmatprep.subr.bf16.mxu0 0
        %1264 = vmatpush1.bf16.msra.mxu0 0
        %1265 = vmatprep.subr.bf16.mxu0 0
        %1266 = vmatpush1.bf16.msra.mxu0 0
        %1267 = vmatprep.subr.bf16.mxu0 0
        %1268 = vmatpush1.bf16.msra.mxu0 %v1251
        %1269 = vmatprep.subr.bf16.mxu0 0
        %1270 = vmatpush2.bf16.msra.mxu0 0
        %1271 = vmatprep.subr.bf16.mxu0 0
        %1272 = vmatpush2.bf16.msra.mxu0 0
        %1273 = vmatprep.subr.bf16.mxu0 0
        %1274 = vmatpush2.bf16.msra.mxu0 0
        %1275 = vmatprep.subr.bf16.mxu0 0
        %1276 = vmatpush2.bf16.msra.mxu0 0
        %1277 = vmatprep.subr.bf16.mxu0 0
        %1278 = vmatpush2.bf16.msra.mxu0 0
        %1279 = vmatprep.subr.bf16.mxu0 0
        %1280 = vmatpush2.bf16.msra.mxu0 0
        %1281 = vmatprep.subr.bf16.mxu0 0
        %1282 = vmatpush2.bf16.msra.mxu0 0
        %1283 = vmatprep.subr.bf16.mxu0 0
        %1284 = vmatpush2.bf16.msra.mxu0 0
        %1285 = vmatprep.mubr.bf16.mxu0 0
        %1286 = vmatmul.mubr.bf16.gmra.mxu0 %v1248
        %v1287 = vpop.f32.mrf.mxu0
        %v1288 = vadd.f32 %v980, %v1287
        %v1289 = vpop.f32.mrf.mxu0
        %v1290 = vpop.f32.mrf.mxu0
        %v1291 = vpop.f32.mrf.mxu0
        %1292 = vdwg.mxu0
        %v1293 = vsel %vm1107, %v1150, -inf
        %1294 = vmax.xlane.f32.xlu0 %v1293
        %v1295 = vpop.xlane.xlu0 %1294
        %v1296 = vsel %vm1107, %v1196, -inf
        %1297 = vmax.xlane.f32.xlu0 %v1296
        %v1298 = vpop.xlane.xlu0 %1297
        %v1299 = vsel %vm1107, %v1242, -inf
        %1300 = vmax.xlane.f32.xlu0 %v1299
        %v1301 = vpop.xlane.xlu0 %1300
        %v1302 = vsel %vm1107, %v1288, -inf
        %1303 = vmax.xlane.f32.xlu0 %v1302
        %v1304 = vpop.xlane.xlu0 %1303
        %v1305 = vsub.f32 -inf, %v1295
        %v1306 = vsub.f32 -inf, %v1298
        %v1307 = vsub.f32 -inf, %v1301
        %v1308 = vsub.f32 -inf, %v1304
        %v1309 = vmul.f32 %v1305, 1.442695
        %v1310 = vpow.pop %v1309
        %v1311 = vmul.f32 %v1306, 1.442695
        %v1312 = vpow.pop %v1311
        %v1313 = vmul.f32 %v1307, 1.442695
        %v1314 = vpow.pop %v1313
        %v1315 = vmul.f32 %v1308, 1.442695
        %v1316 = vpow.pop %v1315
        %v1317 = vsub.f32 %v1150, %v1295
        %v1318 = vsub.f32 %v1196, %v1298
        %v1319 = vsub.f32 %v1242, %v1301
        %v1320 = vsub.f32 %v1288, %v1304
        %v1321 = vmul.f32 %v1317, 1.442695
        %v1322 = vpow.pop %v1321
        %v1323 = vmul.f32 %v1318, 1.442695
        %v1324 = vpow.pop %v1323
        %v1325 = vmul.f32 %v1319, 1.442695
        %v1326 = vpow.pop %v1325
        %v1327 = vmul.f32 %v1320, 1.442695
        %v1328 = vpow.pop %v1327
        %v1329 = vmul.f32 %v1310, 0.0
        %v1330 = vmul.f32 %v1312, 0.0
        %v1331 = vmul.f32 %v1314, 0.0
        %v1332 = vmul.f32 %v1316, 0.0
        %v1333 = vsel %vm1107, %v1322, 0.0
        %1334 = vadd.xlane.f32.xlu0 %v1333
        %v1335 = vpop.xlane.xlu0 %1334
        %v1336 = vsel %vm1107, %v1324, 0.0
        %1337 = vadd.xlane.f32.xlu0 %v1336
        %v1338 = vpop.xlane.xlu0 %1337
        %v1339 = vsel %vm1107, %v1326, 0.0
        %1340 = vadd.xlane.f32.xlu0 %v1339
        %v1341 = vpop.xlane.xlu0 %1340
        %v1342 = vsel %vm1107, %v1328, 0.0
        %1343 = vadd.xlane.f32.xlu0 %v1342
        %v1344 = vpop.xlane.xlu0 %1343
        %v1345 = vadd.f32 %v1329, %v1335
        %v1346 = vadd.f32 %v1330, %v1338
        %v1347 = vadd.f32 %v1331, %v1341
        %v1348 = vadd.f32 %v1332, %v1344
        %v1349 = vpack.c.bf16 %v1322, %v1322
        %v1350 = vpack.c.bf16 %v1324, %v1324
        %v1351 = vpack.c.bf16 %v1326, %v1326
        %v1352 = vpack.c.bf16 %v1328, %v1328
        %v1354 = vsel %vm1107, %v1349, 0
        %v1357 = vsel %vm1111, %v965, 0
        %1359 = vmatprep.subr.bf16.mxu0 0
        %1360 = vmatpush1.bf16.msra.mxu0 0
        %1361 = vmatprep.subr.bf16.mxu0 0
        %1362 = vmatpush1.bf16.msra.mxu0 0
        %1363 = vmatprep.subr.bf16.mxu0 0
        %1364 = vmatpush1.bf16.msra.mxu0 0
        %1365 = vmatprep.subr.bf16.mxu0 0
        %1366 = vmatpush1.bf16.msra.mxu0 0
        %1367 = vmatprep.subr.bf16.mxu0 0
        %1368 = vmatpush1.bf16.msra.mxu0 0
        %1369 = vmatprep.subr.bf16.mxu0 0
        %1370 = vmatpush1.bf16.msra.mxu0 0
        %1371 = vmatprep.subr.bf16.mxu0 0
        %1372 = vmatpush1.bf16.msra.mxu0 0
        %1373 = vmatprep.subr.bf16.mxu0 0
        %1374 = vmatpush1.bf16.msra.mxu0 %v1357
        %1375 = vmatprep.subr.bf16.mxu0 0
        %1376 = vmatpush2.bf16.msra.mxu0 0
        %1377 = vmatprep.subr.bf16.mxu0 0
        %1378 = vmatpush2.bf16.msra.mxu0 0
        %1379 = vmatprep.subr.bf16.mxu0 0
        %1380 = vmatpush2.bf16.msra.mxu0 0
        %1381 = vmatprep.subr.bf16.mxu0 0
        %1382 = vmatpush2.bf16.msra.mxu0 0
        %1383 = vmatprep.subr.bf16.mxu0 0
        %1384 = vmatpush2.bf16.msra.mxu0 0
        %1385 = vmatprep.subr.bf16.mxu0 0
        %1386 = vmatpush2.bf16.msra.mxu0 0
        %1387 = vmatprep.subr.bf16.mxu0 0
        %1388 = vmatpush2.bf16.msra.mxu0 0
        %1389 = vmatprep.subr.bf16.mxu0 0
        %1390 = vmatpush2.bf16.msra.mxu0 0
        %1391 = vmatprep.mubr.bf16.mxu0 0
        %1392 = vmatmul.mubr.bf16.gmra.mxu0 %v1354
        %v1393 = vpop.f32.mrf.mxu0
        %v1394 = vadd.f32 0.0, %v1393
        %v1395 = vpop.f32.mrf.mxu0
        %v1396 = vpop.f32.mrf.mxu0
        %v1397 = vpop.f32.mrf.mxu0
        %1398 = vdwg.mxu0
        %v1400 = vsel %vm1107, %v1350, 0
        %v1403 = vsel %vm1111, %v968, 0
        %1405 = vmatprep.subr.bf16.mxu0 0
        %1406 = vmatpush1.bf16.msra.mxu0 0
        %1407 = vmatprep.subr.bf16.mxu0 0
        %1408 = vmatpush1.bf16.msra.mxu0 0
        %1409 = vmatprep.subr.bf16.mxu0 0
        %1410 = vmatpush1.bf16.msra.mxu0 0
        %1411 = vmatprep.subr.bf16.mxu0 0
        %1412 = vmatpush1.bf16.msra.mxu0 0
        %1413 = vmatprep.subr.bf16.mxu0 0
        %1414 = vmatpush1.bf16.msra.mxu0 0
        %1415 = vmatprep.subr.bf16.mxu0 0
        %1416 = vmatpush1.bf16.msra.mxu0 0
        %1417 = vmatprep.subr.bf16.mxu0 0
        %1418 = vmatpush1.bf16.msra.mxu0 0
        %1419 = vmatprep.subr.bf16.mxu0 0
        %1420 = vmatpush1.bf16.msra.mxu0 %v1403
        %1421 = vmatprep.subr.bf16.mxu0 0
        %1422 = vmatpush2.bf16.msra.mxu0 0
        %1423 = vmatprep.subr.bf16.mxu0 0
        %1424 = vmatpush2.bf16.msra.mxu0 0
        %1425 = vmatprep.subr.bf16.mxu0 0
        %1426 = vmatpush2.bf16.msra.mxu0 0
        %1427 = vmatprep.subr.bf16.mxu0 0
        %1428 = vmatpush2.bf16.msra.mxu0 0
        %1429 = vmatprep.subr.bf16.mxu0 0
        %1430 = vmatpush2.bf16.msra.mxu0 0
        %1431 = vmatprep.subr.bf16.mxu0 0
        %1432 = vmatpush2.bf16.msra.mxu0 0
        %1433 = vmatprep.subr.bf16.mxu0 0
        %1434 = vmatpush2.bf16.msra.mxu0 0
        %1435 = vmatprep.subr.bf16.mxu0 0
        %1436 = vmatpush2.bf16.msra.mxu0 0
        %1437 = vmatprep.mubr.bf16.mxu0 0
        %1438 = vmatmul.mubr.bf16.gmra.mxu0 %v1400
        %v1439 = vpop.f32.mrf.mxu0
        %v1440 = vadd.f32 0.0, %v1439
        %v1441 = vpop.f32.mrf.mxu0
        %v1442 = vpop.f32.mrf.mxu0
        %v1443 = vpop.f32.mrf.mxu0
        %1444 = vdwg.mxu0
        %v1446 = vsel %vm1107, %v1351, 0
        %v1449 = vsel %vm1111, %v970, 0
        %1451 = vmatprep.subr.bf16.mxu0 0
        %1452 = vmatpush1.bf16.msra.mxu0 0
        %1453 = vmatprep.subr.bf16.mxu0 0
        %1454 = vmatpush1.bf16.msra.mxu0 0
        %1455 = vmatprep.subr.bf16.mxu0 0
        %1456 = vmatpush1.bf16.msra.mxu0 0
        %1457 = vmatprep.subr.bf16.mxu0 0
        %1458 = vmatpush1.bf16.msra.mxu0 0
        %1459 = vmatprep.subr.bf16.mxu0 0
        %1460 = vmatpush1.bf16.msra.mxu0 0
        %1461 = vmatprep.subr.bf16.mxu0 0
        %1462 = vmatpush1.bf16.msra.mxu0 0
        %1463 = vmatprep.subr.bf16.mxu0 0
        %1464 = vmatpush1.bf16.msra.mxu0 0
        %1465 = vmatprep.subr.bf16.mxu0 0
        %1466 = vmatpush1.bf16.msra.mxu0 %v1449
        %1467 = vmatprep.subr.bf16.mxu0 0
        %1468 = vmatpush2.bf16.msra.mxu0 0
        %1469 = vmatprep.subr.bf16.mxu0 0
        %1470 = vmatpush2.bf16.msra.mxu0 0
        %1471 = vmatprep.subr.bf16.mxu0 0
        %1472 = vmatpush2.bf16.msra.mxu0 0
        %1473 = vmatprep.subr.bf16.mxu0 0
        %1474 = vmatpush2.bf16.msra.mxu0 0
        %1475 = vmatprep.subr.bf16.mxu0 0
        %1476 = vmatpush2.bf16.msra.mxu0 0
        %1477 = vmatprep.subr.bf16.mxu0 0
        %1478 = vmatpush2.bf16.msra.mxu0 0
        %1479 = vmatprep.subr.bf16.mxu0 0
        %1480 = vmatpush2.bf16.msra.mxu0 0
        %1481 = vmatprep.subr.bf16.mxu0 0
        %1482 = vmatpush2.bf16.msra.mxu0 0
        %1483 = vmatprep.mubr.bf16.mxu0 0
        %1484 = vmatmul.mubr.bf16.gmra.mxu0 %v1446
        %v1485 = vpop.f32.mrf.mxu0
        %v1486 = vadd.f32 0.0, %v1485
        %v1487 = vpop.f32.mrf.mxu0
        %v1488 = vpop.f32.mrf.mxu0
        %v1489 = vpop.f32.mrf.mxu0
        %1490 = vdwg.mxu0
        %v1492 = vsel %vm1107, %v1352, 0
        %v1495 = vsel %vm1111, %v972, 0
        %1497 = vmatprep.subr.bf16.mxu0 0
        %1498 = vmatpush1.bf16.msra.mxu0 0
        %1499 = vmatprep.subr.bf16.mxu0 0
        %1500 = vmatpush1.bf16.msra.mxu0 0
        %1501 = vmatprep.subr.bf16.mxu0 0
        %1502 = vmatpush1.bf16.msra.mxu0 0
        %1503 = vmatprep.subr.bf16.mxu0 0
        %1504 = vmatpush1.bf16.msra.mxu0 0
        %1505 = vmatprep.subr.bf16.mxu0 0
        %1506 = vmatpush1.bf16.msra.mxu0 0
        %1507 = vmatprep.subr.bf16.mxu0 0
        %1508 = vmatpush1.bf16.msra.mxu0 0
        %1509 = vmatprep.subr.bf16.mxu0 0
        %1510 = vmatpush1.bf16.msra.mxu0 0
        %1511 = vmatprep.subr.bf16.mxu0 0
        %1512 = vmatpush1.bf16.msra.mxu0 %v1495
        %1513 = vmatprep.subr.bf16.mxu0 0
        %1514 = vmatpush2.bf16.msra.mxu0 0
        %1515 = vmatprep.subr.bf16.mxu0 0
        %1516 = vmatpush2.bf16.msra.mxu0 0
        %1517 = vmatprep.subr.bf16.mxu0 0
        %1518 = vmatpush2.bf16.msra.mxu0 0
        %1519 = vmatprep.subr.bf16.mxu0 0
        %1520 = vmatpush2.bf16.msra.mxu0 0
        %1521 = vmatprep.subr.bf16.mxu0 0
        %1522 = vmatpush2.bf16.msra.mxu0 0
        %1523 = vmatprep.subr.bf16.mxu0 0
        %1524 = vmatpush2.bf16.msra.mxu0 0
        %1525 = vmatprep.subr.bf16.mxu0 0
        %1526 = vmatpush2.bf16.msra.mxu0 0
        %1527 = vmatprep.subr.bf16.mxu0 0
        %1528 = vmatpush2.bf16.msra.mxu0 0
        %1529 = vmatprep.mubr.bf16.mxu0 0
        %1530 = vmatmul.mubr.bf16.gmra.mxu0 %v1492
        %v1531 = vpop.f32.mrf.mxu0
        %v1532 = vadd.f32 0.0, %v1531
        %v1533 = vpop.f32.mrf.mxu0
        %v1534 = vpop.f32.mrf.mxu0
        %v1535 = vpop.f32.mrf.mxu0
        %1536 = vdwg.mxu0
        %v1537 = vadd.f32 %v1329, %v1394
        %v1538 = vadd.f32 %v1330, %v1440
        %v1539 = vadd.f32 %v1331, %v1486
        %v1540 = vadd.f32 %v1332, %v1532
        %v1541 = vld [vmem:[#allocation2 + $0x4] sm:$0xf]
        %1543 = vrot.lane.b32.xlu0 %v1541, 120
        %v1544 = vpop.permute.xlu0 %1543
        %1546 = vrot.lane.b32.xlu0 %v1541, 112
        %v1547 = vpop.permute.xlu0 %1546
        %1549 = vrot.lane.b32.xlu0 %v1541, 104
        %v1550 = vpop.permute.xlu0 %1549
        %v1552 = vld [vmem:[#allocation3 + $0x4] sm:$0xf]
        %1554 = vrot.lane.b32.xlu0 %v1552, 120
        %v1555 = vpop.permute.xlu0 %1554
        %1556 = vrot.lane.b32.xlu0 %v1552, 112
        %v1557 = vpop.permute.xlu0 %1556
        %1558 = vrot.lane.b32.xlu0 %v1552, 104
        %v1559 = vpop.permute.xlu0 %1558
        %v1560 = vadd.s32 %v978, 8
        %vm1561 = vcmp.ge.s32.totalorder %v976, %v1560
        %v1562 = vsel %vm1561, 0.0, -1e+20
        %1563 = vxpose.xlu0.c.b16.start [1/8] %v1541, 128
        %1564 = vxpose.xlu0.c.b16.cont [2/8] 0, 128
        %1565 = vxpose.xlu0.c.b16.cont [3/8] 0, 128
        %1566 = vxpose.xlu0.c.b16.cont [4/8] 0, 128
        %1567 = vxpose.xlu0.c.b16.cont [5/8] 0, 128
        %1568 = vxpose.xlu0.c.b16.cont [6/8] 0, 128
        %1569 = vxpose.xlu0.c.b16.cont [7/8] 0, 128
        %1570 = vxpose.xlu0.c.b16.end [8/8] 0, 128
        %v1571 = vpop.trf.xlu0
        %v1572 = vpop.trf.xlu0
        %v1573 = vpop.trf.xlu0
        %v1574 = vpop.trf.xlu0
        %v1575 = vpop.trf.xlu0
        %v1576 = vpop.trf.xlu0
        %v1577 = vpop.trf.xlu0
        %v1578 = vpop.trf.xlu0
        %1579 = vxpose.xlu0.c.b16.start [1/8] %v1544, 128
        %1580 = vxpose.xlu0.c.b16.cont [2/8] 0, 128
        %1581 = vxpose.xlu0.c.b16.cont [3/8] 0, 128
        %1582 = vxpose.xlu0.c.b16.cont [4/8] 0, 128
        %1583 = vxpose.xlu0.c.b16.cont [5/8] 0, 128
        %1584 = vxpose.xlu0.c.b16.cont [6/8] 0, 128
        %1585 = vxpose.xlu0.c.b16.cont [7/8] 0, 128
        %1586 = vxpose.xlu0.c.b16.end [8/8] 0, 128
        %v1587 = vpop.trf.xlu0
        %v1588 = vpop.trf.xlu0
        %v1589 = vpop.trf.xlu0
        %v1590 = vpop.trf.xlu0
        %v1591 = vpop.trf.xlu0
        %v1592 = vpop.trf.xlu0
        %v1593 = vpop.trf.xlu0
        %v1594 = vpop.trf.xlu0
        %1595 = vxpose.xlu0.c.b16.start [1/8] %v1547, 128
        %1596 = vxpose.xlu0.c.b16.cont [2/8] 0, 128
        %1597 = vxpose.xlu0.c.b16.cont [3/8] 0, 128
        %1598 = vxpose.xlu0.c.b16.cont [4/8] 0, 128
        %1599 = vxpose.xlu0.c.b16.cont [5/8] 0, 128
        %1600 = vxpose.xlu0.c.b16.cont [6/8] 0, 128
        %1601 = vxpose.xlu0.c.b16.cont [7/8] 0, 128
        %1602 = vxpose.xlu0.c.b16.end [8/8] 0, 128
        %v1603 = vpop.trf.xlu0
        %v1604 = vpop.trf.xlu0
        %v1605 = vpop.trf.xlu0
        %v1606 = vpop.trf.xlu0
        %v1607 = vpop.trf.xlu0
        %v1608 = vpop.trf.xlu0
        %v1609 = vpop.trf.xlu0
        %v1610 = vpop.trf.xlu0
        %1611 = vxpose.xlu0.c.b16.start [1/8] %v1550, 128
        %1612 = vxpose.xlu0.c.b16.cont [2/8] 0, 128
        %1613 = vxpose.xlu0.c.b16.cont [3/8] 0, 128
        %1614 = vxpose.xlu0.c.b16.cont [4/8] 0, 128
        %1615 = vxpose.xlu0.c.b16.cont [5/8] 0, 128
        %1616 = vxpose.xlu0.c.b16.cont [6/8] 0, 128
        %1617 = vxpose.xlu0.c.b16.cont [7/8] 0, 128
        %1618 = vxpose.xlu0.c.b16.end [8/8] 0, 128
        %v1619 = vpop.trf.xlu0
        %v1620 = vpop.trf.xlu0
        %v1621 = vpop.trf.xlu0
        %v1622 = vpop.trf.xlu0
        %v1623 = vpop.trf.xlu0
        %v1624 = vpop.trf.xlu0
        %v1625 = vpop.trf.xlu0
        %v1626 = vpop.trf.xlu0
        %v1628 = vsel %vm1111, %v1571, 0
        %1630 = vmatprep.subr.bf16.mxu0 0
        %1631 = vmatpush1.bf16.msra.mxu0 0
        %1632 = vmatprep.subr.bf16.mxu0 0
        %1633 = vmatpush1.bf16.msra.mxu0 0
        %1634 = vmatprep.subr.bf16.mxu0 0
        %1635 = vmatpush1.bf16.msra.mxu0 0
        %1636 = vmatprep.subr.bf16.mxu0 0
        %1637 = vmatpush1.bf16.msra.mxu0 0
        %1638 = vmatprep.subr.bf16.mxu0 0
        %1639 = vmatpush1.bf16.msra.mxu0 0
        %1640 = vmatprep.subr.bf16.mxu0 0
        %1641 = vmatpush1.bf16.msra.mxu0 0
        %1642 = vmatprep.subr.bf16.mxu0 0
        %1643 = vmatpush1.bf16.msra.mxu0 0
        %1644 = vmatprep.subr.bf16.mxu0 0
        %1645 = vmatpush1.bf16.msra.mxu0 %v1628
        %1646 = vmatprep.subr.bf16.mxu0 0
        %1647 = vmatpush2.bf16.msra.mxu0 0
        %1648 = vmatprep.subr.bf16.mxu0 0
        %1649 = vmatpush2.bf16.msra.mxu0 0
        %1650 = vmatprep.subr.bf16.mxu0 0
        %1651 = vmatpush2.bf16.msra.mxu0 0
        %1652 = vmatprep.subr.bf16.mxu0 0
        %1653 = vmatpush2.bf16.msra.mxu0 0
        %1654 = vmatprep.subr.bf16.mxu0 0
        %1655 = vmatpush2.bf16.msra.mxu0 0
        %1656 = vmatprep.subr.bf16.mxu0 0
        %1657 = vmatpush2.bf16.msra.mxu0 0
        %1658 = vmatprep.subr.bf16.mxu0 0
        %1659 = vmatpush2.bf16.msra.mxu0 0
        %1660 = vmatprep.subr.bf16.mxu0 0
        %1661 = vmatpush2.bf16.msra.mxu0 0
        %1662 = vmatprep.mubr.bf16.mxu0 0
        %1663 = vmatmul.mubr.bf16.gmra.mxu0 %v1109
        %v1664 = vpop.f32.mrf.mxu0
        %v1665 = vadd.f32 %v1562, %v1664
        %v1666 = vpop.f32.mrf.mxu0
        %v1667 = vpop.f32.mrf.mxu0
        %v1668 = vpop.f32.mrf.mxu0
        %1669 = vdwg.mxu0
        %v1671 = vsel %vm1111, %v1587, 0
        %1673 = vmatprep.subr.bf16.mxu0 0
        %1674 = vmatpush1.bf16.msra.mxu0 0
        %1675 = vmatprep.subr.bf16.mxu0 0
        %1676 = vmatpush1.bf16.msra.mxu0 0
        %1677 = vmatprep.subr.bf16.mxu0 0
        %1678 = vmatpush1.bf16.msra.mxu0 0
        %1679 = vmatprep.subr.bf16.mxu0 0
        %1680 = vmatpush1.bf16.msra.mxu0 0
        %1681 = vmatprep.subr.bf16.mxu0 0
        %1682 = vmatpush1.bf16.msra.mxu0 0
        %1683 = vmatprep.subr.bf16.mxu0 0
        %1684 = vmatpush1.bf16.msra.mxu0 0
        %1685 = vmatprep.subr.bf16.mxu0 0
        %1686 = vmatpush1.bf16.msra.mxu0 0
        %1687 = vmatprep.subr.bf16.mxu0 0
        %1688 = vmatpush1.bf16.msra.mxu0 %v1671
        %1689 = vmatprep.subr.bf16.mxu0 0
        %1690 = vmatpush2.bf16.msra.mxu0 0
        %1691 = vmatprep.subr.bf16.mxu0 0
        %1692 = vmatpush2.bf16.msra.mxu0 0
        %1693 = vmatprep.subr.bf16.mxu0 0
        %1694 = vmatpush2.bf16.msra.mxu0 0
        %1695 = vmatprep.subr.bf16.mxu0 0
        %1696 = vmatpush2.bf16.msra.mxu0 0
        %1697 = vmatprep.subr.bf16.mxu0 0
        %1698 = vmatpush2.bf16.msra.mxu0 0
        %1699 = vmatprep.subr.bf16.mxu0 0
        %1700 = vmatpush2.bf16.msra.mxu0 0
        %1701 = vmatprep.subr.bf16.mxu0 0
        %1702 = vmatpush2.bf16.msra.mxu0 0
        %1703 = vmatprep.subr.bf16.mxu0 0
        %1704 = vmatpush2.bf16.msra.mxu0 0
        %1705 = vmatprep.mubr.bf16.mxu0 0
        %1706 = vmatmul.mubr.bf16.gmra.mxu0 %v1156
        %v1707 = vpop.f32.mrf.mxu0
        %v1708 = vadd.f32 %v1562, %v1707
        %v1709 = vpop.f32.mrf.mxu0
        %v1710 = vpop.f32.mrf.mxu0
        %v1711 = vpop.f32.mrf.mxu0
        %1712 = vdwg.mxu0
        %v1714 = vsel %vm1111, %v1603, 0
        %1716 = vmatprep.subr.bf16.mxu0 0
        %1717 = vmatpush1.bf16.msra.mxu0 0
        %1718 = vmatprep.subr.bf16.mxu0 0
        %1719 = vmatpush1.bf16.msra.mxu0 0
        %1720 = vmatprep.subr.bf16.mxu0 0
        %1721 = vmatpush1.bf16.msra.mxu0 0
        %1722 = vmatprep.subr.bf16.mxu0 0
        %1723 = vmatpush1.bf16.msra.mxu0 0
        %1724 = vmatprep.subr.bf16.mxu0 0
        %1725 = vmatpush1.bf16.msra.mxu0 0
        %1726 = vmatprep.subr.bf16.mxu0 0
        %1727 = vmatpush1.bf16.msra.mxu0 0
        %1728 = vmatprep.subr.bf16.mxu0 0
        %1729 = vmatpush1.bf16.msra.mxu0 0
        %1730 = vmatprep.subr.bf16.mxu0 0
        %1731 = vmatpush1.bf16.msra.mxu0 %v1714
        %1732 = vmatprep.subr.bf16.mxu0 0
        %1733 = vmatpush2.bf16.msra.mxu0 0
        %1734 = vmatprep.subr.bf16.mxu0 0
        %1735 = vmatpush2.bf16.msra.mxu0 0
        %1736 = vmatprep.subr.bf16.mxu0 0
        %1737 = vmatpush2.bf16.msra.mxu0 0
        %1738 = vmatprep.subr.bf16.mxu0 0
        %1739 = vmatpush2.bf16.msra.mxu0 0
        %1740 = vmatprep.subr.bf16.mxu0 0
        %1741 = vmatpush2.bf16.msra.mxu0 0
        %1742 = vmatprep.subr.bf16.mxu0 0
        %1743 = vmatpush2.bf16.msra.mxu0 0
        %1744 = vmatprep.subr.bf16.mxu0 0
        %1745 = vmatpush2.bf16.msra.mxu0 0
        %1746 = vmatprep.subr.bf16.mxu0 0
        %1747 = vmatpush2.bf16.msra.mxu0 0
        %1748 = vmatprep.mubr.bf16.mxu0 0
        %1749 = vmatmul.mubr.bf16.gmra.mxu0 %v1202
        %v1750 = vpop.f32.mrf.mxu0
        %v1751 = vadd.f32 %v1562, %v1750
        %v1752 = vpop.f32.mrf.mxu0
        %v1753 = vpop.f32.mrf.mxu0
        %v1754 = vpop.f32.mrf.mxu0
        %1755 = vdwg.mxu0
        %v1757 = vsel %vm1111, %v1619, 0
        %1759 = vmatprep.subr.bf16.mxu0 0
        %1760 = vmatpush1.bf16.msra.mxu0 0
        %1761 = vmatprep.subr.bf16.mxu0 0
        %1762 = vmatpush1.bf16.msra.mxu0 0
        %1763 = vmatprep.subr.bf16.mxu0 0
        %1764 = vmatpush1.bf16.msra.mxu0 0
        %1765 = vmatprep.subr.bf16.mxu0 0
        %1766 = vmatpush1.bf16.msra.mxu0 0
        %1767 = vmatprep.subr.bf16.mxu0 0
        %1768 = vmatpush1.bf16.msra.mxu0 0
        %1769 = vmatprep.subr.bf16.mxu0 0
        %1770 = vmatpush1.bf16.msra.mxu0 0
        %1771 = vmatprep.subr.bf16.mxu0 0
        %1772 = vmatpush1.bf16.msra.mxu0 0
        %1773 = vmatprep.subr.bf16.mxu0 0
        %1774 = vmatpush1.bf16.msra.mxu0 %v1757
        %1775 = vmatprep.subr.bf16.mxu0 0
        %1776 = vmatpush2.bf16.msra.mxu0 0
        %1777 = vmatprep.subr.bf16.mxu0 0
        %1778 = vmatpush2.bf16.msra.mxu0 0
        %1779 = vmatprep.subr.bf16.mxu0 0
        %1780 = vmatpush2.bf16.msra.mxu0 0
        %1781 = vmatprep.subr.bf16.mxu0 0
        %1782 = vmatpush2.bf16.msra.mxu0 0
        %1783 = vmatprep.subr.bf16.mxu0 0
        %1784 = vmatpush2.bf16.msra.mxu0 0
        %1785 = vmatprep.subr.bf16.mxu0 0
        %1786 = vmatpush2.bf16.msra.mxu0 0
        %1787 = vmatprep.subr.bf16.mxu0 0
        %1788 = vmatpush2.bf16.msra.mxu0 0
        %1789 = vmatprep.subr.bf16.mxu0 0
        %1790 = vmatpush2.bf16.msra.mxu0 0
        %1791 = vmatprep.mubr.bf16.mxu0 0
        %1792 = vmatmul.mubr.bf16.gmra.mxu0 %v1248
        %v1793 = vpop.f32.mrf.mxu0
        %v1794 = vadd.f32 %v1562, %v1793
        %v1795 = vpop.f32.mrf.mxu0
        %v1796 = vpop.f32.mrf.mxu0
        %v1797 = vpop.f32.mrf.mxu0
        %1798 = vdwg.mxu0
        %v1799 = vsel %vm1107, %v1665, -inf
        %1800 = vmax.xlane.f32.xlu0 %v1799
        %v1801 = vpop.xlane.xlu0 %1800
        %v1802 = vsel %vm1107, %v1708, -inf
        %1803 = vmax.xlane.f32.xlu0 %v1802
        %v1804 = vpop.xlane.xlu0 %1803
        %v1805 = vsel %vm1107, %v1751, -inf
        %1806 = vmax.xlane.f32.xlu0 %v1805
        %v1807 = vpop.xlane.xlu0 %1806
        %v1808 = vsel %vm1107, %v1794, -inf
        %1809 = vmax.xlane.f32.xlu0 %v1808
        %v1810 = vpop.xlane.xlu0 %1809
        %v1811 = vmax.f32 %v1295, %v1801
        %v1812 = vmax.f32 %v1298, %v1804
        %v1813 = vmax.f32 %v1301, %v1807
        %v1814 = vmax.f32 %v1304, %v1810
        %v1815 = vsub.f32 %v1295, %v1811
        %v1816 = vsub.f32 %v1298, %v1812
        %v1817 = vsub.f32 %v1301, %v1813
        %v1818 = vsub.f32 %v1304, %v1814
        %v1819 = vmul.f32 %v1815, 1.442695
        %v1820 = vpow.pop %v1819
        %v1821 = vmul.f32 %v1816, 1.442695
        %v1822 = vpow.pop %v1821
        %v1823 = vmul.f32 %v1817, 1.442695
        %v1824 = vpow.pop %v1823
        %v1825 = vmul.f32 %v1818, 1.442695
        %v1826 = vpow.pop %v1825
        %v1827 = vsub.f32 %v1665, %v1811
        %v1828 = vsub.f32 %v1708, %v1812
        %v1829 = vsub.f32 %v1751, %v1813
        %v1830 = vsub.f32 %v1794, %v1814
        %v1831 = vmul.f32 %v1827, 1.442695
        %v1832 = vpow.pop %v1831
        %v1833 = vmul.f32 %v1828, 1.442695
        %v1834 = vpow.pop %v1833
        %v1835 = vmul.f32 %v1829, 1.442695
        %v1836 = vpow.pop %v1835
        %v1837 = vmul.f32 %v1830, 1.442695
        %v1838 = vpow.pop %v1837
        %v1839 = vmul.f32 %v1820, %v1345
        %v1840 = vmul.f32 %v1822, %v1346
        %v1841 = vmul.f32 %v1824, %v1347
        %v1842 = vmul.f32 %v1826, %v1348
        %v1843 = vsel %vm1107, %v1832, 0.0
        %1844 = vadd.xlane.f32.xlu0 %v1843
        %v1845 = vpop.xlane.xlu0 %1844
        %v1846 = vsel %vm1107, %v1834, 0.0
        %1847 = vadd.xlane.f32.xlu0 %v1846
        %v1848 = vpop.xlane.xlu0 %1847
        %v1849 = vsel %vm1107, %v1836, 0.0
        %1850 = vadd.xlane.f32.xlu0 %v1849
        %v1851 = vpop.xlane.xlu0 %1850
        %v1852 = vsel %vm1107, %v1838, 0.0
        %1853 = vadd.xlane.f32.xlu0 %v1852
        %v1854 = vpop.xlane.xlu0 %1853
        %v1855 = vadd.f32 %v1839, %v1845
        %v1856 = vadd.f32 %v1840, %v1848
        %v1857 = vadd.f32 %v1841, %v1851
        %v1858 = vadd.f32 %v1842, %v1854
        %v1859 = vmul.f32 %v1820, %v1537
        %v1860 = vmul.f32 %v1822, %v1538
        %v1861 = vmul.f32 %v1824, %v1539
        %v1862 = vmul.f32 %v1826, %v1540
        %v1863 = vpack.c.bf16 %v1832, %v1832
        %v1864 = vpack.c.bf16 %v1834, %v1834
        %v1865 = vpack.c.bf16 %v1836, %v1836
        %v1866 = vpack.c.bf16 %v1838, %v1838
        %v1868 = vsel %vm1107, %v1863, 0
        %v1871 = vsel %vm1111, %v1552, 0
        %1873 = vmatprep.subr.bf16.mxu0 0
        %1874 = vmatpush1.bf16.msra.mxu0 0
        %1875 = vmatprep.subr.bf16.mxu0 0
        %1876 = vmatpush1.bf16.msra.mxu0 0
        %1877 = vmatprep.subr.bf16.mxu0 0
        %1878 = vmatpush1.bf16.msra.mxu0 0
        %1879 = vmatprep.subr.bf16.mxu0 0
        %1880 = vmatpush1.bf16.msra.mxu0 0
        %1881 = vmatprep.subr.bf16.mxu0 0
        %1882 = vmatpush1.bf16.msra.mxu0 0
        %1883 = vmatprep.subr.bf16.mxu0 0
        %1884 = vmatpush1.bf16.msra.mxu0 0
        %1885 = vmatprep.subr.bf16.mxu0 0
        %1886 = vmatpush1.bf16.msra.mxu0 0
        %1887 = vmatprep.subr.bf16.mxu0 0
        %1888 = vmatpush1.bf16.msra.mxu0 %v1871
        %1889 = vmatprep.subr.bf16.mxu0 0
        %1890 = vmatpush2.bf16.msra.mxu0 0
        %1891 = vmatprep.subr.bf16.mxu0 0
        %1892 = vmatpush2.bf16.msra.mxu0 0
        %1893 = vmatprep.subr.bf16.mxu0 0
        %1894 = vmatpush2.bf16.msra.mxu0 0
        %1895 = vmatprep.subr.bf16.mxu0 0
        %1896 = vmatpush2.bf16.msra.mxu0 0
        %1897 = vmatprep.subr.bf16.mxu0 0
        %1898 = vmatpush2.bf16.msra.mxu0 0
        %1899 = vmatprep.subr.bf16.mxu0 0
        %1900 = vmatpush2.bf16.msra.mxu0 0
        %1901 = vmatprep.subr.bf16.mxu0 0
        %1902 = vmatpush2.bf16.msra.mxu0 0
        %1903 = vmatprep.subr.bf16.mxu0 0
        %1904 = vmatpush2.bf16.msra.mxu0 0
        %1905 = vmatprep.mubr.bf16.mxu0 0
        %1906 = vmatmul.mubr.bf16.gmra.mxu0 %v1868
        %v1907 = vpop.f32.mrf.mxu0
        %v1908 = vadd.f32 0.0, %v1907
        %v1909 = vpop.f32.mrf.mxu0
        %v1910 = vpop.f32.mrf.mxu0
        %v1911 = vpop.f32.mrf.mxu0
        %1912 = vdwg.mxu0
        %v1914 = vsel %vm1107, %v1864, 0
        %v1917 = vsel %vm1111, %v1555, 0
        %1919 = vmatprep.subr.bf16.mxu0 0
        %1920 = vmatpush1.bf16.msra.mxu0 0
        %1921 = vmatprep.subr.bf16.mxu0 0
        %1922 = vmatpush1.bf16.msra.mxu0 0
        %1923 = vmatprep.subr.bf16.mxu0 0
        %1924 = vmatpush1.bf16.msra.mxu0 0
        %1925 = vmatprep.subr.bf16.mxu0 0
        %1926 = vmatpush1.bf16.msra.mxu0 0
        %1927 = vmatprep.subr.bf16.mxu0 0
        %1928 = vmatpush1.bf16.msra.mxu0 0
        %1929 = vmatprep.subr.bf16.mxu0 0
        %1930 = vmatpush1.bf16.msra.mxu0 0
        %1931 = vmatprep.subr.bf16.mxu0 0
        %1932 = vmatpush1.bf16.msra.mxu0 0
        %1933 = vmatprep.subr.bf16.mxu0 0
        %1934 = vmatpush1.bf16.msra.mxu0 %v1917
        %1935 = vmatprep.subr.bf16.mxu0 0
        %1936 = vmatpush2.bf16.msra.mxu0 0
        %1937 = vmatprep.subr.bf16.mxu0 0
        %1938 = vmatpush2.bf16.msra.mxu0 0
        %1939 = vmatprep.subr.bf16.mxu0 0
        %1940 = vmatpush2.bf16.msra.mxu0 0
        %1941 = vmatprep.subr.bf16.mxu0 0
        %1942 = vmatpush2.bf16.msra.mxu0 0
        %1943 = vmatprep.subr.bf16.mxu0 0
        %1944 = vmatpush2.bf16.msra.mxu0 0
        %1945 = vmatprep.subr.bf16.mxu0 0
        %1946 = vmatpush2.bf16.msra.mxu0 0
        %1947 = vmatprep.subr.bf16.mxu0 0
        %1948 = vmatpush2.bf16.msra.mxu0 0
        %1949 = vmatprep.subr.bf16.mxu0 0
        %1950 = vmatpush2.bf16.msra.mxu0 0
        %1951 = vmatprep.mubr.bf16.mxu0 0
        %1952 = vmatmul.mubr.bf16.gmra.mxu0 %v1914
        %v1953 = vpop.f32.mrf.mxu0
        %v1954 = vadd.f32 0.0, %v1953
        %v1955 = vpop.f32.mrf.mxu0
        %v1956 = vpop.f32.mrf.mxu0
        %v1957 = vpop.f32.mrf.mxu0
        %1958 = vdwg.mxu0
        %v1960 = vsel %vm1107, %v1865, 0
        %v1963 = vsel %vm1111, %v1557, 0
        %1965 = vmatprep.subr.bf16.mxu0 0
        %1966 = vmatpush1.bf16.msra.mxu0 0
        %1967 = vmatprep.subr.bf16.mxu0 0
        %1968 = vmatpush1.bf16.msra.mxu0 0
        %1969 = vmatprep.subr.bf16.mxu0 0
        %1970 = vmatpush1.bf16.msra.mxu0 0
        %1971 = vmatprep.subr.bf16.mxu0 0
        %1972 = vmatpush1.bf16.msra.mxu0 0
        %1973 = vmatprep.subr.bf16.mxu0 0
        %1974 = vmatpush1.bf16.msra.mxu0 0
        %1975 = vmatprep.subr.bf16.mxu0 0
        %1976 = vmatpush1.bf16.msra.mxu0 0
        %1977 = vmatprep.subr.bf16.mxu0 0
        %1978 = vmatpush1.bf16.msra.mxu0 0
        %1979 = vmatprep.subr.bf16.mxu0 0
        %1980 = vmatpush1.bf16.msra.mxu0 %v1963
        %1981 = vmatprep.subr.bf16.mxu0 0
        %1982 = vmatpush2.bf16.msra.mxu0 0
        %1983 = vmatprep.subr.bf16.mxu0 0
        %1984 = vmatpush2.bf16.msra.mxu0 0
        %1985 = vmatprep.subr.bf16.mxu0 0
        %1986 = vmatpush2.bf16.msra.mxu0 0
        %1987 = vmatprep.subr.bf16.mxu0 0
        %1988 = vmatpush2.bf16.msra.mxu0 0
        %1989 = vmatprep.subr.bf16.mxu0 0
        %1990 = vmatpush2.bf16.msra.mxu0 0
        %1991 = vmatprep.subr.bf16.mxu0 0
        %1992 = vmatpush2.bf16.msra.mxu0 0
        %1993 = vmatprep.subr.bf16.mxu0 0
        %1994 = vmatpush2.bf16.msra.mxu0 0
        %1995 = vmatprep.subr.bf16.mxu0 0
        %1996 = vmatpush2.bf16.msra.mxu0 0
        %1997 = vmatprep.mubr.bf16.mxu0 0
        %1998 = vmatmul.mubr.bf16.gmra.mxu0 %v1960
        %v1999 = vpop.f32.mrf.mxu0
        %v2000 = vadd.f32 0.0, %v1999
        %v2001 = vpop.f32.mrf.mxu0
        %v2002 = vpop.f32.mrf.mxu0
        %v2003 = vpop.f32.mrf.mxu0
        %2004 = vdwg.mxu0
        %v2006 = vsel %vm1107, %v1866, 0
        %v2009 = vsel %vm1111, %v1559, 0
        %2011 = vmatprep.subr.bf16.mxu0 0
        %2012 = vmatpush1.bf16.msra.mxu0 0
        %2013 = vmatprep.subr.bf16.mxu0 0
        %2014 = vmatpush1.bf16.msra.mxu0 0
        %2015 = vmatprep.subr.bf16.mxu0 0
        %2016 = vmatpush1.bf16.msra.mxu0 0
        %2017 = vmatprep.subr.bf16.mxu0 0
        %2018 = vmatpush1.bf16.msra.mxu0 0
        %2019 = vmatprep.subr.bf16.mxu0 0
        %2020 = vmatpush1.bf16.msra.mxu0 0
        %2021 = vmatprep.subr.bf16.mxu0 0
        %2022 = vmatpush1.bf16.msra.mxu0 0
        %2023 = vmatprep.subr.bf16.mxu0 0
        %2024 = vmatpush1.bf16.msra.mxu0 0
        %2025 = vmatprep.subr.bf16.mxu0 0
        %2026 = vmatpush1.bf16.msra.mxu0 %v2009
        %2027 = vmatprep.subr.bf16.mxu0 0
        %2028 = vmatpush2.bf16.msra.mxu0 0
        %2029 = vmatprep.subr.bf16.mxu0 0
        %2030 = vmatpush2.bf16.msra.mxu0 0
        %2031 = vmatprep.subr.bf16.mxu0 0
        %2032 = vmatpush2.bf16.msra.mxu0 0
        %2033 = vmatprep.subr.bf16.mxu0 0
        %2034 = vmatpush2.bf16.msra.mxu0 0
        %2035 = vmatprep.subr.bf16.mxu0 0
        %2036 = vmatpush2.bf16.msra.mxu0 0
        %2037 = vmatprep.subr.bf16.mxu0 0
        %2038 = vmatpush2.bf16.msra.mxu0 0
        %2039 = vmatprep.subr.bf16.mxu0 0
        %2040 = vmatpush2.bf16.msra.mxu0 0
        %2041 = vmatprep.subr.bf16.mxu0 0
        %2042 = vmatpush2.bf16.msra.mxu0 0
        %2043 = vmatprep.mubr.bf16.mxu0 0
        %2044 = vmatmul.mubr.bf16.gmra.mxu0 %v2006
        %v2045 = vpop.f32.mrf.mxu0
        %v2046 = vadd.f32 0.0, %v2045
        %v2047 = vpop.f32.mrf.mxu0
        %v2048 = vpop.f32.mrf.mxu0
        %v2049 = vpop.f32.mrf.mxu0
        %2050 = vdwg.mxu0
        %v2051 = vadd.f32 %v1859, %v1908
        %v2052 = vadd.f32 %v1860, %v1954
        %v2053 = vadd.f32 %v1861, %v2000
        %v2054 = vadd.f32 %v1862, %v2046
        %v2055 = vrcp.pop %v1855
        %v2056 = vrcp.pop %v1856
        %v2057 = vrcp.pop %v1857
        %v2058 = vrcp.pop %v1858
        %v2059 = vmul.f32 %v2051, %v2055
        %v2060 = vmul.f32 %v2052, %v2056
        %v2061 = vmul.f32 %v2053, %v2057
        %v2062 = vmul.f32 %v2054, %v2058
        %v2063 = vcombine.low %v2059, %v2061
        %v2064 = vcombine.high %v2059, %v2061
        %v2066 = vunpack.c.l.s4 1983009808
        %v2067 = vunpack.c.0.s8 %v2066
        %v2068 = vlaneseq
        %v2069 = vshrl.u32 %v2068, 7
        %v2070 = vsub.s32 %v2067, %v2069
        %v2071 = vrot.slane %v2063, %v2070
        %v2073 = vunpack.c.l.s4 1983009808
        %v2074 = vunpack.c.0.s8 %v2073
        %v2075 = vlaneseq
        %v2076 = vshrl.u32 %v2075, 7
        %v2077 = vsub.s32 %v2074, %v2076
        %v2078 = vrot.slane %v2064, %v2077
        %v2079 = vcombine.low %v2060, %v2062
        %v2080 = vcombine.high %v2060, %v2062
        %v2082 = vunpack.c.l.s4 1983009808
        %v2083 = vunpack.c.0.s8 %v2082
        %v2084 = vlaneseq
        %v2085 = vshrl.u32 %v2084, 7
        %v2086 = vsub.s32 %v2083, %v2085
        %v2087 = vrot.slane %v2079, %v2086
        %v2089 = vunpack.c.l.s4 1983009808
        %v2090 = vunpack.c.0.s8 %v2089
        %v2091 = vlaneseq
        %v2092 = vshrl.u32 %v2091, 7
        %v2093 = vsub.s32 %v2090, %v2092
        %v2094 = vrot.slane %v2080, %v2093
        %v2095 = vcombine.low %v2071, %v2087
        %v2096 = vcombine.high %v2071, %v2087
        %v2098 = vunpack.c.l.s4 1934713408
        %v2099 = vunpack.c.0.s8 %v2098
        %v2100 = vlaneseq
        %v2101 = vshrl.u32 %v2100, 7
        %v2102 = vsub.s32 %v2099, %v2101
        %v2103 = vrot.slane %v2095, %v2102
        %v2105 = vunpack.c.l.s4 1934713408
        %v2106 = vunpack.c.0.s8 %v2105
        %v2107 = vlaneseq
        %v2108 = vshrl.u32 %v2107, 7
        %v2109 = vsub.s32 %v2106, %v2108
        %v2110 = vrot.slane %v2096, %v2109
        %v2111 = vcombine.low %v2078, %v2094
        %v2112 = vcombine.high %v2078, %v2094
        %v2114 = vunpack.c.l.s4 1934713408
        %v2115 = vunpack.c.0.s8 %v2114
        %v2116 = vlaneseq
        %v2117 = vshrl.u32 %v2116, 7
        %v2118 = vsub.s32 %v2115, %v2117
        %v2119 = vrot.slane %v2111, %v2118
        %v2121 = vunpack.c.l.s4 1934713408
        %v2122 = vunpack.c.0.s8 %v2121
        %v2123 = vlaneseq
        %v2124 = vshrl.u32 %v2123, 7
        %v2125 = vsub.s32 %v2122, %v2124
        %v2126 = vrot.slane %v2112, %v2125
        %v2127 = vcombine.high %v2103, 0.0
        %v2128 = vcombine.high %v2110, 0.0
        %v2129 = vcombine.high %v2119, 0.0
        %v2130 = vcombine.high %v2126, 0.0
        %v2131 = vcombine.low %v2103, %v2110
        %v2133 = vunpack.c.l.s4 1983009808
        %v2134 = vunpack.c.0.s8 %v2133
        %v2135 = vlaneseq
        %v2136 = vshrl.u32 %v2135, 7
        %v2137 = vsub.s32 %v2134, %v2136
        %v2138 = vrot.slane %v2131, %v2137
        %v2139 = vcombine.low %v2127, %v2128
        %v2141 = vunpack.c.l.s4 1983009808
        %v2142 = vunpack.c.0.s8 %v2141
        %v2143 = vlaneseq
        %v2144 = vshrl.u32 %v2143, 7
        %v2145 = vsub.s32 %v2142, %v2144
        %v2146 = vrot.slane %v2139, %v2145
        %v2147 = vcombine.low %v2119, %v2126
        %v2149 = vunpack.c.l.s4 1983009808
        %v2150 = vunpack.c.0.s8 %v2149
        %v2151 = vlaneseq
        %v2152 = vshrl.u32 %v2151, 7
        %v2153 = vsub.s32 %v2150, %v2152
        %v2154 = vrot.slane %v2147, %v2153
        %v2155 = vcombine.low %v2129, %v2130
        %v2157 = vunpack.c.l.s4 1983009808
        %v2158 = vunpack.c.0.s8 %v2157
        %v2159 = vlaneseq
        %v2160 = vshrl.u32 %v2159, 7
        %v2161 = vsub.s32 %v2158, %v2160
        %v2162 = vrot.slane %v2155, %v2161
        %v2163 = vcombine.low %v2138, %v2146
        %v2164 = vcombine.high %v2138, %v2146
        %v2166 = vunpack.c.l.s4 1934713408
        %v2167 = vunpack.c.0.s8 %v2166
        %v2168 = vlaneseq
        %v2169 = vshrl.u32 %v2168, 7
        %v2170 = vsub.s32 %v2167, %v2169
        %v2171 = vrot.slane %v2163, %v2170
        %v2173 = vunpack.c.l.s4 1934713408
        %v2174 = vunpack.c.0.s8 %v2173
        %v2175 = vlaneseq
        %v2176 = vshrl.u32 %v2175, 7
        %v2177 = vsub.s32 %v2174, %v2176
        %v2178 = vrot.slane %v2164, %v2177
        %v2179 = vcombine.low %v2154, %v2162
        %v2180 = vcombine.high %v2154, %v2162
        %v2182 = vunpack.c.l.s4 1934713408
        %v2183 = vunpack.c.0.s8 %v2182
        %v2184 = vlaneseq
        %v2185 = vshrl.u32 %v2184, 7
        %v2186 = vsub.s32 %v2183, %v2185
        %v2187 = vrot.slane %v2179, %v2186
        %v2189 = vunpack.c.l.s4 1934713408
        %v2190 = vunpack.c.0.s8 %v2189
        %v2191 = vlaneseq
        %v2192 = vshrl.u32 %v2191, 7
        %v2193 = vsub.s32 %v2190, %v2192
        %v2194 = vrot.slane %v2180, %v2193
        %v2195 = vcombine.low %v2171, %v2187
        %v2196 = vcombine.high %v2171, %v2187
        %v2197 = vcombine.low %v2178, %v2194
        %v2198 = vcombine.high %v2178, %v2194
        %2200 = vrot.lane.b32.xlu0 %v2196, 8
        %v2201 = vpop.permute.xlu0 %2200
        %2204 = vrot.lane.b32.xlu0 %v2197, 16
        %v2205 = vpop.permute.xlu0 %2204
        %2208 = vrot.lane.b32.xlu0 %v2198, 24
        %v2209 = vpop.permute.xlu0 %2208
        %v2211 = vsel %vm1107, %v2195, %v2201
        %vm2212 = vcmask 130048
        %v2213 = vsel %vm2212, %v2211, %v2205
        %vm2214 = vcmask 195584
        %v2215 = vsel %vm2214, %v2213, %v2209
        %v2216 = vpack.c.bf16 %v2215, %v2215
        %v2217 = vld [vmem:[#allocation9] sm:$0xf]
        %v2218 = vld [vmem:[#allocation9 + $0x4] sm:$0xf]
        %v2219 = vld [vmem:[#allocation9 + $0x8] sm:$0xf]
        %v2220 = vld [vmem:[#allocation9 + $0xc] sm:$0xf]
        %v2221 = vld [vmem:[%s7] sm:$0x1]
        %v2223 = vlaneseq
        %v2224 = vshrl.u32 %v2223, 7
        %v2225 = vsub.s32 0, %v2224
        %v2226 = vrot.slane %v2221, %v2225
        %v2232 = vunpack.c.l.b16 %v2217
        %v2233 = vunpack.c.l.b16 %v2218
        %v2234 = vunpack.c.l.b16 %v2219
        %v2235 = vunpack.c.l.b16 %v2220
        %v2236 = vpack.c.b16 %v2233, %v2232
        %v2237 = vpack.c.b16 %v2235, %v2234
        %v2241 = vsel %vm823, %v2216, 0
        %2243 = vmatprep.subr.bf16.mxu0 0
        %2244 = vmatpush1.bf16.msra.mxu0 0
        %2245 = vmatprep.subr.bf16.mxu0 0
        %2246 = vmatpush1.bf16.msra.mxu0 0
        %2247 = vmatprep.subr.bf16.mxu0 0
        %2248 = vmatpush1.bf16.msra.mxu0 0
        %2249 = vmatprep.subr.bf16.mxu0 0
        %2250 = vmatpush1.bf16.msra.mxu0 0
        %2251 = vmatprep.subr.bf16.mxu0 0
        %2252 = vmatpush1.bf16.msra.mxu0 0
        %2253 = vmatprep.subr.bf16.mxu0 0
        %2254 = vmatpush1.bf16.msra.mxu0 0
        %2255 = vmatprep.subr.bf16.mxu0 0
        %2256 = vmatpush1.bf16.msra.mxu0 %v2237
        %2257 = vmatprep.subr.bf16.mxu0 0
        %2258 = vmatpush1.bf16.msra.mxu0 %v2236
        %2259 = vmatprep.subr.bf16.mxu0 0
        %2260 = vmatpush2.bf16.msra.mxu0 0
        %2261 = vmatprep.subr.bf16.mxu0 0
        %2262 = vmatpush2.bf16.msra.mxu0 0
        %2263 = vmatprep.subr.bf16.mxu0 0
        %2264 = vmatpush2.bf16.msra.mxu0 0
        %2265 = vmatprep.subr.bf16.mxu0 0
        %2266 = vmatpush2.bf16.msra.mxu0 0
        %2267 = vmatprep.subr.bf16.mxu0 0
        %2268 = vmatpush2.bf16.msra.mxu0 0
        %2269 = vmatprep.subr.bf16.mxu0 0
        %2270 = vmatpush2.bf16.msra.mxu0 0
        %2271 = vmatprep.subr.bf16.mxu0 0
        %2272 = vmatpush2.bf16.msra.mxu0 0
        %2273 = vmatprep.subr.bf16.mxu0 0
        %2274 = vmatpush2.bf16.msra.mxu0 0
        %2275 = vmatprep.mubr.bf16.mxu0 0
        %2276 = vmatmul.mubr.bf16.gmra.mxu0 %v2241
        %v2277 = vpop.f32.mrf.mxu0
        %v2278 = vadd.f32 %v2226, %v2277
        %v2279 = vpop.f32.mrf.mxu0
        %v2280 = vpop.f32.mrf.mxu0
        %v2281 = vpop.f32.mrf.mxu0
        %2282 = vdwg.mxu0
        %v2283 = vadd.f32 %v2278, %v645
        %v2284 = vld [vmem:[%s8] sm:$0x1]
        %v2285 = vld [vmem:[%s9] sm:$0x1]
        %v2286 = vsel %vm823, %v2283, 0.0
        %2287 = vadd.xlane.f32.xlu0 %v2286
        %v2288 = vpop.xlane.xlu0 %2287
        %v2289 = vrcp.pop 32.0
        %v2290 = vmul.f32 %v2288, %v2289
        %v2291 = vsub.f32 %v2283, %v2290
        %v2292 = vmul.f32 %v2291, %v2291
        %v2293 = vsel %vm823, %v2292, 0.0
        %2294 = vadd.xlane.f32.xlu0 %v2293
        %v2295 = vpop.xlane.xlu0 %2294
        %v2296 = vmul.f32 %v2295, %v2289
        %v2297 = vadd.f32 %v2296, 1e-05
        %v2298 = vrsqrt.pop %v2297
        %v2299 = vmul.f32 %v2291, %v2298
        %v2301 = vlaneseq
        %v2302 = vshrl.u32 %v2301, 7
        %v2303 = vsub.s32 0, %v2302
        %v2304 = vrot.slane %v2284, %v2303
        %v2306 = vmul.f32 %v2299, %v2304
        %v2308 = vlaneseq
        %v2309 = vshrl.u32 %v2308, 7
        %v2310 = vsub.s32 0, %v2309
        %v2311 = vrot.slane %v2285, %v2310
        %v2313 = vadd.f32 %v2306, %v2311
        %v2314 = vpack.c.bf16 %v2313, %v2313
        %v2315 = vld [vmem:[#allocation10] sm:$0xf]
        %v2316 = vld [vmem:[#allocation10 + $0x4] sm:$0xf]
        %v2317 = vld [vmem:[#allocation10 + $0x8] sm:$0xf]
        %v2318 = vld [vmem:[#allocation10 + $0xc] sm:$0xf]
        %v2319 = vld [vmem:[%s13] sm:$0x1]
        %v2321 = vlaneseq
        %v2322 = vshrl.u32 %v2321, 7
        %v2323 = vsub.s32 0, %v2322
        %v2324 = vrot.slane %v2319, %v2323
        %v2330 = vunpack.c.l.b16 %v2315
        %v2331 = vunpack.c.l.b16 %v2316
        %v2332 = vunpack.c.l.b16 %v2317
        %v2333 = vunpack.c.l.b16 %v2318
        %v2334 = vpack.c.b16 %v2331, %v2330
        %v2335 = vpack.c.b16 %v2333, %v2332
        %v2339 = vsel %vm823, %v2314, 0
        %2341 = vmatprep.subr.bf16.mxu0 0
        %2342 = vmatpush1.bf16.msra.mxu0 0
        %2343 = vmatprep.subr.bf16.mxu0 0
        %2344 = vmatpush1.bf16.msra.mxu0 0
        %2345 = vmatprep.subr.bf16.mxu0 0
        %2346 = vmatpush1.bf16.msra.mxu0 0
        %2347 = vmatprep.subr.bf16.mxu0 0
        %2348 = vmatpush1.bf16.msra.mxu0 0
        %2349 = vmatprep.subr.bf16.mxu0 0
        %2350 = vmatpush1.bf16.msra.mxu0 0
        %2351 = vmatprep.subr.bf16.mxu0 0
        %2352 = vmatpush1.bf16.msra.mxu0 0
        %2353 = vmatprep.subr.bf16.mxu0 0
        %2354 = vmatpush1.bf16.msra.mxu0 %v2335
        %2355 = vmatprep.subr.bf16.mxu0 0
        %2356 = vmatpush1.bf16.msra.mxu0 %v2334
        %2357 = vmatprep.subr.bf16.mxu0 0
        %2358 = vmatpush2.bf16.msra.mxu0 0
        %2359 = vmatprep.subr.bf16.mxu0 0
        %2360 = vmatpush2.bf16.msra.mxu0 0
        %2361 = vmatprep.subr.bf16.mxu0 0
        %2362 = vmatpush2.bf16.msra.mxu0 0
        %2363 = vmatprep.subr.bf16.mxu0 0
        %2364 = vmatpush2.bf16.msra.mxu0 0
        %2365 = vmatprep.subr.bf16.mxu0 0
        %2366 = vmatpush2.bf16.msra.mxu0 0
        %2367 = vmatprep.subr.bf16.mxu0 0
        %2368 = vmatpush2.bf16.msra.mxu0 0
        %2369 = vmatprep.subr.bf16.mxu0 0
        %2370 = vmatpush2.bf16.msra.mxu0 0
        %2371 = vmatprep.subr.bf16.mxu0 0
        %2372 = vmatpush2.bf16.msra.mxu0 0
        %2373 = vmatprep.mubr.bf16.mxu0 0
        %2374 = vmatmul.mubr.bf16.gmra.mxu0 %v2339
        %v2375 = vpop.f32.mrf.mxu0
        %v2376 = vadd.f32 %v2324, %v2375
        %v2377 = vpop.f32.mrf.mxu0
        %v2378 = vpop.f32.mrf.mxu0
        %v2379 = vpop.f32.mrf.mxu0
        %2380 = vdwg.mxu0
        %v2381 = vmax.f32 %v2376, 0.0
        %v2382 = vpack.c.bf16 %v2381, %v2381
        %v2383 = vld [vmem:[%s14] sm:$0xf]
        %v2384 = vld [vmem:[%s14 + $0x4] sm:$0xf]
        %v2385 = vld [vmem:[%s14 + $0x8] sm:$0xf]
        %v2386 = vld [vmem:[%s14 + $0xc] sm:$0xf]
        %v2387 = vld [vmem:[%s14 + $0x10] sm:$0xf]
        %v2388 = vld [vmem:[%s14 + $0x14] sm:$0xf]
        %v2389 = vld [vmem:[%s14 + $0x18] sm:$0xf]
        %v2390 = vld [vmem:[%s14 + $0x1c] sm:$0xf]
        %v2391 = vld [vmem:[%s14 + $0x20] sm:$0xf]
        %v2392 = vld [vmem:[%s14 + $0x24] sm:$0xf]
        %v2393 = vld [vmem:[%s14 + $0x28] sm:$0xf]
        %v2394 = vld [vmem:[%s14 + $0x2c] sm:$0xf]
        %v2395 = vld [vmem:[%s14 + $0x30] sm:$0xf]
        %v2396 = vld [vmem:[%s14 + $0x34] sm:$0xf]
        %v2397 = vld [vmem:[%s14 + $0x38] sm:$0xf]
        %v2398 = vld [vmem:[%s14 + $0x3c] sm:$0xf]
        %v2399 = vld [vmem:[%s15] sm:$0x1]
        %v2401 = vlaneseq
        %v2402 = vshrl.u32 %v2401, 7
        %v2403 = vsub.s32 0, %v2402
        %v2404 = vrot.slane %v2399, %v2403
        %v2422 = vunpack.c.l.b16 %v2383
        %v2423 = vunpack.c.l.b16 %v2384
        %v2424 = vunpack.c.l.b16 %v2385
        %v2425 = vunpack.c.l.b16 %v2386
        %v2426 = vunpack.c.l.b16 %v2387
        %v2427 = vunpack.c.l.b16 %v2388
        %v2428 = vunpack.c.l.b16 %v2389
        %v2429 = vunpack.c.l.b16 %v2390
        %v2430 = vunpack.c.l.b16 %v2391
        %v2431 = vunpack.c.l.b16 %v2392
        %v2432 = vunpack.c.l.b16 %v2393
        %v2433 = vunpack.c.l.b16 %v2394
        %v2434 = vunpack.c.l.b16 %v2395
        %v2435 = vunpack.c.l.b16 %v2396
        %v2436 = vunpack.c.l.b16 %v2397
        %v2437 = vunpack.c.l.b16 %v2398
        %v2438 = vpack.c.b16 %v2423, %v2422
        %v2439 = vpack.c.b16 %v2425, %v2424
        %v2440 = vpack.c.b16 %v2427, %v2426
        %v2441 = vpack.c.b16 %v2429, %v2428
        %v2442 = vpack.c.b16 %v2431, %v2430
        %v2443 = vpack.c.b16 %v2433, %v2432
        %v2444 = vpack.c.b16 %v2435, %v2434
        %v2445 = vpack.c.b16 %v2437, %v2436
        %2454 = vmatprep.subr.bf16.mxu0 0
        %2455 = vmatpush1.bf16.msra.mxu0 %v2445
        %2456 = vmatprep.subr.bf16.mxu0 0
        %2457 = vmatpush1.bf16.msra.mxu0 %v2444
        %2458 = vmatprep.subr.bf16.mxu0 0
        %2459 = vmatpush1.bf16.msra.mxu0 %v2443
        %2460 = vmatprep.subr.bf16.mxu0 0
        %2461 = vmatpush1.bf16.msra.mxu0 %v2442
        %2462 = vmatprep.subr.bf16.mxu0 0
        %2463 = vmatpush1.bf16.msra.mxu0 %v2441
        %2464 = vmatprep.subr.bf16.mxu0 0
        %2465 = vmatpush1.bf16.msra.mxu0 %v2440
        %2466 = vmatprep.subr.bf16.mxu0 0
        %2467 = vmatpush1.bf16.msra.mxu0 %v2439
        %2468 = vmatprep.subr.bf16.mxu0 0
        %2469 = vmatpush1.bf16.msra.mxu0 %v2438
        %2470 = vmatprep.subr.bf16.mxu0 0
        %2471 = vmatpush2.bf16.msra.mxu0 0
        %2472 = vmatprep.subr.bf16.mxu0 0
        %2473 = vmatpush2.bf16.msra.mxu0 0
        %2474 = vmatprep.subr.bf16.mxu0 0
        %2475 = vmatpush2.bf16.msra.mxu0 0
        %2476 = vmatprep.subr.bf16.mxu0 0
        %2477 = vmatpush2.bf16.msra.mxu0 0
        %2478 = vmatprep.subr.bf16.mxu0 0
        %2479 = vmatpush2.bf16.msra.mxu0 0
        %2480 = vmatprep.subr.bf16.mxu0 0
        %2481 = vmatpush2.bf16.msra.mxu0 0
        %2482 = vmatprep.subr.bf16.mxu0 0
        %2483 = vmatpush2.bf16.msra.mxu0 0
        %2484 = vmatprep.subr.bf16.mxu0 0
        %2485 = vmatpush2.bf16.msra.mxu0 0
        %2486 = vmatprep.mubr.bf16.mxu0 0
        %2487 = vmatmul.mubr.bf16.gmra.mxu0 %v2382
        %v2488 = vpop.f32.mrf.mxu0
        %v2489 = vadd.f32 %v2404, %v2488
        %v2490 = vpop.f32.mrf.mxu0
        %v2491 = vpop.f32.mrf.mxu0
        %v2492 = vpop.f32.mrf.mxu0
        %2493 = vdwg.mxu0
        %v2494 = vadd.f32 %v2489, %v2313
        %v2495 = vld [vmem:[%s10] sm:$0x1]
        %v2496 = vld [vmem:[%s11] sm:$0x1]
        %v2497 = vsel %vm823, %v2494, 0.0
        %2498 = vadd.xlane.f32.xlu0 %v2497
        %v2499 = vpop.xlane.xlu0 %2498
        %v2500 = vmul.f32 %v2499, %v2289
        %v2501 = vsub.f32 %v2494, %v2500
        %v2502 = vmul.f32 %v2501, %v2501
        %v2503 = vsel %vm823, %v2502, 0.0
        %2504 = vadd.xlane.f32.xlu0 %v2503
        %v2505 = vpop.xlane.xlu0 %2504
        %v2506 = vmul.f32 %v2505, %v2289
        %v2507 = vadd.f32 %v2506, 1e-05
        %v2508 = vrsqrt.pop %v2507
        %v2509 = vmul.f32 %v2501, %v2508
        %v2511 = vlaneseq
        %v2512 = vshrl.u32 %v2511, 7
        %v2513 = vsub.s32 0, %v2512
        %v2514 = vrot.slane %v2495, %v2513
        %v2516 = vmul.f32 %v2509, %v2514
        %v2518 = vlaneseq
        %v2519 = vshrl.u32 %v2518, 7
        %v2520 = vsub.s32 0, %v2519
        %v2521 = vrot.slane %v2496, %v2520
        %v2523 = vadd.f32 %v2516, %v2521
        %v2524 = vpack.c.bf16 %v2523, %v2523
        %vm2525 = vcmask 257024
        %2526 = vst.msk [vmem:[%s625] sm:$0xf] %vm2525, %v2524
        %s2527 = sand.u32 %s408, 1
        %s2528 = scalar_lea.sflag [#allocation6], %s2527
        %s2529 = sand.u32 %s408, 1
        %s2530 = smul.addr %s2529, 4
        %s2531 = scalar_lea.vmem [#allocation12], %s2530
        // Predicated region
        $region105: #{tpu_custom_call.1} parent=83 // pred_check
          %p2532 = pneg %p418
        $region106: #{tpu_custom_call.1} parent=83 // pred_check_branch
          %2534 = sbr.rel (%p2532) target = $region108
        $region107: #{tpu_custom_call.1} parent=83 // pred_region
          %s2536 = ssub.s32 64, 64
          %2537 = vsyncadd %s2528, %s2536
          %s2538 = smul.addr %s37, 2
          %s2539 = sadd.s32 %s38, %s2538
          %s2540 = smul.addr %s2539, 64
          %s2541 = scalar_lea.hbm %s16, %s2540
          %s2543 = sshll.u32 %s2531, 4
          %s2544 = int_to_ptr.vmem [resolvable:$true] %s2543
          %2546 = dma.vmem_to_hbm [thread:$0]  %s2544, 64, %s2541, %s2528
        $region108: #{tpu_custom_call.1} parent=83 // pred_fallthru
          _
      $region84: #{tpu_custom_call.1} parent=5 // pred_fallthru
        _
      %p2547 = scmp.le.s32.totalorder 2, %s28
      // Predicated region
      $region109: #{tpu_custom_call.1} parent=5 // pred_check
        %p2548 = pneg %p2547
      $region110: #{tpu_custom_call.1} parent=5 // pred_check_branch
        %2550 = sbr.rel (%p2548) target = $region112
      $region111: #{tpu_custom_call.1} parent=5 // pred_region
        %s2551 = ssub.s32 %s28, 2
        // Predicated region
        $region113: #{tpu_custom_call.1} parent=111 // pred_check
          %p2552 = pneg %p424
        $region114: #{tpu_custom_call.1} parent=111 // pred_check_branch
          %2554 = sbr.rel (%p2552) target = $region116
        $region115: #{tpu_custom_call.1} parent=111 // pred_region
          %s2555 = sand.u32 %s409, 1
          %s2556 = scalar_lea.sflag [#allocation6], %s2555
          %s2557 = sand.u32 %s409, 1
          %s2558 = smul.addr %s2557, 4
          %s2559 = scalar_lea.vmem [#allocation12], %s2558
          %2560 = dma.done %s2556, 64
        $region116: #{tpu_custom_call.1} parent=111 // pred_fallthru
          _
      $region112: #{tpu_custom_call.1} parent=5 // pred_fallthru
        _
    $region6: #{tpu_custom_call.1} parent=1 // loop_footer
      %s32 = sadd.s32 1, %s28
    $region7: #{tpu_custom_call.1} parent=1 // loop_footer_branch
      %27 = sbr.rel target = $region3
    $region8: #{tpu_custom_call.1} parent=1 // loop_exit
      _
    %2561 = vsyncpa [#allocation5], 1
    %s2562 = scalar_lea.sflag [#allocation5], 1
    %2563 = vsyncpa %s2562, 1
    %2564 = vsyncpa [#allocation8], 1
    %2565 = vsyncpa [#allocation11], 1
    %2566 = vsyncpa [#allocation6], 1
    %s2567 = scalar_lea.sflag [#allocation6], 1
    %2568 = vsyncpa %s2567, 1

</llo_original>
